<compile_context>
chip_gen: v6e
topology: v6e:2x2x1
jax: 0.10.0
libtpu: 0.0.40
codegen_flags: <defaults>
</compile_context>

<pallas_src>
import numpy as np
import jax
import jax.numpy as jnp
from jax import lax
from jax.experimental import pallas as pl
from jax.experimental.pallas import tpu as pltpu


def _rotate_dist_kernel(hr_ref, nh2_ref, tT_ref, nt2_ref, o_ref):
    """One (tb, tn) output tile of score = 2*x.t - ||h||^2 - ||t||^2."""
    two_d = hr_ref.shape[1]
    dh = two_d // 4
    h0 = hr_ref[:, 0 * dh:1 * dh]          # (tb, d/2) even head comps
    h1 = hr_ref[:, 1 * dh:2 * dh]          # (tb, d/2) odd  head comps
    r0 = hr_ref[:, 2 * dh:3 * dh]          # (tb, d/2) even rel comps
    r1 = hr_ref[:, 3 * dh:4 * dh]          # (tb, d/2) odd  rel comps

    # Givens rotation (f32): normalize each (r0, r1) pair, rotate (h0, h1).
    # NOTE: matches reference exactly; an all-zero relation pair gives inf/NaN
    # in both (no epsilon guard, same as the PyTorch code).
    inv_norm = lax.rsqrt(r0 * r0 + r1 * r1)
    cos = r0 * inv_norm
    sin = r1 * inv_norm
    x0 = cos * h0 - sin * h1
    x1 = cos * h1 + sin * h0

    # RHS arrives pre-deinterleaved, pre-transposed, pre-scaled by 2 and bf16
    # from the wrapper; LHS cast to bf16 (f32 accumulate on the MXU).
    if dh % 128 == 0:
        # d/2 is lane-aligned: one fused K=d matmul.
        x = jnp.concatenate([x0, x1], axis=-1).astype(jnp.bfloat16)      # (tb, d)
        dot = jnp.dot(x, tT_ref[...], preferred_element_type=jnp.float32)
    else:
        # Tiny d: skip the intra-vreg concat relayout, issue two K=d/2 matmuls.
        dot = jnp.dot(x0.astype(jnp.bfloat16), tT_ref[:dh, :],
                      preferred_element_type=jnp.float32)
        dot = dot + jnp.dot(x1.astype(jnp.bfloat16), tT_ref[dh:, :],
                            preferred_element_type=jnp.float32)

    # score = 2*x.t - ||h||^2 - ||t||^2  (||rotated h|| == ||h||, rotation is
    # orthonormal; -||h||^2 and -||t||^2 are streamed in precomputed).
    o_ref[...] = (dot + nh2_ref[...] + nt2_ref[...]).astype(o_ref.dtype)


def _round_up(x, m):
    return ((x + m - 1) // m) * m


def _vmem_budget_bytes():
    """Generation-aware VMEM budget: ~52 MiB on v7x (64 MiB/TC), ~100 MiB on v5e/v6e."""
    cap = 128 * 1024 * 1024
    try:
        info = pltpu.get_tpu_info()
        cap = getattr(info, "vmem_capacity_bytes", cap) or cap
    except Exception:
        pass
    return min(int(cap * 0.8), 100 * 1024 * 1024)


def prepare_candidates(new_feature):
    """Tail-side preprocessing, cacheable across many triple batches.

    Returns:
      tT2     : (d, N) bf16  = 2 * [t_even | t_odd].T   (2x folded in, exact for bf16)
      nt2     : (1, N) f32   = -||t||^2
      node_sq : (N,)   f32   = ||t||^2 per node (for gathering head norms)
    """
    t = new_feature.astype(jnp.float32)
    node_sq = jnp.sum(t * t, axis=-1)                                    # (N,)
    tT2 = (2.0 * jnp.concatenate([t[:, 0::2], t[:, 1::2]], axis=1).T
           ).astype(jnp.bfloat16)                                        # (d, N)
    nt2 = (-node_sq)[None, :]                                            # (1, N)
    return tT2, nt2, node_sq


def rotate_score(h, r, tT2, nt2, nh2, *, tb=512, tn=2048, out_dtype=jnp.bfloat16):
    """score[b, n] = -|| givens_rotation(r[b], h[b]) - t[n] ||^2  via Pallas."""
    B, d = h.shape
    d_rows, N = tT2.shape
    assert d_rows == d and d % 2 == 0

    # Clamp tiles to the (aligned) problem size so tiny problems don't over-pad.
    tb = min(tb, _round_up(B, 8))
    tn = min(tn, _round_up(N, 128))

    vmem_budget = _vmem_budget_bytes()
    out_itemsize = jnp.dtype(out_dtype).itemsize

    def footprint(tb_, tn_):
        per_step = (tb_ * 2 * d * 4          # hr (f32)
                    + d * tn_ * 2            # tT2 (bf16)
                    + tb_ * 4 + tn_ * 4      # nh2 / nt2 (f32)
                    + tb_ * tn_ * out_itemsize)
        return 2 * per_step                  # double-buffered

    while footprint(tb, tn) > vmem_budget and tn > 256:
        tn = max(256, _round_up(tn // 2, 128))
    while footprint(tb, tn) > vmem_budget and tb > 64:
        tb = max(64, _round_up(tb // 2, 8))

    # N on the OUTER axis: the tT2 / nt2 tiles stay resident across the inner
    # batch loop (index map unchanged => no re-DMA). Both axes are "parallel";
    # on v7x the compiler may split either axis across the two TensorCores.
    grid = (pl.cdiv(N, tn), pl.cdiv(B, tb))

    # Layout glue (runs once in XLA, not per grid step): pack head/relation
    # halves into one lane-dense slab so each batch tile is a single DMA.
    hr = jnp.concatenate([h[:, 0::2], h[:, 1::2], r[:, 0::2], r[:, 1::2]],
                         axis=1).astype(jnp.float32)                     # (B, 2d)

    return pl.pallas_call(
        _rotate_dist_kernel,
        out_shape=jax.ShapeDtypeStruct((B, N), out_dtype),               # un-padded
        grid_spec=pltpu.PrefetchScalarGridSpec(
            num_scalar_prefetch=0,
            grid=grid,
            in_specs=[
                pl.BlockSpec((tb, 2 * d), lambda j, i: (i, 0)),          # hr
                pl.BlockSpec((tb, 1), lambda j, i: (i, 0)),              # -||h||^2
                pl.BlockSpec((d, tn), lambda j, i: (0, j)),              # 2*t.T (bf16)
                pl.BlockSpec((1, tn), lambda j, i: (0, j)),              # -||t||^2
            ],
            out_specs=pl.BlockSpec((tb, tn), lambda j, i: (i, j)),
        ),
        compiler_params=pltpu.CompilerParams(
            dimension_semantics=("parallel", "parallel"),
            vmem_limit_bytes=vmem_budget,
        ),
    )(hr, nh2, tT2, nt2)


def gnn_kge_forward(triples, new_feature, rel_embedding, tails=None):
    """gnn_kge.forward with score_func == 'rotate'.

    `tails` (output of prepare_candidates(new_feature)) can be cached and
    re-passed when the same new_feature is scored against many triple batches.
    """
    if tails is None:
        tails = prepare_candidates(new_feature)
    tT2, nt2, node_sq = tails
    h = new_feature[triples[:, 0]]                 # gather head rows (glue)
    r = rel_embedding[triples[:, 1]]               # relation embedding lookup (glue)
    nh2 = -node_sq[triples[:, 0]][:, None]         # -||h||^2, gathered from node table
    return rotate_score(h, r, tT2, nt2, nh2)


def _reference(triples, new_feature, rel_embedding):
    """Pure-JAX reference matching the PyTorch semantics (full f32 matmul)."""
    h = new_feature[triples[:, 0]]
    r = rel_embedding[triples[:, 1]]
    g = r.reshape(r.shape[0], -1, 2)
    g = g / jnp.linalg.norm(g, axis=-1, keepdims=True)
    x = h.reshape(h.shape[0], -1, 2)
    x0 = g[..., 0] * x[..., 0] - g[..., 1] * x[..., 1]
    x1 = g[..., 0] * x[..., 1] + g[..., 1] * x[..., 0]
    target = jnp.stack([x0, x1], axis=-1).reshape(h.shape[0], -1)
    t = new_feature
    xx = jnp.sum(target * target, axis=-1, keepdims=True)
    yy = jnp.sum(t * t, axis=-1, keepdims=True)
    dot = jnp.matmul(target, t.T, precision=lax.Precision.HIGHEST)
    return -(xx + yy.T - 2.0 * dot)


if __name__ == "__main__":
    key = jax.random.PRNGKey(0)
    num_nodes, num_rels, hidden_dim = 600, 6, 32
    batch = 300   # exercises partial (clipped) output blocks

    k1, k2, k3, k4 = jax.random.split(key, 4)

    # rel_embedding.weight: (num_rels*2, hidden_dim), xavier_normal_(gain=1.414)
    std = 1.414 * (2.0 / (num_rels * 2 + hidden_dim)) ** 0.5
    rel_embedding = std * jax.random.normal(k1, (num_rels * 2, hidden_dim), jnp.float32)

    # new_feature is produced by gnn_forward() in the real model; synthesize it here.
    new_feature = jax.random.normal(k2, (num_nodes, hidden_dim), jnp.float32)

    heads = jax.random.randint(k3, (batch,), 0, num_nodes)
    rels = jax.random.randint(k4, (batch,), 0, num_rels * 2)
    tails = jnp.zeros((batch,), jnp.int32)
    triples = jnp.stack([heads, rels, tails], axis=1).astype(jnp.int32)

    score = jax.jit(gnn_kge_forward)(triples, new_feature, rel_embedding)
    score = jax.block_until_ready(score)
    assert score.shape == (batch, num_nodes)
    assert score.dtype == jnp.bfloat16

    ref = _reference(triples, new_feature, rel_embedding)
    # bf16 dot + bf16 score storage (per perf review); rotation/norms stay f32.
    np.testing.assert_allclose(np.asarray(score.astype(jnp.float32)),
                               np.asarray(ref), rtol=2e-2, atol=0.5)
    print("KERNEL_OK")
</pallas_src>

<mosaic_0001>
module attributes {stable_mosaic.version = 11 : i64} {
  func.func @_rotate_dist_kernel(%arg0: i32, %arg1: i32, %arg2: memref<304x64xf32, #tpu.memory_space<vmem>>, %arg3: memref<304x1xf32, #tpu.memory_space<vmem>>, %arg4: memref<32x640xbf16, #tpu.memory_space<vmem>>, %arg5: memref<1x640xf32, #tpu.memory_space<vmem>>, %arg6: memref<304x640xbf16, #tpu.memory_space<vmem>>) attributes {dimension_semantics = [#tpu.dimension_semantics<parallel>, #tpu.dimension_semantics<parallel>], iteration_bounds = array<i64: 1, 1>, scalar_prefetch = 0 : i64, scratch_operands = 0 : i64, tpu.core_type = #tpu.core_type<tc>, window_params = [{transform_indices = @transform_0, window_bounds = array<i64: 304, 64>}, {transform_indices = @transform_1, window_bounds = array<i64: 304, 1>}, {transform_indices = @transform_2, window_bounds = array<i64: 32, 640>}, {transform_indices = @transform_3, window_bounds = array<i64: 1, 640>}, {transform_indices = @transform_4, window_bounds = array<i64: 304, 640>}]} {
    %c0 = arith.constant 0 : index
    %c0_0 = arith.constant 0 : index
    %0 = vector.load %arg2[%c0, %c0_0] : memref<304x64xf32, #tpu.memory_space<vmem>>, vector<304x16xf32>
    %c0_1 = arith.constant 0 : index
    %c16 = arith.constant 16 : index
    %1 = vector.load %arg2[%c0_1, %c16] : memref<304x64xf32, #tpu.memory_space<vmem>>, vector<304x16xf32>
    %c0_2 = arith.constant 0 : index
    %c32 = arith.constant 32 : index
    %2 = vector.load %arg2[%c0_2, %c32] : memref<304x64xf32, #tpu.memory_space<vmem>>, vector<304x16xf32>
    %c0_3 = arith.constant 0 : index
    %c48 = arith.constant 48 : index
    %3 = vector.load %arg2[%c0_3, %c48] : memref<304x64xf32, #tpu.memory_space<vmem>>, vector<304x16xf32>
    %4 = arith.mulf %2, %2 : vector<304x16xf32>
    %5 = arith.mulf %3, %3 : vector<304x16xf32>
    %6 = arith.addf %4, %5 : vector<304x16xf32>
    %7 = math.rsqrt %6 : vector<304x16xf32>
    %8 = arith.mulf %2, %7 : vector<304x16xf32>
    %9 = arith.mulf %3, %7 : vector<304x16xf32>
    %10 = arith.mulf %8, %0 : vector<304x16xf32>
    %11 = arith.mulf %9, %1 : vector<304x16xf32>
    %12 = arith.subf %10, %11 : vector<304x16xf32>
    %13 = arith.mulf %8, %1 : vector<304x16xf32>
    %14 = arith.mulf %9, %0 : vector<304x16xf32>
    %15 = arith.addf %13, %14 : vector<304x16xf32>
    %16 = arith.truncf %12 : vector<304x16xf32> to vector<304x16xbf16>
    %c0_4 = arith.constant 0 : index
    %c0_5 = arith.constant 0 : index
    %17 = vector.load %arg4[%c0_4, %c0_5] : memref<32x640xbf16, #tpu.memory_space<vmem>>, vector<16x640xbf16>
    %cst = arith.constant dense<0.000000e+00> : vector<304x640xf32>
    %18 = tpu.matmul %16, %17, %cst {dimension_numbers = #tpu.dot_dimension_numbers<[1], [0], [0], [1], [0, 0, 1, 1], [], []>} : vector<304x16xbf16>, vector<16x640xbf16>, vector<304x640xf32> -> vector<304x640xf32>
    %19 = arith.truncf %15 : vector<304x16xf32> to vector<304x16xbf16>
    %c16_6 = arith.constant 16 : index
    %c0_7 = arith.constant 0 : index
    %20 = vector.load %arg4[%c16_6, %c0_7] : memref<32x640xbf16, #tpu.memory_space<vmem>>, vector<16x640xbf16>
    %cst_8 = arith.constant dense<0.000000e+00> : vector<304x640xf32>
    %21 = tpu.matmul %19, %20, %cst_8 {dimension_numbers = #tpu.dot_dimension_numbers<[1], [0], [0], [1], [0, 0, 1, 1], [], []>} : vector<304x16xbf16>, vector<16x640xbf16>, vector<304x640xf32> -> vector<304x640xf32>
    %22 = arith.addf %18, %21 : vector<304x640xf32>
    %c0_9 = arith.constant 0 : index
    %c0_10 = arith.constant 0 : index
    %23 = vector.load %arg3[%c0_9, %c0_10] : memref<304x1xf32, #tpu.memory_space<vmem>>, vector<304x1xf32>
    %24 = vector.broadcast %23 : vector<304x1xf32> to vector<304x640xf32>
    %25 = arith.addf %22, %24 : vector<304x640xf32>
    %c0_11 = arith.constant 0 : index
    %c0_12 = arith.constant 0 : index
    %26 = vector.load %arg5[%c0_11, %c0_12] : memref<1x640xf32, #tpu.memory_space<vmem>>, vector<1x640xf32>
    %27 = vector.broadcast %26 : vector<1x640xf32> to vector<304x640xf32>
    %28 = arith.addf %25, %27 : vector<304x640xf32>
    %29 = arith.truncf %28 : vector<304x640xf32> to vector<304x640xbf16>
    %c0_13 = arith.constant 0 : index
    %c0_14 = arith.constant 0 : index
    %30 = vector.load %arg6[%c0_13, %c0_14] : memref<304x640xbf16, #tpu.memory_space<vmem>>, vector<304x640xbf16>
    tpu.vector_store %arg6[%c0_13, %c0_14], %29 {strides = array<i32>} : memref<304x640xbf16, #tpu.memory_space<vmem>>, vector<304x640xbf16>,
    return
  }
  func.func @transform_0(%arg0: i32, %arg1: i32) -> (i32, i32) {
    %c0_i32 = arith.constant 0 : i32
    %c0_i32_0 = arith.constant 0 : i32
    return %arg1, %c0_i32 : i32, i32
  }
  func.func @transform_1(%arg0: i32, %arg1: i32) -> (i32, i32) {
    %c0_i32 = arith.constant 0 : i32
    %c0_i32_0 = arith.constant 0 : i32
    return %arg1, %c0_i32 : i32, i32
  }
  func.func @transform_2(%arg0: i32, %arg1: i32) -> (i32, i32) {
    %c0_i32 = arith.constant 0 : i32
    %c0_i32_0 = arith.constant 0 : i32
    return %c0_i32, %arg0 : i32, i32
  }
  func.func @transform_3(%arg0: i32, %arg1: i32) -> (i32, i32) {
    %c0_i32 = arith.constant 0 : i32
    %c0_i32_0 = arith.constant 0 : i32
    return %c0_i32, %arg0 : i32, i32
  }
  func.func @transform_4(%arg0: i32, %arg1: i32) -> (i32, i32) {
    %c0_i32 = arith.constant 0 : i32
    return %arg1, %arg0 : i32, i32
  }
}

</mosaic_0001>

<llo_original>
// kernel: neg.17
$region0: #{neg.17}
  #allocation0 [shape = 's32[1]{0}', space=sflag, size = 0x4, scoped, tag = 'scoped memory for neg.17']
  %s0 = inlined_call_operand.vmem [shape: f32[300], index: 0, kind: input, shape index: {}]
  %s1 = inlined_call_operand.vmem [shape: f32[300], index: 1, kind: output, shape index: {}]
  %v2 = vld [vmem:[%s0] sm:$0x7]
  %3 = xla_tuple %v2
  %4 = xla_tuple %3
  %v5 = vxor.u32 %v2, 2147483648
  %6 = xla_tuple %v5
  %7 = vst [vmem:[%s1] sm:$0xf] %v5

// kernel: neg.18
$region0: #{neg.18}
  #allocation0 [shape = 's32[1]{0}', space=sflag, size = 0x4, scoped, tag = 'scoped memory for neg.18']
  %s0 = inlined_call_operand.vmem [shape: f32[600], index: 0, kind: input, shape index: {}]
  %s1 = inlined_call_operand.vmem [shape: f32[600], index: 1, kind: output, shape index: {}]
  %v2 = vld [vmem:[%s0] sm:$0x1f]
  %3 = xla_tuple %v2
  %4 = xla_tuple %3
  %v5 = vxor.u32 %v2, 2147483648
  %6 = xla_tuple %v5
  %7 = vst [vmem:[%s1] sm:$0xff] %v5

// kernel: gnn_kge_forward.1
$region0: #{gnn_kge_forward.1}
  #allocation0 [shape = 'u32[]', space=smem, size = 0x4, offset = 0x4, fixed_abs, tag = 'smem constant byte address 0x4 - core index']
  #allocation1 [shape = 'u32[144,128]{1,0:T(1,128)}', space=vmem, size = 0x12000, scoped, tag = 'internal scratch']
  %s0 = inlined_call_operand.vmem [shape: f32[300,64], index: 0, kind: input, shape index: {}]
  %s1 = inlined_call_operand.vmem [shape: f32[300,1], index: 1, kind: input, shape index: {}]
  %s2 = inlined_call_operand.vmem [shape: bf16[32,600], index: 2, kind: input, shape index: {}]
  %s3 = inlined_call_operand.vmem [shape: f32[1,600], index: 3, kind: input, shape index: {}]
  %s4 = inlined_call_operand.hbm [shape: bf16[300,600], index: 4, kind: output, shape index: {}]
  %s5 = sld [smem:[#allocation0]]
  $region26: #{gnn_kge_forward.1} parent=0
    _
  %s7 = ssub.s32 1, %s5
  %s8 = scalar_select 0, %s7, %s5
  $region1: #{gnn_kge_forward.1} parent=0
    #allocation2 [shape = 'u8[389120]{0}', space=vmem, size = 0x5f000, scoped, tag = 'output window, operand 0, single buffered']
    #allocation3 [shape = 's32[1]{0}', space=sflag, size = 0x4, scoped, tag = 'scoped memory for gnn_kge_forward.1']
    %9 = vsyncpa [#allocation3], 0
    // Predicated region
    $region2: #{gnn_kge_forward.1} parent=1 // pred_check
      _
    $region3: #{gnn_kge_forward.1} parent=1 // pred_check_branch
      %11 = sbr.rel (0) target = $region5
    $region4: #{gnn_kge_forward.1} parent=1 // pred_region
      _
    $region5: #{gnn_kge_forward.1} parent=1 // pred_fallthru
      _
    // Predicated region
    $region6: #{gnn_kge_forward.1} parent=1 // pred_check
      _
    $region7: #{gnn_kge_forward.1} parent=1 // pred_check_branch
      %13 = sbr.rel (0) target = $region9
    $region8: #{gnn_kge_forward.1} parent=1 // pred_region
      _
    $region9: #{gnn_kge_forward.1} parent=1 // pred_fallthru
      _
    // Predicated region
    $region10: #{gnn_kge_forward.1} parent=1 // pred_check
      _
    $region11: #{gnn_kge_forward.1} parent=1 // pred_check_branch
      %15 = sbr.rel (0) target = $region13
    $region12: #{gnn_kge_forward.1} parent=1 // pred_region
      _
    $region13: #{gnn_kge_forward.1} parent=1 // pred_fallthru
      _
    // Predicated region
    $region14: #{gnn_kge_forward.1} parent=1 // pred_check
      _
    $region15: #{gnn_kge_forward.1} parent=1 // pred_check_branch
      %17 = sbr.rel (0) target = $region17
    $region16: #{gnn_kge_forward.1} parent=1 // pred_region
      _
    $region17: #{gnn_kge_forward.1} parent=1 // pred_fallthru
      _
    %v19 = vld [vmem:[%s0] sm:$0xff]
    %v20 = vld [vmem:[%s0 + $0x8] sm:$0xff]
    %v21 = vld [vmem:[%s0 + $0x10] sm:$0xff]
    %v22 = vld [vmem:[%s0 + $0x18] sm:$0xff]
    %v23 = vld [vmem:[%s0 + $0x20] sm:$0xff]
    %v24 = vld [vmem:[%s0 + $0x28] sm:$0xff]
    %v25 = vld [vmem:[%s0 + $0x30] sm:$0xff]
    %v26 = vld [vmem:[%s0 + $0x38] sm:$0xff]
    %v27 = vld [vmem:[%s0 + $0x40] sm:$0xff]
    %v28 = vld [vmem:[%s0 + $0x48] sm:$0xff]
    %v29 = vld [vmem:[%s0 + $0x50] sm:$0xff]
    %v30 = vld [vmem:[%s0 + $0x58] sm:$0xff]
    %v31 = vld [vmem:[%s0 + $0x60] sm:$0xff]
    %v32 = vld [vmem:[%s0 + $0x68] sm:$0xff]
    %v33 = vld [vmem:[%s0 + $0x70] sm:$0xff]
    %v34 = vld [vmem:[%s0 + $0x78] sm:$0xff]
    %v35 = vld [vmem:[%s0 + $0x80] sm:$0xff]
    %v36 = vld [vmem:[%s0 + $0x88] sm:$0xff]
    %v37 = vld [vmem:[%s0 + $0x90] sm:$0xff]
    %v38 = vld [vmem:[%s0 + $0x98] sm:$0xff]
    %v39 = vld [vmem:[%s0 + $0xa0] sm:$0xff]
    %v40 = vld [vmem:[%s0 + $0xa8] sm:$0xff]
    %v41 = vld [vmem:[%s0 + $0xb0] sm:$0xff]
    %v42 = vld [vmem:[%s0 + $0xb8] sm:$0xff]
    %v43 = vld [vmem:[%s0 + $0xc0] sm:$0xff]
    %v44 = vld [vmem:[%s0 + $0xc8] sm:$0xff]
    %v45 = vld [vmem:[%s0 + $0xd0] sm:$0xff]
    %v46 = vld [vmem:[%s0 + $0xd8] sm:$0xff]
    %v47 = vld [vmem:[%s0 + $0xe0] sm:$0xff]
    %v48 = vld [vmem:[%s0 + $0xe8] sm:$0xff]
    %v49 = vld [vmem:[%s0 + $0xf0] sm:$0xff]
    %v50 = vld [vmem:[%s0 + $0xf8] sm:$0xff]
    %v51 = vld [vmem:[%s0 + $0x100] sm:$0xff]
    %v52 = vld [vmem:[%s0 + $0x108] sm:$0xff]
    %v53 = vld [vmem:[%s0 + $0x110] sm:$0xff]
    %v54 = vld [vmem:[%s0 + $0x118] sm:$0xff]
    %v55 = vld [vmem:[%s0 + $0x120] sm:$0xff]
    %v56 = vld [vmem:[%s0 + $0x128] sm:$0xff]
    %v57 = vmul.f32 %v19, %v19
    %v58 = vmul.f32 %v20, %v20
    %v59 = vmul.f32 %v21, %v21
    %v60 = vmul.f32 %v22, %v22
    %v61 = vmul.f32 %v23, %v23
    %v62 = vmul.f32 %v24, %v24
    %v63 = vmul.f32 %v25, %v25
    %v64 = vmul.f32 %v26, %v26
    %v65 = vmul.f32 %v27, %v27
    %v66 = vmul.f32 %v28, %v28
    %v67 = vmul.f32 %v29, %v29
    %v68 = vmul.f32 %v30, %v30
    %v69 = vmul.f32 %v31, %v31
    %v70 = vmul.f32 %v32, %v32
    %v71 = vmul.f32 %v33, %v33
    %v72 = vmul.f32 %v34, %v34
    %v73 = vmul.f32 %v35, %v35
    %v74 = vmul.f32 %v36, %v36
    %v75 = vmul.f32 %v37, %v37
    %v76 = vmul.f32 %v38, %v38
    %v77 = vmul.f32 %v39, %v39
    %v78 = vmul.f32 %v40, %v40
    %v79 = vmul.f32 %v41, %v41
    %v80 = vmul.f32 %v42, %v42
    %v81 = vmul.f32 %v43, %v43
    %v82 = vmul.f32 %v44, %v44
    %v83 = vmul.f32 %v45, %v45
    %v84 = vmul.f32 %v46, %v46
    %v85 = vmul.f32 %v47, %v47
    %v86 = vmul.f32 %v48, %v48
    %v87 = vmul.f32 %v49, %v49
    %v88 = vmul.f32 %v50, %v50
    %v89 = vmul.f32 %v51, %v51
    %v90 = vmul.f32 %v52, %v52
    %v91 = vmul.f32 %v53, %v53
    %v92 = vmul.f32 %v54, %v54
    %v93 = vmul.f32 %v55, %v55
    %v94 = vmul.f32 %v56, %v56
    %133 = vrot.lane.b32.xlu0 %v57, 112
    %v134 = vpop.permute.xlu0 %133
    %135 = vrot.lane.b32.xlu0 %v58, 112
    %v136 = vpop.permute.xlu0 %135
    %137 = vrot.lane.b32.xlu0 %v59, 112
    %v138 = vpop.permute.xlu0 %137
    %139 = vrot.lane.b32.xlu0 %v60, 112
    %v140 = vpop.permute.xlu0 %139
    %141 = vrot.lane.b32.xlu0 %v61, 112
    %v142 = vpop.permute.xlu0 %141
    %143 = vrot.lane.b32.xlu0 %v62, 112
    %v144 = vpop.permute.xlu0 %143
    %145 = vrot.lane.b32.xlu0 %v63, 112
    %v146 = vpop.permute.xlu0 %145
    %147 = vrot.lane.b32.xlu0 %v64, 112
    %v148 = vpop.permute.xlu0 %147
    %149 = vrot.lane.b32.xlu0 %v65, 112
    %v150 = vpop.permute.xlu0 %149
    %151 = vrot.lane.b32.xlu0 %v66, 112
    %v152 = vpop.permute.xlu0 %151
    %153 = vrot.lane.b32.xlu0 %v67, 112
    %v154 = vpop.permute.xlu0 %153
    %155 = vrot.lane.b32.xlu0 %v68, 112
    %v156 = vpop.permute.xlu0 %155
    %157 = vrot.lane.b32.xlu0 %v69, 112
    %v158 = vpop.permute.xlu0 %157
    %159 = vrot.lane.b32.xlu0 %v70, 112
    %v160 = vpop.permute.xlu0 %159
    %161 = vrot.lane.b32.xlu0 %v71, 112
    %v162 = vpop.permute.xlu0 %161
    %163 = vrot.lane.b32.xlu0 %v72, 112
    %v164 = vpop.permute.xlu0 %163
    %165 = vrot.lane.b32.xlu0 %v73, 112
    %v166 = vpop.permute.xlu0 %165
    %167 = vrot.lane.b32.xlu0 %v74, 112
    %v168 = vpop.permute.xlu0 %167
    %169 = vrot.lane.b32.xlu0 %v75, 112
    %v170 = vpop.permute.xlu0 %169
    %171 = vrot.lane.b32.xlu0 %v76, 112
    %v172 = vpop.permute.xlu0 %171
    %173 = vrot.lane.b32.xlu0 %v77, 112
    %v174 = vpop.permute.xlu0 %173
    %175 = vrot.lane.b32.xlu0 %v78, 112
    %v176 = vpop.permute.xlu0 %175
    %177 = vrot.lane.b32.xlu0 %v79, 112
    %v178 = vpop.permute.xlu0 %177
    %179 = vrot.lane.b32.xlu0 %v80, 112
    %v180 = vpop.permute.xlu0 %179
    %181 = vrot.lane.b32.xlu0 %v81, 112
    %v182 = vpop.permute.xlu0 %181
    %183 = vrot.lane.b32.xlu0 %v82, 112
    %v184 = vpop.permute.xlu0 %183
    %185 = vrot.lane.b32.xlu0 %v83, 112
    %v186 = vpop.permute.xlu0 %185
    %187 = vrot.lane.b32.xlu0 %v84, 112
    %v188 = vpop.permute.xlu0 %187
    %189 = vrot.lane.b32.xlu0 %v85, 112
    %v190 = vpop.permute.xlu0 %189
    %191 = vrot.lane.b32.xlu0 %v86, 112
    %v192 = vpop.permute.xlu0 %191
    %193 = vrot.lane.b32.xlu0 %v87, 112
    %v194 = vpop.permute.xlu0 %193
    %195 = vrot.lane.b32.xlu0 %v88, 112
    %v196 = vpop.permute.xlu0 %195
    %197 = vrot.lane.b32.xlu0 %v89, 112
    %v198 = vpop.permute.xlu0 %197
    %199 = vrot.lane.b32.xlu0 %v90, 112
    %v200 = vpop.permute.xlu0 %199
    %201 = vrot.lane.b32.xlu0 %v91, 112
    %v202 = vpop.permute.xlu0 %201
    %203 = vrot.lane.b32.xlu0 %v92, 112
    %v204 = vpop.permute.xlu0 %203
    %205 = vrot.lane.b32.xlu0 %v93, 112
    %v206 = vpop.permute.xlu0 %205
    %207 = vrot.lane.b32.xlu0 %v94, 112
    %v208 = vpop.permute.xlu0 %207
    %v247 = vadd.f32 %v57, %v134
    %v248 = vadd.f32 %v58, %v136
    %v249 = vadd.f32 %v59, %v138
    %v250 = vadd.f32 %v60, %v140
    %v251 = vadd.f32 %v61, %v142
    %v252 = vadd.f32 %v62, %v144
    %v253 = vadd.f32 %v63, %v146
    %v254 = vadd.f32 %v64, %v148
    %v255 = vadd.f32 %v65, %v150
    %v256 = vadd.f32 %v66, %v152
    %v257 = vadd.f32 %v67, %v154
    %v258 = vadd.f32 %v68, %v156
    %v259 = vadd.f32 %v69, %v158
    %v260 = vadd.f32 %v70, %v160
    %v261 = vadd.f32 %v71, %v162
    %v262 = vadd.f32 %v72, %v164
    %v263 = vadd.f32 %v73, %v166
    %v264 = vadd.f32 %v74, %v168
    %v265 = vadd.f32 %v75, %v170
    %v266 = vadd.f32 %v76, %v172
    %v267 = vadd.f32 %v77, %v174
    %v268 = vadd.f32 %v78, %v176
    %v269 = vadd.f32 %v79, %v178
    %v270 = vadd.f32 %v80, %v180
    %v271 = vadd.f32 %v81, %v182
    %v272 = vadd.f32 %v82, %v184
    %v273 = vadd.f32 %v83, %v186
    %v274 = vadd.f32 %v84, %v188
    %v275 = vadd.f32 %v85, %v190
    %v276 = vadd.f32 %v86, %v192
    %v277 = vadd.f32 %v87, %v194
    %v278 = vadd.f32 %v88, %v196
    %v279 = vadd.f32 %v89, %v198
    %v280 = vadd.f32 %v90, %v200
    %v281 = vadd.f32 %v91, %v202
    %v282 = vadd.f32 %v92, %v204
    %v283 = vadd.f32 %v93, %v206
    %v284 = vadd.f32 %v94, %v208
    %v285 = vrsqrt.pop %v247
    %v286 = vrsqrt.pop %v248
    %v287 = vrsqrt.pop %v249
    %v288 = vrsqrt.pop %v250
    %v289 = vrsqrt.pop %v251
    %v290 = vrsqrt.pop %v252
    %v291 = vrsqrt.pop %v253
    %v292 = vrsqrt.pop %v254
    %v293 = vrsqrt.pop %v255
    %v294 = vrsqrt.pop %v256
    %v295 = vrsqrt.pop %v257
    %v296 = vrsqrt.pop %v258
    %v297 = vrsqrt.pop %v259
    %v298 = vrsqrt.pop %v260
    %v299 = vrsqrt.pop %v261
    %v300 = vrsqrt.pop %v262
    %v301 = vrsqrt.pop %v263
    %v302 = vrsqrt.pop %v264
    %v303 = vrsqrt.pop %v265
    %v304 = vrsqrt.pop %v266
    %v305 = vrsqrt.pop %v267
    %v306 = vrsqrt.pop %v268
    %v307 = vrsqrt.pop %v269
    %v308 = vrsqrt.pop %v270
    %v309 = vrsqrt.pop %v271
    %v310 = vrsqrt.pop %v272
    %v311 = vrsqrt.pop %v273
    %v312 = vrsqrt.pop %v274
    %v313 = vrsqrt.pop %v275
    %v314 = vrsqrt.pop %v276
    %v315 = vrsqrt.pop %v277
    %v316 = vrsqrt.pop %v278
    %v317 = vrsqrt.pop %v279
    %v318 = vrsqrt.pop %v280
    %v319 = vrsqrt.pop %v281
    %v320 = vrsqrt.pop %v282
    %v321 = vrsqrt.pop %v283
    %v322 = vrsqrt.pop %v284
    %v323 = vmul.f32 %v19, %v285
    %v324 = vmul.f32 %v20, %v286
    %v325 = vmul.f32 %v21, %v287
    %v326 = vmul.f32 %v22, %v288
    %v327 = vmul.f32 %v23, %v289
    %v328 = vmul.f32 %v24, %v290
    %v329 = vmul.f32 %v25, %v291
    %v330 = vmul.f32 %v26, %v292
    %v331 = vmul.f32 %v27, %v293
    %v332 = vmul.f32 %v28, %v294
    %v333 = vmul.f32 %v29, %v295
    %v334 = vmul.f32 %v30, %v296
    %v335 = vmul.f32 %v31, %v297
    %v336 = vmul.f32 %v32, %v298
    %v337 = vmul.f32 %v33, %v299
    %v338 = vmul.f32 %v34, %v300
    %v339 = vmul.f32 %v35, %v301
    %v340 = vmul.f32 %v36, %v302
    %v341 = vmul.f32 %v37, %v303
    %v342 = vmul.f32 %v38, %v304
    %v343 = vmul.f32 %v39, %v305
    %v344 = vmul.f32 %v40, %v306
    %v345 = vmul.f32 %v41, %v307
    %v346 = vmul.f32 %v42, %v308
    %v347 = vmul.f32 %v43, %v309
    %v348 = vmul.f32 %v44, %v310
    %v349 = vmul.f32 %v45, %v311
    %v350 = vmul.f32 %v46, %v312
    %v351 = vmul.f32 %v47, %v313
    %v352 = vmul.f32 %v48, %v314
    %v353 = vmul.f32 %v49, %v315
    %v354 = vmul.f32 %v50, %v316
    %v355 = vmul.f32 %v51, %v317
    %v356 = vmul.f32 %v52, %v318
    %v357 = vmul.f32 %v53, %v319
    %v358 = vmul.f32 %v54, %v320
    %v359 = vmul.f32 %v55, %v321
    %v360 = vmul.f32 %v56, %v322
    %399 = vrot.lane.b32.xlu0 %v285, 16
    %v400 = vpop.permute.xlu0 %399
    %401 = vrot.lane.b32.xlu0 %v286, 16
    %v402 = vpop.permute.xlu0 %401
    %403 = vrot.lane.b32.xlu0 %v287, 16
    %v404 = vpop.permute.xlu0 %403
    %405 = vrot.lane.b32.xlu0 %v288, 16
    %v406 = vpop.permute.xlu0 %405
    %407 = vrot.lane.b32.xlu0 %v289, 16
    %v408 = vpop.permute.xlu0 %407
    %409 = vrot.lane.b32.xlu0 %v290, 16
    %v410 = vpop.permute.xlu0 %409
    %411 = vrot.lane.b32.xlu0 %v291, 16
    %v412 = vpop.permute.xlu0 %411
    %413 = vrot.lane.b32.xlu0 %v292, 16
    %v414 = vpop.permute.xlu0 %413
    %415 = vrot.lane.b32.xlu0 %v293, 16
    %v416 = vpop.permute.xlu0 %415
    %417 = vrot.lane.b32.xlu0 %v294, 16
    %v418 = vpop.permute.xlu0 %417
    %419 = vrot.lane.b32.xlu0 %v295, 16
    %v420 = vpop.permute.xlu0 %419
    %421 = vrot.lane.b32.xlu0 %v296, 16
    %v422 = vpop.permute.xlu0 %421
    %423 = vrot.lane.b32.xlu0 %v297, 16
    %v424 = vpop.permute.xlu0 %423
    %425 = vrot.lane.b32.xlu0 %v298, 16
    %v426 = vpop.permute.xlu0 %425
    %427 = vrot.lane.b32.xlu0 %v299, 16
    %v428 = vpop.permute.xlu0 %427
    %429 = vrot.lane.b32.xlu0 %v300, 16
    %v430 = vpop.permute.xlu0 %429
    %431 = vrot.lane.b32.xlu0 %v301, 16
    %v432 = vpop.permute.xlu0 %431
    %433 = vrot.lane.b32.xlu0 %v302, 16
    %v434 = vpop.permute.xlu0 %433
    %435 = vrot.lane.b32.xlu0 %v303, 16
    %v436 = vpop.permute.xlu0 %435
    %437 = vrot.lane.b32.xlu0 %v304, 16
    %v438 = vpop.permute.xlu0 %437
    %439 = vrot.lane.b32.xlu0 %v305, 16
    %v440 = vpop.permute.xlu0 %439
    %441 = vrot.lane.b32.xlu0 %v306, 16
    %v442 = vpop.permute.xlu0 %441
    %443 = vrot.lane.b32.xlu0 %v307, 16
    %v444 = vpop.permute.xlu0 %443
    %445 = vrot.lane.b32.xlu0 %v308, 16
    %v446 = vpop.permute.xlu0 %445
    %447 = vrot.lane.b32.xlu0 %v309, 16
    %v448 = vpop.permute.xlu0 %447
    %449 = vrot.lane.b32.xlu0 %v310, 16
    %v450 = vpop.permute.xlu0 %449
    %451 = vrot.lane.b32.xlu0 %v311, 16
    %v452 = vpop.permute.xlu0 %451
    %453 = vrot.lane.b32.xlu0 %v312, 16
    %v454 = vpop.permute.xlu0 %453
    %455 = vrot.lane.b32.xlu0 %v313, 16
    %v456 = vpop.permute.xlu0 %455
    %457 = vrot.lane.b32.xlu0 %v314, 16
    %v458 = vpop.permute.xlu0 %457
    %459 = vrot.lane.b32.xlu0 %v315, 16
    %v460 = vpop.permute.xlu0 %459
    %461 = vrot.lane.b32.xlu0 %v316, 16
    %v462 = vpop.permute.xlu0 %461
    %463 = vrot.lane.b32.xlu0 %v317, 16
    %v464 = vpop.permute.xlu0 %463
    %465 = vrot.lane.b32.xlu0 %v318, 16
    %v466 = vpop.permute.xlu0 %465
    %467 = vrot.lane.b32.xlu0 %v319, 16
    %v468 = vpop.permute.xlu0 %467
    %469 = vrot.lane.b32.xlu0 %v320, 16
    %v470 = vpop.permute.xlu0 %469
    %471 = vrot.lane.b32.xlu0 %v321, 16
    %v472 = vpop.permute.xlu0 %471
    %473 = vrot.lane.b32.xlu0 %v322, 16
    %v474 = vpop.permute.xlu0 %473
    %v513 = vmul.f32 %v19, %v400
    %v514 = vmul.f32 %v20, %v402
    %v515 = vmul.f32 %v21, %v404
    %v516 = vmul.f32 %v22, %v406
    %v517 = vmul.f32 %v23, %v408
    %v518 = vmul.f32 %v24, %v410
    %v519 = vmul.f32 %v25, %v412
    %v520 = vmul.f32 %v26, %v414
    %v521 = vmul.f32 %v27, %v416
    %v522 = vmul.f32 %v28, %v418
    %v523 = vmul.f32 %v29, %v420
    %v524 = vmul.f32 %v30, %v422
    %v525 = vmul.f32 %v31, %v424
    %v526 = vmul.f32 %v32, %v426
    %v527 = vmul.f32 %v33, %v428
    %v528 = vmul.f32 %v34, %v430
    %v529 = vmul.f32 %v35, %v432
    %v530 = vmul.f32 %v36, %v434
    %v531 = vmul.f32 %v37, %v436
    %v532 = vmul.f32 %v38, %v438
    %v533 = vmul.f32 %v39, %v440
    %v534 = vmul.f32 %v40, %v442
    %v535 = vmul.f32 %v41, %v444
    %v536 = vmul.f32 %v42, %v446
    %v537 = vmul.f32 %v43, %v448
    %v538 = vmul.f32 %v44, %v450
    %v539 = vmul.f32 %v45, %v452
    %v540 = vmul.f32 %v46, %v454
    %v541 = vmul.f32 %v47, %v456
    %v542 = vmul.f32 %v48, %v458
    %v543 = vmul.f32 %v49, %v460
    %v544 = vmul.f32 %v50, %v462
    %v545 = vmul.f32 %v51, %v464
    %v546 = vmul.f32 %v52, %v466
    %v547 = vmul.f32 %v53, %v468
    %v548 = vmul.f32 %v54, %v470
    %v549 = vmul.f32 %v55, %v472
    %v550 = vmul.f32 %v56, %v474
    %589 = vrot.lane.b32.xlu0 %v19, 32
    %v590 = vpop.permute.xlu0 %589
    %591 = vrot.lane.b32.xlu0 %v20, 32
    %v592 = vpop.permute.xlu0 %591
    %593 = vrot.lane.b32.xlu0 %v21, 32
    %v594 = vpop.permute.xlu0 %593
    %595 = vrot.lane.b32.xlu0 %v22, 32
    %v596 = vpop.permute.xlu0 %595
    %597 = vrot.lane.b32.xlu0 %v23, 32
    %v598 = vpop.permute.xlu0 %597
    %599 = vrot.lane.b32.xlu0 %v24, 32
    %v600 = vpop.permute.xlu0 %599
    %601 = vrot.lane.b32.xlu0 %v25, 32
    %v602 = vpop.permute.xlu0 %601
    %603 = vrot.lane.b32.xlu0 %v26, 32
    %v604 = vpop.permute.xlu0 %603
    %605 = vrot.lane.b32.xlu0 %v27, 32
    %v606 = vpop.permute.xlu0 %605
    %607 = vrot.lane.b32.xlu0 %v28, 32
    %v608 = vpop.permute.xlu0 %607
    %609 = vrot.lane.b32.xlu0 %v29, 32
    %v610 = vpop.permute.xlu0 %609
    %611 = vrot.lane.b32.xlu0 %v30, 32
    %v612 = vpop.permute.xlu0 %611
    %613 = vrot.lane.b32.xlu0 %v31, 32
    %v614 = vpop.permute.xlu0 %613
    %615 = vrot.lane.b32.xlu0 %v32, 32
    %v616 = vpop.permute.xlu0 %615
    %617 = vrot.lane.b32.xlu0 %v33, 32
    %v618 = vpop.permute.xlu0 %617
    %619 = vrot.lane.b32.xlu0 %v34, 32
    %v620 = vpop.permute.xlu0 %619
    %621 = vrot.lane.b32.xlu0 %v35, 32
    %v622 = vpop.permute.xlu0 %621
    %623 = vrot.lane.b32.xlu0 %v36, 32
    %v624 = vpop.permute.xlu0 %623
    %625 = vrot.lane.b32.xlu0 %v37, 32
    %v626 = vpop.permute.xlu0 %625
    %627 = vrot.lane.b32.xlu0 %v38, 32
    %v628 = vpop.permute.xlu0 %627
    %629 = vrot.lane.b32.xlu0 %v39, 32
    %v630 = vpop.permute.xlu0 %629
    %631 = vrot.lane.b32.xlu0 %v40, 32
    %v632 = vpop.permute.xlu0 %631
    %633 = vrot.lane.b32.xlu0 %v41, 32
    %v634 = vpop.permute.xlu0 %633
    %635 = vrot.lane.b32.xlu0 %v42, 32
    %v636 = vpop.permute.xlu0 %635
    %637 = vrot.lane.b32.xlu0 %v43, 32
    %v638 = vpop.permute.xlu0 %637
    %639 = vrot.lane.b32.xlu0 %v44, 32
    %v640 = vpop.permute.xlu0 %639
    %641 = vrot.lane.b32.xlu0 %v45, 32
    %v642 = vpop.permute.xlu0 %641
    %643 = vrot.lane.b32.xlu0 %v46, 32
    %v644 = vpop.permute.xlu0 %643
    %645 = vrot.lane.b32.xlu0 %v47, 32
    %v646 = vpop.permute.xlu0 %645
    %647 = vrot.lane.b32.xlu0 %v48, 32
    %v648 = vpop.permute.xlu0 %647
    %649 = vrot.lane.b32.xlu0 %v49, 32
    %v650 = vpop.permute.xlu0 %649
    %651 = vrot.lane.b32.xlu0 %v50, 32
    %v652 = vpop.permute.xlu0 %651
    %653 = vrot.lane.b32.xlu0 %v51, 32
    %v654 = vpop.permute.xlu0 %653
    %655 = vrot.lane.b32.xlu0 %v52, 32
    %v656 = vpop.permute.xlu0 %655
    %657 = vrot.lane.b32.xlu0 %v53, 32
    %v658 = vpop.permute.xlu0 %657
    %659 = vrot.lane.b32.xlu0 %v54, 32
    %v660 = vpop.permute.xlu0 %659
    %661 = vrot.lane.b32.xlu0 %v55, 32
    %v662 = vpop.permute.xlu0 %661
    %663 = vrot.lane.b32.xlu0 %v56, 32
    %v664 = vpop.permute.xlu0 %663
    %v703 = vmul.f32 %v323, %v590
    %v704 = vmul.f32 %v324, %v592
    %v705 = vmul.f32 %v325, %v594
    %v706 = vmul.f32 %v326, %v596
    %v707 = vmul.f32 %v327, %v598
    %v708 = vmul.f32 %v328, %v600
    %v709 = vmul.f32 %v329, %v602
    %v710 = vmul.f32 %v330, %v604
    %v711 = vmul.f32 %v331, %v606
    %v712 = vmul.f32 %v332, %v608
    %v713 = vmul.f32 %v333, %v610
    %v714 = vmul.f32 %v334, %v612
    %v715 = vmul.f32 %v335, %v614
    %v716 = vmul.f32 %v336, %v616
    %v717 = vmul.f32 %v337, %v618
    %v718 = vmul.f32 %v338, %v620
    %v719 = vmul.f32 %v339, %v622
    %v720 = vmul.f32 %v340, %v624
    %v721 = vmul.f32 %v341, %v626
    %v722 = vmul.f32 %v342, %v628
    %v723 = vmul.f32 %v343, %v630
    %v724 = vmul.f32 %v344, %v632
    %v725 = vmul.f32 %v345, %v634
    %v726 = vmul.f32 %v346, %v636
    %v727 = vmul.f32 %v347, %v638
    %v728 = vmul.f32 %v348, %v640
    %v729 = vmul.f32 %v349, %v642
    %v730 = vmul.f32 %v350, %v644
    %v731 = vmul.f32 %v351, %v646
    %v732 = vmul.f32 %v352, %v648
    %v733 = vmul.f32 %v353, %v650
    %v734 = vmul.f32 %v354, %v652
    %v735 = vmul.f32 %v355, %v654
    %v736 = vmul.f32 %v356, %v656
    %v737 = vmul.f32 %v357, %v658
    %v738 = vmul.f32 %v358, %v660
    %v739 = vmul.f32 %v359, %v662
    %v740 = vmul.f32 %v360, %v664
    %v741 = vmul.f32 %v513, %v590
    %v742 = vmul.f32 %v514, %v592
    %v743 = vmul.f32 %v515, %v594
    %v744 = vmul.f32 %v516, %v596
    %v745 = vmul.f32 %v517, %v598
    %v746 = vmul.f32 %v518, %v600
    %v747 = vmul.f32 %v519, %v602
    %v748 = vmul.f32 %v520, %v604
    %v749 = vmul.f32 %v521, %v606
    %v750 = vmul.f32 %v522, %v608
    %v751 = vmul.f32 %v523, %v610
    %v752 = vmul.f32 %v524, %v612
    %v753 = vmul.f32 %v525, %v614
    %v754 = vmul.f32 %v526, %v616
    %v755 = vmul.f32 %v527, %v618
    %v756 = vmul.f32 %v528, %v620
    %v757 = vmul.f32 %v529, %v622
    %v758 = vmul.f32 %v530, %v624
    %v759 = vmul.f32 %v531, %v626
    %v760 = vmul.f32 %v532, %v628
    %v761 = vmul.f32 %v533, %v630
    %v762 = vmul.f32 %v534, %v632
    %v763 = vmul.f32 %v535, %v634
    %v764 = vmul.f32 %v536, %v636
    %v765 = vmul.f32 %v537, %v638
    %v766 = vmul.f32 %v538, %v640
    %v767 = vmul.f32 %v539, %v642
    %v768 = vmul.f32 %v540, %v644
    %v769 = vmul.f32 %v541, %v646
    %v770 = vmul.f32 %v542, %v648
    %v771 = vmul.f32 %v543, %v650
    %v772 = vmul.f32 %v544, %v652
    %v773 = vmul.f32 %v545, %v654
    %v774 = vmul.f32 %v546, %v656
    %v775 = vmul.f32 %v547, %v658
    %v776 = vmul.f32 %v548, %v660
    %v777 = vmul.f32 %v549, %v662
    %v778 = vmul.f32 %v550, %v664
    %817 = vrot.lane.b32.xlu0 %v741, 112
    %v818 = vpop.permute.xlu0 %817
    %819 = vrot.lane.b32.xlu0 %v742, 112
    %v820 = vpop.permute.xlu0 %819
    %821 = vrot.lane.b32.xlu0 %v743, 112
    %v822 = vpop.permute.xlu0 %821
    %823 = vrot.lane.b32.xlu0 %v744, 112
    %v824 = vpop.permute.xlu0 %823
    %825 = vrot.lane.b32.xlu0 %v745, 112
    %v826 = vpop.permute.xlu0 %825
    %827 = vrot.lane.b32.xlu0 %v746, 112
    %v828 = vpop.permute.xlu0 %827
    %829 = vrot.lane.b32.xlu0 %v747, 112
    %v830 = vpop.permute.xlu0 %829
    %831 = vrot.lane.b32.xlu0 %v748, 112
    %v832 = vpop.permute.xlu0 %831
    %833 = vrot.lane.b32.xlu0 %v749, 112
    %v834 = vpop.permute.xlu0 %833
    %835 = vrot.lane.b32.xlu0 %v750, 112
    %v836 = vpop.permute.xlu0 %835
    %837 = vrot.lane.b32.xlu0 %v751, 112
    %v838 = vpop.permute.xlu0 %837
    %839 = vrot.lane.b32.xlu0 %v752, 112
    %v840 = vpop.permute.xlu0 %839
    %841 = vrot.lane.b32.xlu0 %v753, 112
    %v842 = vpop.permute.xlu0 %841
    %843 = vrot.lane.b32.xlu0 %v754, 112
    %v844 = vpop.permute.xlu0 %843
    %845 = vrot.lane.b32.xlu0 %v755, 112
    %v846 = vpop.permute.xlu0 %845
    %847 = vrot.lane.b32.xlu0 %v756, 112
    %v848 = vpop.permute.xlu0 %847
    %849 = vrot.lane.b32.xlu0 %v757, 112
    %v850 = vpop.permute.xlu0 %849
    %851 = vrot.lane.b32.xlu0 %v758, 112
    %v852 = vpop.permute.xlu0 %851
    %853 = vrot.lane.b32.xlu0 %v759, 112
    %v854 = vpop.permute.xlu0 %853
    %855 = vrot.lane.b32.xlu0 %v760, 112
    %v856 = vpop.permute.xlu0 %855
    %857 = vrot.lane.b32.xlu0 %v761, 112
    %v858 = vpop.permute.xlu0 %857
    %859 = vrot.lane.b32.xlu0 %v762, 112
    %v860 = vpop.permute.xlu0 %859
    %861 = vrot.lane.b32.xlu0 %v763, 112
    %v862 = vpop.permute.xlu0 %861
    %863 = vrot.lane.b32.xlu0 %v764, 112
    %v864 = vpop.permute.xlu0 %863
    %865 = vrot.lane.b32.xlu0 %v765, 112
    %v866 = vpop.permute.xlu0 %865
    %867 = vrot.lane.b32.xlu0 %v766, 112
    %v868 = vpop.permute.xlu0 %867
    %869 = vrot.lane.b32.xlu0 %v767, 112
    %v870 = vpop.permute.xlu0 %869
    %871 = vrot.lane.b32.xlu0 %v768, 112
    %v872 = vpop.permute.xlu0 %871
    %873 = vrot.lane.b32.xlu0 %v769, 112
    %v874 = vpop.permute.xlu0 %873
    %875 = vrot.lane.b32.xlu0 %v770, 112
    %v876 = vpop.permute.xlu0 %875
    %877 = vrot.lane.b32.xlu0 %v771, 112
    %v878 = vpop.permute.xlu0 %877
    %879 = vrot.lane.b32.xlu0 %v772, 112
    %v880 = vpop.permute.xlu0 %879
    %881 = vrot.lane.b32.xlu0 %v773, 112
    %v882 = vpop.permute.xlu0 %881
    %883 = vrot.lane.b32.xlu0 %v774, 112
    %v884 = vpop.permute.xlu0 %883
    %885 = vrot.lane.b32.xlu0 %v775, 112
    %v886 = vpop.permute.xlu0 %885
    %887 = vrot.lane.b32.xlu0 %v776, 112
    %v888 = vpop.permute.xlu0 %887
    %889 = vrot.lane.b32.xlu0 %v777, 112
    %v890 = vpop.permute.xlu0 %889
    %891 = vrot.lane.b32.xlu0 %v778, 112
    %v892 = vpop.permute.xlu0 %891
    %v931 = vsub.f32 %v703, %v818
    %v932 = vsub.f32 %v704, %v820
    %v933 = vsub.f32 %v705, %v822
    %v934 = vsub.f32 %v706, %v824
    %v935 = vsub.f32 %v707, %v826
    %v936 = vsub.f32 %v708, %v828
    %v937 = vsub.f32 %v709, %v830
    %v938 = vsub.f32 %v710, %v832
    %v939 = vsub.f32 %v711, %v834
    %v940 = vsub.f32 %v712, %v836
    %v941 = vsub.f32 %v713, %v838
    %v942 = vsub.f32 %v714, %v840
    %v943 = vsub.f32 %v715, %v842
    %v944 = vsub.f32 %v716, %v844
    %v945 = vsub.f32 %v717, %v846
    %v946 = vsub.f32 %v718, %v848
    %v947 = vsub.f32 %v719, %v850
    %v948 = vsub.f32 %v720, %v852
    %v949 = vsub.f32 %v721, %v854
    %v950 = vsub.f32 %v722, %v856
    %v951 = vsub.f32 %v723, %v858
    %v952 = vsub.f32 %v724, %v860
    %v953 = vsub.f32 %v725, %v862
    %v954 = vsub.f32 %v726, %v864
    %v955 = vsub.f32 %v727, %v866
    %v956 = vsub.f32 %v728, %v868
    %v957 = vsub.f32 %v729, %v870
    %v958 = vsub.f32 %v730, %v872
    %v959 = vsub.f32 %v731, %v874
    %v960 = vsub.f32 %v732, %v876
    %v961 = vsub.f32 %v733, %v878
    %v962 = vsub.f32 %v734, %v880
    %v963 = vsub.f32 %v735, %v882
    %v964 = vsub.f32 %v736, %v884
    %v965 = vsub.f32 %v737, %v886
    %v966 = vsub.f32 %v738, %v888
    %v967 = vsub.f32 %v739, %v890
    %v968 = vsub.f32 %v740, %v892
    %969 = vrot.lane.b32.xlu0 %v19, 16
    %v970 = vpop.permute.xlu0 %969
    %971 = vrot.lane.b32.xlu0 %v20, 16
    %v972 = vpop.permute.xlu0 %971
    %973 = vrot.lane.b32.xlu0 %v21, 16
    %v974 = vpop.permute.xlu0 %973
    %975 = vrot.lane.b32.xlu0 %v22, 16
    %v976 = vpop.permute.xlu0 %975
    %977 = vrot.lane.b32.xlu0 %v23, 16
    %v978 = vpop.permute.xlu0 %977
    %979 = vrot.lane.b32.xlu0 %v24, 16
    %v980 = vpop.permute.xlu0 %979
    %981 = vrot.lane.b32.xlu0 %v25, 16
    %v982 = vpop.permute.xlu0 %981
    %983 = vrot.lane.b32.xlu0 %v26, 16
    %v984 = vpop.permute.xlu0 %983
    %985 = vrot.lane.b32.xlu0 %v27, 16
    %v986 = vpop.permute.xlu0 %985
    %987 = vrot.lane.b32.xlu0 %v28, 16
    %v988 = vpop.permute.xlu0 %987
    %989 = vrot.lane.b32.xlu0 %v29, 16
    %v990 = vpop.permute.xlu0 %989
    %991 = vrot.lane.b32.xlu0 %v30, 16
    %v992 = vpop.permute.xlu0 %991
    %993 = vrot.lane.b32.xlu0 %v31, 16
    %v994 = vpop.permute.xlu0 %993
    %995 = vrot.lane.b32.xlu0 %v32, 16
    %v996 = vpop.permute.xlu0 %995
    %997 = vrot.lane.b32.xlu0 %v33, 16
    %v998 = vpop.permute.xlu0 %997
    %999 = vrot.lane.b32.xlu0 %v34, 16
    %v1000 = vpop.permute.xlu0 %999
    %1001 = vrot.lane.b32.xlu0 %v35, 16
    %v1002 = vpop.permute.xlu0 %1001
    %1003 = vrot.lane.b32.xlu0 %v36, 16
    %v1004 = vpop.permute.xlu0 %1003
    %1005 = vrot.lane.b32.xlu0 %v37, 16
    %v1006 = vpop.permute.xlu0 %1005
    %1007 = vrot.lane.b32.xlu0 %v38, 16
    %v1008 = vpop.permute.xlu0 %1007
    %1009 = vrot.lane.b32.xlu0 %v39, 16
    %v1010 = vpop.permute.xlu0 %1009
    %1011 = vrot.lane.b32.xlu0 %v40, 16
    %v1012 = vpop.permute.xlu0 %1011
    %1013 = vrot.lane.b32.xlu0 %v41, 16
    %v1014 = vpop.permute.xlu0 %1013
    %1015 = vrot.lane.b32.xlu0 %v42, 16
    %v1016 = vpop.permute.xlu0 %1015
    %1017 = vrot.lane.b32.xlu0 %v43, 16
    %v1018 = vpop.permute.xlu0 %1017
    %1019 = vrot.lane.b32.xlu0 %v44, 16
    %v1020 = vpop.permute.xlu0 %1019
    %1021 = vrot.lane.b32.xlu0 %v45, 16
    %v1022 = vpop.permute.xlu0 %1021
    %1023 = vrot.lane.b32.xlu0 %v46, 16
    %v1024 = vpop.permute.xlu0 %1023
    %1025 = vrot.lane.b32.xlu0 %v47, 16
    %v1026 = vpop.permute.xlu0 %1025
    %1027 = vrot.lane.b32.xlu0 %v48, 16
    %v1028 = vpop.permute.xlu0 %1027
    %1029 = vrot.lane.b32.xlu0 %v49, 16
    %v1030 = vpop.permute.xlu0 %1029
    %1031 = vrot.lane.b32.xlu0 %v50, 16
    %v1032 = vpop.permute.xlu0 %1031
    %1033 = vrot.lane.b32.xlu0 %v51, 16
    %v1034 = vpop.permute.xlu0 %1033
    %1035 = vrot.lane.b32.xlu0 %v52, 16
    %v1036 = vpop.permute.xlu0 %1035
    %1037 = vrot.lane.b32.xlu0 %v53, 16
    %v1038 = vpop.permute.xlu0 %1037
    %1039 = vrot.lane.b32.xlu0 %v54, 16
    %v1040 = vpop.permute.xlu0 %1039
    %1041 = vrot.lane.b32.xlu0 %v55, 16
    %v1042 = vpop.permute.xlu0 %1041
    %1043 = vrot.lane.b32.xlu0 %v56, 16
    %v1044 = vpop.permute.xlu0 %1043
    %v1083 = vmul.f32 %v323, %v970
    %v1084 = vmul.f32 %v324, %v972
    %v1085 = vmul.f32 %v325, %v974
    %v1086 = vmul.f32 %v326, %v976
    %v1087 = vmul.f32 %v327, %v978
    %v1088 = vmul.f32 %v328, %v980
    %v1089 = vmul.f32 %v329, %v982
    %v1090 = vmul.f32 %v330, %v984
    %v1091 = vmul.f32 %v331, %v986
    %v1092 = vmul.f32 %v332, %v988
    %v1093 = vmul.f32 %v333, %v990
    %v1094 = vmul.f32 %v334, %v992
    %v1095 = vmul.f32 %v335, %v994
    %v1096 = vmul.f32 %v336, %v996
    %v1097 = vmul.f32 %v337, %v998
    %v1098 = vmul.f32 %v338, %v1000
    %v1099 = vmul.f32 %v339, %v1002
    %v1100 = vmul.f32 %v340, %v1004
    %v1101 = vmul.f32 %v341, %v1006
    %v1102 = vmul.f32 %v342, %v1008
    %v1103 = vmul.f32 %v343, %v1010
    %v1104 = vmul.f32 %v344, %v1012
    %v1105 = vmul.f32 %v345, %v1014
    %v1106 = vmul.f32 %v346, %v1016
    %v1107 = vmul.f32 %v347, %v1018
    %v1108 = vmul.f32 %v348, %v1020
    %v1109 = vmul.f32 %v349, %v1022
    %v1110 = vmul.f32 %v350, %v1024
    %v1111 = vmul.f32 %v351, %v1026
    %v1112 = vmul.f32 %v352, %v1028
    %v1113 = vmul.f32 %v353, %v1030
    %v1114 = vmul.f32 %v354, %v1032
    %v1115 = vmul.f32 %v355, %v1034
    %v1116 = vmul.f32 %v356, %v1036
    %v1117 = vmul.f32 %v357, %v1038
    %v1118 = vmul.f32 %v358, %v1040
    %v1119 = vmul.f32 %v359, %v1042
    %v1120 = vmul.f32 %v360, %v1044
    %1121 = vrot.lane.b32.xlu0 %v19, 48
    %v1122 = vpop.permute.xlu0 %1121
    %1123 = vrot.lane.b32.xlu0 %v20, 48
    %v1124 = vpop.permute.xlu0 %1123
    %1125 = vrot.lane.b32.xlu0 %v21, 48
    %v1126 = vpop.permute.xlu0 %1125
    %1127 = vrot.lane.b32.xlu0 %v22, 48
    %v1128 = vpop.permute.xlu0 %1127
    %1129 = vrot.lane.b32.xlu0 %v23, 48
    %v1130 = vpop.permute.xlu0 %1129
    %1131 = vrot.lane.b32.xlu0 %v24, 48
    %v1132 = vpop.permute.xlu0 %1131
    %1133 = vrot.lane.b32.xlu0 %v25, 48
    %v1134 = vpop.permute.xlu0 %1133
    %1135 = vrot.lane.b32.xlu0 %v26, 48
    %v1136 = vpop.permute.xlu0 %1135
    %1137 = vrot.lane.b32.xlu0 %v27, 48
    %v1138 = vpop.permute.xlu0 %1137
    %1139 = vrot.lane.b32.xlu0 %v28, 48
    %v1140 = vpop.permute.xlu0 %1139
    %1141 = vrot.lane.b32.xlu0 %v29, 48
    %v1142 = vpop.permute.xlu0 %1141
    %1143 = vrot.lane.b32.xlu0 %v30, 48
    %v1144 = vpop.permute.xlu0 %1143
    %1145 = vrot.lane.b32.xlu0 %v31, 48
    %v1146 = vpop.permute.xlu0 %1145
    %1147 = vrot.lane.b32.xlu0 %v32, 48
    %v1148 = vpop.permute.xlu0 %1147
    %1149 = vrot.lane.b32.xlu0 %v33, 48
    %v1150 = vpop.permute.xlu0 %1149
    %1151 = vrot.lane.b32.xlu0 %v34, 48
    %v1152 = vpop.permute.xlu0 %1151
    %1153 = vrot.lane.b32.xlu0 %v35, 48
    %v1154 = vpop.permute.xlu0 %1153
    %1155 = vrot.lane.b32.xlu0 %v36, 48
    %v1156 = vpop.permute.xlu0 %1155
    %1157 = vrot.lane.b32.xlu0 %v37, 48
    %v1158 = vpop.permute.xlu0 %1157
    %1159 = vrot.lane.b32.xlu0 %v38, 48
    %v1160 = vpop.permute.xlu0 %1159
    %1161 = vrot.lane.b32.xlu0 %v39, 48
    %v1162 = vpop.permute.xlu0 %1161
    %1163 = vrot.lane.b32.xlu0 %v40, 48
    %v1164 = vpop.permute.xlu0 %1163
    %1165 = vrot.lane.b32.xlu0 %v41, 48
    %v1166 = vpop.permute.xlu0 %1165
    %1167 = vrot.lane.b32.xlu0 %v42, 48
    %v1168 = vpop.permute.xlu0 %1167
    %1169 = vrot.lane.b32.xlu0 %v43, 48
    %v1170 = vpop.permute.xlu0 %1169
    %1171 = vrot.lane.b32.xlu0 %v44, 48
    %v1172 = vpop.permute.xlu0 %1171
    %1173 = vrot.lane.b32.xlu0 %v45, 48
    %v1174 = vpop.permute.xlu0 %1173
    %1175 = vrot.lane.b32.xlu0 %v46, 48
    %v1176 = vpop.permute.xlu0 %1175
    %1177 = vrot.lane.b32.xlu0 %v47, 48
    %v1178 = vpop.permute.xlu0 %1177
    %1179 = vrot.lane.b32.xlu0 %v48, 48
    %v1180 = vpop.permute.xlu0 %1179
    %1181 = vrot.lane.b32.xlu0 %v49, 48
    %v1182 = vpop.permute.xlu0 %1181
    %1183 = vrot.lane.b32.xlu0 %v50, 48
    %v1184 = vpop.permute.xlu0 %1183
    %1185 = vrot.lane.b32.xlu0 %v51, 48
    %v1186 = vpop.permute.xlu0 %1185
    %1187 = vrot.lane.b32.xlu0 %v52, 48
    %v1188 = vpop.permute.xlu0 %1187
    %1189 = vrot.lane.b32.xlu0 %v53, 48
    %v1190 = vpop.permute.xlu0 %1189
    %1191 = vrot.lane.b32.xlu0 %v54, 48
    %v1192 = vpop.permute.xlu0 %1191
    %1193 = vrot.lane.b32.xlu0 %v55, 48
    %v1194 = vpop.permute.xlu0 %1193
    %1195 = vrot.lane.b32.xlu0 %v56, 48
    %v1196 = vpop.permute.xlu0 %1195
    %v1235 = vmul.f32 %v513, %v1122
    %v1236 = vmul.f32 %v514, %v1124
    %v1237 = vmul.f32 %v515, %v1126
    %v1238 = vmul.f32 %v516, %v1128
    %v1239 = vmul.f32 %v517, %v1130
    %v1240 = vmul.f32 %v518, %v1132
    %v1241 = vmul.f32 %v519, %v1134
    %v1242 = vmul.f32 %v520, %v1136
    %v1243 = vmul.f32 %v521, %v1138
    %v1244 = vmul.f32 %v522, %v1140
    %v1245 = vmul.f32 %v523, %v1142
    %v1246 = vmul.f32 %v524, %v1144
    %v1247 = vmul.f32 %v525, %v1146
    %v1248 = vmul.f32 %v526, %v1148
    %v1249 = vmul.f32 %v527, %v1150
    %v1250 = vmul.f32 %v528, %v1152
    %v1251 = vmul.f32 %v529, %v1154
    %v1252 = vmul.f32 %v530, %v1156
    %v1253 = vmul.f32 %v531, %v1158
    %v1254 = vmul.f32 %v532, %v1160
    %v1255 = vmul.f32 %v533, %v1162
    %v1256 = vmul.f32 %v534, %v1164
    %v1257 = vmul.f32 %v535, %v1166
    %v1258 = vmul.f32 %v536, %v1168
    %v1259 = vmul.f32 %v537, %v1170
    %v1260 = vmul.f32 %v538, %v1172
    %v1261 = vmul.f32 %v539, %v1174
    %v1262 = vmul.f32 %v540, %v1176
    %v1263 = vmul.f32 %v541, %v1178
    %v1264 = vmul.f32 %v542, %v1180
    %v1265 = vmul.f32 %v543, %v1182
    %v1266 = vmul.f32 %v544, %v1184
    %v1267 = vmul.f32 %v545, %v1186
    %v1268 = vmul.f32 %v546, %v1188
    %v1269 = vmul.f32 %v547, %v1190
    %v1270 = vmul.f32 %v548, %v1192
    %v1271 = vmul.f32 %v549, %v1194
    %v1272 = vmul.f32 %v550, %v1196
    %1311 = vrot.lane.b32.xlu0 %v1235, 112
    %v1312 = vpop.permute.xlu0 %1311
    %1313 = vrot.lane.b32.xlu0 %v1236, 112
    %v1314 = vpop.permute.xlu0 %1313
    %1315 = vrot.lane.b32.xlu0 %v1237, 112
    %v1316 = vpop.permute.xlu0 %1315
    %1317 = vrot.lane.b32.xlu0 %v1238, 112
    %v1318 = vpop.permute.xlu0 %1317
    %1319 = vrot.lane.b32.xlu0 %v1239, 112
    %v1320 = vpop.permute.xlu0 %1319
    %1321 = vrot.lane.b32.xlu0 %v1240, 112
    %v1322 = vpop.permute.xlu0 %1321
    %1323 = vrot.lane.b32.xlu0 %v1241, 112
    %v1324 = vpop.permute.xlu0 %1323
    %1325 = vrot.lane.b32.xlu0 %v1242, 112
    %v1326 = vpop.permute.xlu0 %1325
    %1327 = vrot.lane.b32.xlu0 %v1243, 112
    %v1328 = vpop.permute.xlu0 %1327
    %1329 = vrot.lane.b32.xlu0 %v1244, 112
    %v1330 = vpop.permute.xlu0 %1329
    %1331 = vrot.lane.b32.xlu0 %v1245, 112
    %v1332 = vpop.permute.xlu0 %1331
    %1333 = vrot.lane.b32.xlu0 %v1246, 112
    %v1334 = vpop.permute.xlu0 %1333
    %1335 = vrot.lane.b32.xlu0 %v1247, 112
    %v1336 = vpop.permute.xlu0 %1335
    %1337 = vrot.lane.b32.xlu0 %v1248, 112
    %v1338 = vpop.permute.xlu0 %1337
    %1339 = vrot.lane.b32.xlu0 %v1249, 112
    %v1340 = vpop.permute.xlu0 %1339
    %1341 = vrot.lane.b32.xlu0 %v1250, 112
    %v1342 = vpop.permute.xlu0 %1341
    %1343 = vrot.lane.b32.xlu0 %v1251, 112
    %v1344 = vpop.permute.xlu0 %1343
    %1345 = vrot.lane.b32.xlu0 %v1252, 112
    %v1346 = vpop.permute.xlu0 %1345
    %1347 = vrot.lane.b32.xlu0 %v1253, 112
    %v1348 = vpop.permute.xlu0 %1347
    %1349 = vrot.lane.b32.xlu0 %v1254, 112
    %v1350 = vpop.permute.xlu0 %1349
    %1351 = vrot.lane.b32.xlu0 %v1255, 112
    %v1352 = vpop.permute.xlu0 %1351
    %1353 = vrot.lane.b32.xlu0 %v1256, 112
    %v1354 = vpop.permute.xlu0 %1353
    %1355 = vrot.lane.b32.xlu0 %v1257, 112
    %v1356 = vpop.permute.xlu0 %1355
    %1357 = vrot.lane.b32.xlu0 %v1258, 112
    %v1358 = vpop.permute.xlu0 %1357
    %1359 = vrot.lane.b32.xlu0 %v1259, 112
    %v1360 = vpop.permute.xlu0 %1359
    %1361 = vrot.lane.b32.xlu0 %v1260, 112
    %v1362 = vpop.permute.xlu0 %1361
    %1363 = vrot.lane.b32.xlu0 %v1261, 112
    %v1364 = vpop.permute.xlu0 %1363
    %1365 = vrot.lane.b32.xlu0 %v1262, 112
    %v1366 = vpop.permute.xlu0 %1365
    %1367 = vrot.lane.b32.xlu0 %v1263, 112
    %v1368 = vpop.permute.xlu0 %1367
    %1369 = vrot.lane.b32.xlu0 %v1264, 112
    %v1370 = vpop.permute.xlu0 %1369
    %1371 = vrot.lane.b32.xlu0 %v1265, 112
    %v1372 = vpop.permute.xlu0 %1371
    %1373 = vrot.lane.b32.xlu0 %v1266, 112
    %v1374 = vpop.permute.xlu0 %1373
    %1375 = vrot.lane.b32.xlu0 %v1267, 112
    %v1376 = vpop.permute.xlu0 %1375
    %1377 = vrot.lane.b32.xlu0 %v1268, 112
    %v1378 = vpop.permute.xlu0 %1377
    %1379 = vrot.lane.b32.xlu0 %v1269, 112
    %v1380 = vpop.permute.xlu0 %1379
    %1381 = vrot.lane.b32.xlu0 %v1270, 112
    %v1382 = vpop.permute.xlu0 %1381
    %1383 = vrot.lane.b32.xlu0 %v1271, 112
    %v1384 = vpop.permute.xlu0 %1383
    %1385 = vrot.lane.b32.xlu0 %v1272, 112
    %v1386 = vpop.permute.xlu0 %1385
    %v1425 = vadd.f32 %v1083, %v1312
    %v1426 = vadd.f32 %v1084, %v1314
    %v1427 = vadd.f32 %v1085, %v1316
    %v1428 = vadd.f32 %v1086, %v1318
    %v1429 = vadd.f32 %v1087, %v1320
    %v1430 = vadd.f32 %v1088, %v1322
    %v1431 = vadd.f32 %v1089, %v1324
    %v1432 = vadd.f32 %v1090, %v1326
    %v1433 = vadd.f32 %v1091, %v1328
    %v1434 = vadd.f32 %v1092, %v1330
    %v1435 = vadd.f32 %v1093, %v1332
    %v1436 = vadd.f32 %v1094, %v1334
    %v1437 = vadd.f32 %v1095, %v1336
    %v1438 = vadd.f32 %v1096, %v1338
    %v1439 = vadd.f32 %v1097, %v1340
    %v1440 = vadd.f32 %v1098, %v1342
    %v1441 = vadd.f32 %v1099, %v1344
    %v1442 = vadd.f32 %v1100, %v1346
    %v1443 = vadd.f32 %v1101, %v1348
    %v1444 = vadd.f32 %v1102, %v1350
    %v1445 = vadd.f32 %v1103, %v1352
    %v1446 = vadd.f32 %v1104, %v1354
    %v1447 = vadd.f32 %v1105, %v1356
    %v1448 = vadd.f32 %v1106, %v1358
    %v1449 = vadd.f32 %v1107, %v1360
    %v1450 = vadd.f32 %v1108, %v1362
    %v1451 = vadd.f32 %v1109, %v1364
    %v1452 = vadd.f32 %v1110, %v1366
    %v1453 = vadd.f32 %v1111, %v1368
    %v1454 = vadd.f32 %v1112, %v1370
    %v1455 = vadd.f32 %v1113, %v1372
    %v1456 = vadd.f32 %v1114, %v1374
    %v1457 = vadd.f32 %v1115, %v1376
    %v1458 = vadd.f32 %v1116, %v1378
    %v1459 = vadd.f32 %v1117, %v1380
    %v1460 = vadd.f32 %v1118, %v1382
    %v1461 = vadd.f32 %v1119, %v1384
    %v1462 = vadd.f32 %v1120, %v1386
    %v1463 = vpack.c.bf16 %v932, %v931
    %v1464 = vpack.c.bf16 %v934, %v933
    %v1465 = vpack.c.bf16 %v936, %v935
    %v1466 = vpack.c.bf16 %v938, %v937
    %v1467 = vpack.c.bf16 %v940, %v939
    %v1468 = vpack.c.bf16 %v942, %v941
    %v1469 = vpack.c.bf16 %v944, %v943
    %v1470 = vpack.c.bf16 %v946, %v945
    %v1471 = vpack.c.bf16 %v948, %v947
    %v1472 = vpack.c.bf16 %v950, %v949
    %v1473 = vpack.c.bf16 %v952, %v951
    %v1474 = vpack.c.bf16 %v954, %v953
    %v1475 = vpack.c.bf16 %v956, %v955
    %v1476 = vpack.c.bf16 %v958, %v957
    %v1477 = vpack.c.bf16 %v960, %v959
    %v1478 = vpack.c.bf16 %v962, %v961
    %v1479 = vpack.c.bf16 %v964, %v963
    %v1480 = vpack.c.bf16 %v966, %v965
    %v1481 = vpack.c.bf16 %v968, %v967
    %v1482 = vld [vmem:[%s2] sm:$0xff]
    %v1483 = vld [vmem:[%s2 + $0x8] sm:$0xff]
    %v1484 = vld [vmem:[%s2 + $0x10] sm:$0xf]
    %v1485 = vld [vmem:[%s2 + $0x14] sm:$0xff]
    %v1486 = vld [vmem:[%s2 + $0x1c] sm:$0xff]
    %v1487 = vld [vmem:[%s2 + $0x24] sm:$0xf]
    %v1488 = vpack.c.bf16 %v1426, %v1425
    %v1489 = vpack.c.bf16 %v1428, %v1427
    %v1490 = vpack.c.bf16 %v1430, %v1429
    %v1491 = vpack.c.bf16 %v1432, %v1431
    %v1492 = vpack.c.bf16 %v1434, %v1433
    %v1493 = vpack.c.bf16 %v1436, %v1435
    %v1494 = vpack.c.bf16 %v1438, %v1437
    %v1495 = vpack.c.bf16 %v1440, %v1439
    %v1496 = vpack.c.bf16 %v1442, %v1441
    %v1497 = vpack.c.bf16 %v1444, %v1443
    %v1498 = vpack.c.bf16 %v1446, %v1445
    %v1499 = vpack.c.bf16 %v1448, %v1447
    %v1500 = vpack.c.bf16 %v1450, %v1449
    %v1501 = vpack.c.bf16 %v1452, %v1451
    %v1502 = vpack.c.bf16 %v1454, %v1453
    %v1503 = vpack.c.bf16 %v1456, %v1455
    %v1504 = vpack.c.bf16 %v1458, %v1457
    %v1505 = vpack.c.bf16 %v1460, %v1459
    %v1506 = vpack.c.bf16 %v1462, %v1461
    %v1507 = vld [vmem:[%s2 + $0x28] sm:$0xff]
    %v1508 = vld [vmem:[%s2 + $0x30] sm:$0xff]
    %v1509 = vld [vmem:[%s2 + $0x38] sm:$0xf]
    %v1510 = vld [vmem:[%s2 + $0x3c] sm:$0xff]
    %v1511 = vld [vmem:[%s2 + $0x44] sm:$0xff]
    %v1512 = vld [vmem:[%s2 + $0x4c] sm:$0xf]
    %1532 = vrot.lane.b32.xlu0 %v1488, 96
    %v1533 = vpop.permute.xlu0 %1532
    %1534 = vrot.lane.b32.xlu0 %v1489, 96
    %v1535 = vpop.permute.xlu0 %1534
    %1536 = vrot.lane.b32.xlu0 %v1490, 96
    %v1537 = vpop.permute.xlu0 %1536
    %1538 = vrot.lane.b32.xlu0 %v1491, 96
    %v1539 = vpop.permute.xlu0 %1538
    %1540 = vrot.lane.b32.xlu0 %v1492, 96
    %v1541 = vpop.permute.xlu0 %1540
    %1542 = vrot.lane.b32.xlu0 %v1493, 96
    %v1543 = vpop.permute.xlu0 %1542
    %1544 = vrot.lane.b32.xlu0 %v1494, 96
    %v1545 = vpop.permute.xlu0 %1544
    %1546 = vrot.lane.b32.xlu0 %v1495, 96
    %v1547 = vpop.permute.xlu0 %1546
    %1548 = vrot.lane.b32.xlu0 %v1496, 96
    %v1549 = vpop.permute.xlu0 %1548
    %1550 = vrot.lane.b32.xlu0 %v1497, 96
    %v1551 = vpop.permute.xlu0 %1550
    %1552 = vrot.lane.b32.xlu0 %v1498, 96
    %v1553 = vpop.permute.xlu0 %1552
    %1554 = vrot.lane.b32.xlu0 %v1499, 96
    %v1555 = vpop.permute.xlu0 %1554
    %1556 = vrot.lane.b32.xlu0 %v1500, 96
    %v1557 = vpop.permute.xlu0 %1556
    %1558 = vrot.lane.b32.xlu0 %v1501, 96
    %v1559 = vpop.permute.xlu0 %1558
    %1560 = vrot.lane.b32.xlu0 %v1502, 96
    %v1561 = vpop.permute.xlu0 %1560
    %1562 = vrot.lane.b32.xlu0 %v1503, 96
    %v1563 = vpop.permute.xlu0 %1562
    %1564 = vrot.lane.b32.xlu0 %v1504, 96
    %v1565 = vpop.permute.xlu0 %1564
    %1566 = vrot.lane.b32.xlu0 %v1505, 96
    %v1567 = vpop.permute.xlu0 %1566
    %1568 = vrot.lane.b32.xlu0 %v1506, 96
    %v1569 = vpop.permute.xlu0 %1568
    %v1576 = vunpack.c.l.b16 %v1507
    %v1577 = vunpack.c.h.b16 %v1507
    %v1578 = vunpack.c.l.b16 %v1508
    %v1579 = vunpack.c.h.b16 %v1508
    %v1580 = vunpack.c.l.b16 %v1509
    %v1581 = vunpack.c.l.b16 %v1510
    %v1582 = vunpack.c.h.b16 %v1510
    %v1583 = vunpack.c.l.b16 %v1511
    %v1584 = vunpack.c.h.b16 %v1511
    %v1585 = vunpack.c.l.b16 %v1512
    %v1586 = vpack.c.b16 %v1581, %v1576
    %v1587 = vpack.c.b16 %v1582, %v1577
    %v1588 = vpack.c.b16 %v1583, %v1578
    %v1589 = vpack.c.b16 %v1584, %v1579
    %v1590 = vpack.c.b16 %v1585, %v1580
    %vm1596 = vcmask 130048
    %v1598 = vsel %vm1596, %v1533, 0
    %v1601 = vsel %vm1596, %v1535, 0
    %v1604 = vsel %vm1596, %v1537, 0
    %v1607 = vsel %vm1596, %v1539, 0
    %v1610 = vsel %vm1596, %v1541, 0
    %v1613 = vsel %vm1596, %v1543, 0
    %v1616 = vsel %vm1596, %v1545, 0
    %v1619 = vsel %vm1596, %v1547, 0
    %v1622 = vsel %vm1596, %v1549, 0
    %v1625 = vsel %vm1596, %v1551, 0
    %v1628 = vsel %vm1596, %v1553, 0
    %v1631 = vsel %vm1596, %v1555, 0
    %v1634 = vsel %vm1596, %v1557, 0
    %v1637 = vsel %vm1596, %v1559, 0
    %v1640 = vsel %vm1596, %v1561, 0
    %v1643 = vsel %vm1596, %v1563, 0
    %v1646 = vsel %vm1596, %v1565, 0
    %v1649 = vsel %vm1596, %v1567, 0
    %v1652 = vsel %vm1596, %v1569, 0
    %1654 = vmatprep.subr.bf16.mxu0 0
    %1655 = vmatpush1.bf16.msra.mxu0 0
    %1656 = vmatprep.subr.bf16.mxu0 0
    %1657 = vmatpush1.bf16.msra.mxu0 0
    %1658 = vmatprep.subr.bf16.mxu0 0
    %1659 = vmatpush1.bf16.msra.mxu0 0
    %1660 = vmatprep.subr.bf16.mxu0 0
    %1661 = vmatpush1.bf16.msra.mxu0 0
    %1662 = vmatprep.subr.bf16.mxu0 0
    %1663 = vmatpush1.bf16.msra.mxu0 0
    %1664 = vmatprep.subr.bf16.mxu0 0
    %1665 = vmatpush1.bf16.msra.mxu0 0
    %1666 = vmatprep.subr.bf16.mxu0 0
    %1667 = vmatpush1.bf16.msra.mxu0 0
    %1668 = vmatprep.subr.bf16.mxu0 %v1587
    %1669 = vmatpush1.bf16.msra.mxu0 %v1586
    %1670 = vmatprep.subr.bf16.mxu0 0
    %1671 = vmatpush2.bf16.msra.mxu0 0
    %1672 = vmatprep.subr.bf16.mxu0 0
    %1673 = vmatpush2.bf16.msra.mxu0 0
    %1674 = vmatprep.subr.bf16.mxu0 0
    %1675 = vmatpush2.bf16.msra.mxu0 0
    %1676 = vmatprep.subr.bf16.mxu0 0
    %1677 = vmatpush2.bf16.msra.mxu0 0
    %1678 = vmatprep.subr.bf16.mxu0 0
    %1679 = vmatpush2.bf16.msra.mxu0 0
    %1680 = vmatprep.subr.bf16.mxu0 0
    %1681 = vmatpush2.bf16.msra.mxu0 0
    %1682 = vmatprep.subr.bf16.mxu0 0
    %1683 = vmatpush2.bf16.msra.mxu0 0
    %1684 = vmatprep.subr.bf16.mxu0 0
    %1685 = vmatpush2.bf16.msra.mxu0 0
    %1686 = vmatprep.mubr.bf16.mxu0 0
    %1687 = vmatmul.mubr.bf16.gmra.mxu0 %v1598
    %v1688 = vpop.f32.mrf.mxu0
    %v1689 = vadd.f32 0.0, %v1688
    %v1690 = vpop.f32.mrf.mxu0
    %v1691 = vadd.f32 0.0, %v1690
    %v1692 = vpop.f32.mrf.mxu0
    %v1693 = vadd.f32 0.0, %v1692
    %v1694 = vpop.f32.mrf.mxu0
    %v1695 = vadd.f32 0.0, %v1694
    %1696 = vmatprep.mubr.bf16.mxu0 0
    %1697 = vmatmul.mubr.bf16.gmra.mxu0 %v1601
    %v1698 = vpop.f32.mrf.mxu0
    %v1699 = vadd.f32 0.0, %v1698
    %v1700 = vpop.f32.mrf.mxu0
    %v1701 = vadd.f32 0.0, %v1700
    %v1702 = vpop.f32.mrf.mxu0
    %v1703 = vadd.f32 0.0, %v1702
    %v1704 = vpop.f32.mrf.mxu0
    %v1705 = vadd.f32 0.0, %v1704
    %1706 = vmatprep.mubr.bf16.mxu0 0
    %1707 = vmatmul.mubr.bf16.gmra.mxu0 %v1604
    %v1708 = vpop.f32.mrf.mxu0
    %v1709 = vadd.f32 0.0, %v1708
    %v1710 = vpop.f32.mrf.mxu0
    %v1711 = vadd.f32 0.0, %v1710
    %v1712 = vpop.f32.mrf.mxu0
    %v1713 = vadd.f32 0.0, %v1712
    %v1714 = vpop.f32.mrf.mxu0
    %v1715 = vadd.f32 0.0, %v1714
    %1716 = vmatprep.mubr.bf16.mxu0 0
    %1717 = vmatmul.mubr.bf16.gmra.mxu0 %v1607
    %v1718 = vpop.f32.mrf.mxu0
    %v1719 = vadd.f32 0.0, %v1718
    %v1720 = vpop.f32.mrf.mxu0
    %v1721 = vadd.f32 0.0, %v1720
    %v1722 = vpop.f32.mrf.mxu0
    %v1723 = vadd.f32 0.0, %v1722
    %v1724 = vpop.f32.mrf.mxu0
    %v1725 = vadd.f32 0.0, %v1724
    %1726 = vmatprep.mubr.bf16.mxu0 0
    %1727 = vmatmul.mubr.bf16.gmra.mxu0 %v1610
    %v1728 = vpop.f32.mrf.mxu0
    %v1729 = vadd.f32 0.0, %v1728
    %v1730 = vpop.f32.mrf.mxu0
    %v1731 = vadd.f32 0.0, %v1730
    %v1732 = vpop.f32.mrf.mxu0
    %v1733 = vadd.f32 0.0, %v1732
    %v1734 = vpop.f32.mrf.mxu0
    %v1735 = vadd.f32 0.0, %v1734
    %1736 = vmatprep.mubr.bf16.mxu0 0
    %1737 = vmatmul.mubr.bf16.gmra.mxu0 %v1613
    %v1738 = vpop.f32.mrf.mxu0
    %v1739 = vadd.f32 0.0, %v1738
    %v1740 = vpop.f32.mrf.mxu0
    %v1741 = vadd.f32 0.0, %v1740
    %v1742 = vpop.f32.mrf.mxu0
    %v1743 = vadd.f32 0.0, %v1742
    %v1744 = vpop.f32.mrf.mxu0
    %v1745 = vadd.f32 0.0, %v1744
    %1746 = vmatprep.mubr.bf16.mxu0 0
    %1747 = vmatmul.mubr.bf16.gmra.mxu0 %v1616
    %v1748 = vpop.f32.mrf.mxu0
    %v1749 = vadd.f32 0.0, %v1748
    %v1750 = vpop.f32.mrf.mxu0
    %v1751 = vadd.f32 0.0, %v1750
    %v1752 = vpop.f32.mrf.mxu0
    %v1753 = vadd.f32 0.0, %v1752
    %v1754 = vpop.f32.mrf.mxu0
    %v1755 = vadd.f32 0.0, %v1754
    %1756 = vmatprep.mubr.bf16.mxu0 0
    %1757 = vmatmul.mubr.bf16.gmra.mxu0 %v1619
    %v1758 = vpop.f32.mrf.mxu0
    %v1759 = vadd.f32 0.0, %v1758
    %v1760 = vpop.f32.mrf.mxu0
    %v1761 = vadd.f32 0.0, %v1760
    %v1762 = vpop.f32.mrf.mxu0
    %v1763 = vadd.f32 0.0, %v1762
    %v1764 = vpop.f32.mrf.mxu0
    %v1765 = vadd.f32 0.0, %v1764
    %1766 = vmatprep.mubr.bf16.mxu0 0
    %1767 = vmatmul.mubr.bf16.gmra.mxu0 %v1622
    %v1768 = vpop.f32.mrf.mxu0
    %v1769 = vadd.f32 0.0, %v1768
    %v1770 = vpop.f32.mrf.mxu0
    %v1771 = vadd.f32 0.0, %v1770
    %v1772 = vpop.f32.mrf.mxu0
    %v1773 = vadd.f32 0.0, %v1772
    %v1774 = vpop.f32.mrf.mxu0
    %v1775 = vadd.f32 0.0, %v1774
    %1776 = vmatprep.mubr.bf16.mxu0 0
    %1777 = vmatmul.mubr.bf16.gmra.mxu0 %v1625
    %v1778 = vpop.f32.mrf.mxu0
    %v1779 = vadd.f32 0.0, %v1778
    %v1780 = vpop.f32.mrf.mxu0
    %v1781 = vadd.f32 0.0, %v1780
    %v1782 = vpop.f32.mrf.mxu0
    %v1783 = vadd.f32 0.0, %v1782
    %v1784 = vpop.f32.mrf.mxu0
    %v1785 = vadd.f32 0.0, %v1784
    %1786 = vmatprep.mubr.bf16.mxu0 0
    %1787 = vmatmul.mubr.bf16.gmra.mxu0 %v1628
    %v1788 = vpop.f32.mrf.mxu0
    %v1789 = vadd.f32 0.0, %v1788
    %v1790 = vpop.f32.mrf.mxu0
    %v1791 = vadd.f32 0.0, %v1790
    %v1792 = vpop.f32.mrf.mxu0
    %v1793 = vadd.f32 0.0, %v1792
    %v1794 = vpop.f32.mrf.mxu0
    %v1795 = vadd.f32 0.0, %v1794
    %1796 = vmatprep.mubr.bf16.mxu0 0
    %1797 = vmatmul.mubr.bf16.gmra.mxu0 %v1631
    %v1798 = vpop.f32.mrf.mxu0
    %v1799 = vadd.f32 0.0, %v1798
    %v1800 = vpop.f32.mrf.mxu0
    %v1801 = vadd.f32 0.0, %v1800
    %v1802 = vpop.f32.mrf.mxu0
    %v1803 = vadd.f32 0.0, %v1802
    %v1804 = vpop.f32.mrf.mxu0
    %v1805 = vadd.f32 0.0, %v1804
    %1806 = vmatprep.mubr.bf16.mxu0 0
    %1807 = vmatmul.mubr.bf16.gmra.mxu0 %v1634
    %v1808 = vpop.f32.mrf.mxu0
    %v1809 = vadd.f32 0.0, %v1808
    %v1810 = vpop.f32.mrf.mxu0
    %v1811 = vadd.f32 0.0, %v1810
    %v1812 = vpop.f32.mrf.mxu0
    %v1813 = vadd.f32 0.0, %v1812
    %v1814 = vpop.f32.mrf.mxu0
    %v1815 = vadd.f32 0.0, %v1814
    %1816 = vmatprep.mubr.bf16.mxu0 0
    %1817 = vmatmul.mubr.bf16.gmra.mxu0 %v1637
    %v1818 = vpop.f32.mrf.mxu0
    %v1819 = vadd.f32 0.0, %v1818
    %v1820 = vpop.f32.mrf.mxu0
    %v1821 = vadd.f32 0.0, %v1820
    %v1822 = vpop.f32.mrf.mxu0
    %v1823 = vadd.f32 0.0, %v1822
    %v1824 = vpop.f32.mrf.mxu0
    %v1825 = vadd.f32 0.0, %v1824
    %1826 = vmatprep.mubr.bf16.mxu0 0
    %1827 = vmatmul.mubr.bf16.gmra.mxu0 %v1640
    %v1828 = vpop.f32.mrf.mxu0
    %v1829 = vadd.f32 0.0, %v1828
    %v1830 = vpop.f32.mrf.mxu0
    %v1831 = vadd.f32 0.0, %v1830
    %v1832 = vpop.f32.mrf.mxu0
    %v1833 = vadd.f32 0.0, %v1832
    %v1834 = vpop.f32.mrf.mxu0
    %v1835 = vadd.f32 0.0, %v1834
    %1836 = vmatprep.mubr.bf16.mxu0 0
    %1837 = vmatmul.mubr.bf16.gmra.mxu0 %v1643
    %v1838 = vpop.f32.mrf.mxu0
    %v1839 = vadd.f32 0.0, %v1838
    %v1840 = vpop.f32.mrf.mxu0
    %v1841 = vadd.f32 0.0, %v1840
    %v1842 = vpop.f32.mrf.mxu0
    %v1843 = vadd.f32 0.0, %v1842
    %v1844 = vpop.f32.mrf.mxu0
    %v1845 = vadd.f32 0.0, %v1844
    %1846 = vmatprep.mubr.bf16.mxu0 0
    %1847 = vmatmul.mubr.bf16.gmra.mxu0 %v1646
    %v1848 = vpop.f32.mrf.mxu0
    %v1849 = vadd.f32 0.0, %v1848
    %v1850 = vpop.f32.mrf.mxu0
    %v1851 = vadd.f32 0.0, %v1850
    %v1852 = vpop.f32.mrf.mxu0
    %v1853 = vadd.f32 0.0, %v1852
    %v1854 = vpop.f32.mrf.mxu0
    %v1855 = vadd.f32 0.0, %v1854
    %1856 = vmatprep.mubr.bf16.mxu0 0
    %1857 = vmatmul.mubr.bf16.gmra.mxu0 %v1649
    %v1858 = vpop.f32.mrf.mxu0
    %v1859 = vadd.f32 0.0, %v1858
    %v1860 = vpop.f32.mrf.mxu0
    %v1861 = vadd.f32 0.0, %v1860
    %v1862 = vpop.f32.mrf.mxu0
    %v1863 = vadd.f32 0.0, %v1862
    %v1864 = vpop.f32.mrf.mxu0
    %v1865 = vadd.f32 0.0, %v1864
    %1866 = vmatprep.mubr.bf16.mxu0 0
    %1867 = vmatmul.mubr.bf16.gmra.mxu0 %v1652
    %v1868 = vpop.f32.mrf.mxu0
    %v1869 = vadd.f32 0.0, %v1868
    %v1870 = vpop.f32.mrf.mxu0
    %v1871 = vadd.f32 0.0, %v1870
    %v1872 = vpop.f32.mrf.mxu0
    %v1873 = vadd.f32 0.0, %v1872
    %v1874 = vpop.f32.mrf.mxu0
    %v1875 = vadd.f32 0.0, %v1874
    %1876 = vdwg.mxu0
    %1877 = vmatprep.subr.bf16.mxu0 0
    %1878 = vmatpush1.bf16.msra.mxu0 0
    %1879 = vmatprep.subr.bf16.mxu0 0
    %1880 = vmatpush1.bf16.msra.mxu0 0
    %1881 = vmatprep.subr.bf16.mxu0 0
    %1882 = vmatpush1.bf16.msra.mxu0 0
    %1883 = vmatprep.subr.bf16.mxu0 0
    %1884 = vmatpush1.bf16.msra.mxu0 0
    %1885 = vmatprep.subr.bf16.mxu0 0
    %1886 = vmatpush1.bf16.msra.mxu0 0
    %1887 = vmatprep.subr.bf16.mxu0 0
    %1888 = vmatpush1.bf16.msra.mxu0 0
    %1889 = vmatprep.subr.bf16.mxu0 0
    %1890 = vmatpush1.bf16.msra.mxu0 0
    %1891 = vmatprep.subr.bf16.mxu0 %v1589
    %1892 = vmatpush1.bf16.msra.mxu0 %v1588
    %1893 = vmatprep.subr.bf16.mxu0 0
    %1894 = vmatpush2.bf16.msra.mxu0 0
    %1895 = vmatprep.subr.bf16.mxu0 0
    %1896 = vmatpush2.bf16.msra.mxu0 0
    %1897 = vmatprep.subr.bf16.mxu0 0
    %1898 = vmatpush2.bf16.msra.mxu0 0
    %1899 = vmatprep.subr.bf16.mxu0 0
    %1900 = vmatpush2.bf16.msra.mxu0 0
    %1901 = vmatprep.subr.bf16.mxu0 0
    %1902 = vmatpush2.bf16.msra.mxu0 0
    %1903 = vmatprep.subr.bf16.mxu0 0
    %1904 = vmatpush2.bf16.msra.mxu0 0
    %1905 = vmatprep.subr.bf16.mxu0 0
    %1906 = vmatpush2.bf16.msra.mxu0 0
    %1907 = vmatprep.subr.bf16.mxu0 0
    %1908 = vmatpush2.bf16.msra.mxu0 0
    %1909 = vmatprep.mubr.bf16.mxu0 0
    %1910 = vmatmul.mubr.bf16.gmra.mxu0 %v1598
    %v1911 = vpop.f32.mrf.mxu0
    %v1912 = vadd.f32 0.0, %v1911
    %v1913 = vpop.f32.mrf.mxu0
    %v1914 = vadd.f32 0.0, %v1913
    %v1915 = vpop.f32.mrf.mxu0
    %v1916 = vadd.f32 0.0, %v1915
    %v1917 = vpop.f32.mrf.mxu0
    %v1918 = vadd.f32 0.0, %v1917
    %1919 = vmatprep.mubr.bf16.mxu0 0
    %1920 = vmatmul.mubr.bf16.gmra.mxu0 %v1601
    %v1921 = vpop.f32.mrf.mxu0
    %v1922 = vadd.f32 0.0, %v1921
    %v1923 = vpop.f32.mrf.mxu0
    %v1924 = vadd.f32 0.0, %v1923
    %v1925 = vpop.f32.mrf.mxu0
    %v1926 = vadd.f32 0.0, %v1925
    %v1927 = vpop.f32.mrf.mxu0
    %v1928 = vadd.f32 0.0, %v1927
    %1929 = vmatprep.mubr.bf16.mxu0 0
    %1930 = vmatmul.mubr.bf16.gmra.mxu0 %v1604
    %v1931 = vpop.f32.mrf.mxu0
    %v1932 = vadd.f32 0.0, %v1931
    %v1933 = vpop.f32.mrf.mxu0
    %v1934 = vadd.f32 0.0, %v1933
    %v1935 = vpop.f32.mrf.mxu0
    %v1936 = vadd.f32 0.0, %v1935
    %v1937 = vpop.f32.mrf.mxu0
    %v1938 = vadd.f32 0.0, %v1937
    %1939 = vmatprep.mubr.bf16.mxu0 0
    %1940 = vmatmul.mubr.bf16.gmra.mxu0 %v1607
    %v1941 = vpop.f32.mrf.mxu0
    %v1942 = vadd.f32 0.0, %v1941
    %v1943 = vpop.f32.mrf.mxu0
    %v1944 = vadd.f32 0.0, %v1943
    %v1945 = vpop.f32.mrf.mxu0
    %v1946 = vadd.f32 0.0, %v1945
    %v1947 = vpop.f32.mrf.mxu0
    %v1948 = vadd.f32 0.0, %v1947
    %1949 = vmatprep.mubr.bf16.mxu0 0
    %1950 = vmatmul.mubr.bf16.gmra.mxu0 %v1610
    %v1951 = vpop.f32.mrf.mxu0
    %v1952 = vadd.f32 0.0, %v1951
    %v1953 = vpop.f32.mrf.mxu0
    %v1954 = vadd.f32 0.0, %v1953
    %v1955 = vpop.f32.mrf.mxu0
    %v1956 = vadd.f32 0.0, %v1955
    %v1957 = vpop.f32.mrf.mxu0
    %v1958 = vadd.f32 0.0, %v1957
    %1959 = vmatprep.mubr.bf16.mxu0 0
    %1960 = vmatmul.mubr.bf16.gmra.mxu0 %v1613
    %v1961 = vpop.f32.mrf.mxu0
    %v1962 = vadd.f32 0.0, %v1961
    %v1963 = vpop.f32.mrf.mxu0
    %v1964 = vadd.f32 0.0, %v1963
    %v1965 = vpop.f32.mrf.mxu0
    %v1966 = vadd.f32 0.0, %v1965
    %v1967 = vpop.f32.mrf.mxu0
    %v1968 = vadd.f32 0.0, %v1967
    %1969 = vmatprep.mubr.bf16.mxu0 0
    %1970 = vmatmul.mubr.bf16.gmra.mxu0 %v1616
    %v1971 = vpop.f32.mrf.mxu0
    %v1972 = vadd.f32 0.0, %v1971
    %v1973 = vpop.f32.mrf.mxu0
    %v1974 = vadd.f32 0.0, %v1973
    %v1975 = vpop.f32.mrf.mxu0
    %v1976 = vadd.f32 0.0, %v1975
    %v1977 = vpop.f32.mrf.mxu0
    %v1978 = vadd.f32 0.0, %v1977
    %1979 = vmatprep.mubr.bf16.mxu0 0
    %1980 = vmatmul.mubr.bf16.gmra.mxu0 %v1619
    %v1981 = vpop.f32.mrf.mxu0
    %v1982 = vadd.f32 0.0, %v1981
    %v1983 = vpop.f32.mrf.mxu0
    %v1984 = vadd.f32 0.0, %v1983
    %v1985 = vpop.f32.mrf.mxu0
    %v1986 = vadd.f32 0.0, %v1985
    %v1987 = vpop.f32.mrf.mxu0
    %v1988 = vadd.f32 0.0, %v1987
    %1989 = vmatprep.mubr.bf16.mxu0 0
    %1990 = vmatmul.mubr.bf16.gmra.mxu0 %v1622
    %v1991 = vpop.f32.mrf.mxu0
    %v1992 = vadd.f32 0.0, %v1991
    %v1993 = vpop.f32.mrf.mxu0
    %v1994 = vadd.f32 0.0, %v1993
    %v1995 = vpop.f32.mrf.mxu0
    %v1996 = vadd.f32 0.0, %v1995
    %v1997 = vpop.f32.mrf.mxu0
    %v1998 = vadd.f32 0.0, %v1997
    %1999 = vmatprep.mubr.bf16.mxu0 0
    %2000 = vmatmul.mubr.bf16.gmra.mxu0 %v1625
    %v2001 = vpop.f32.mrf.mxu0
    %v2002 = vadd.f32 0.0, %v2001
    %v2003 = vpop.f32.mrf.mxu0
    %v2004 = vadd.f32 0.0, %v2003
    %v2005 = vpop.f32.mrf.mxu0
    %v2006 = vadd.f32 0.0, %v2005
    %v2007 = vpop.f32.mrf.mxu0
    %v2008 = vadd.f32 0.0, %v2007
    %2009 = vmatprep.mubr.bf16.mxu0 0
    %2010 = vmatmul.mubr.bf16.gmra.mxu0 %v1628
    %v2011 = vpop.f32.mrf.mxu0
    %v2012 = vadd.f32 0.0, %v2011
    %v2013 = vpop.f32.mrf.mxu0
    %v2014 = vadd.f32 0.0, %v2013
    %v2015 = vpop.f32.mrf.mxu0
    %v2016 = vadd.f32 0.0, %v2015
    %v2017 = vpop.f32.mrf.mxu0
    %v2018 = vadd.f32 0.0, %v2017
    %2019 = vmatprep.mubr.bf16.mxu0 0
    %2020 = vmatmul.mubr.bf16.gmra.mxu0 %v1631
    %v2021 = vpop.f32.mrf.mxu0
    %v2022 = vadd.f32 0.0, %v2021
    %v2023 = vpop.f32.mrf.mxu0
    %v2024 = vadd.f32 0.0, %v2023
    %v2025 = vpop.f32.mrf.mxu0
    %v2026 = vadd.f32 0.0, %v2025
    %v2027 = vpop.f32.mrf.mxu0
    %v2028 = vadd.f32 0.0, %v2027
    %2029 = vmatprep.mubr.bf16.mxu0 0
    %2030 = vmatmul.mubr.bf16.gmra.mxu0 %v1634
    %v2031 = vpop.f32.mrf.mxu0
    %v2032 = vadd.f32 0.0, %v2031
    %v2033 = vpop.f32.mrf.mxu0
    %v2034 = vadd.f32 0.0, %v2033
    %v2035 = vpop.f32.mrf.mxu0
    %v2036 = vadd.f32 0.0, %v2035
    %v2037 = vpop.f32.mrf.mxu0
    %v2038 = vadd.f32 0.0, %v2037
    %2039 = vmatprep.mubr.bf16.mxu0 0
    %2040 = vmatmul.mubr.bf16.gmra.mxu0 %v1637
    %v2041 = vpop.f32.mrf.mxu0
    %v2042 = vadd.f32 0.0, %v2041
    %v2043 = vpop.f32.mrf.mxu0
    %v2044 = vadd.f32 0.0, %v2043
    %v2045 = vpop.f32.mrf.mxu0
    %v2046 = vadd.f32 0.0, %v2045
    %v2047 = vpop.f32.mrf.mxu0
    %v2048 = vadd.f32 0.0, %v2047
    %2049 = vmatprep.mubr.bf16.mxu0 0
    %2050 = vmatmul.mubr.bf16.gmra.mxu0 %v1640
    %v2051 = vpop.f32.mrf.mxu0
    %v2052 = vadd.f32 0.0, %v2051
    %v2053 = vpop.f32.mrf.mxu0
    %v2054 = vadd.f32 0.0, %v2053
    %v2055 = vpop.f32.mrf.mxu0
    %v2056 = vadd.f32 0.0, %v2055
    %v2057 = vpop.f32.mrf.mxu0
    %v2058 = vadd.f32 0.0, %v2057
    %2059 = vmatprep.mubr.bf16.mxu0 0
    %2060 = vmatmul.mubr.bf16.gmra.mxu0 %v1643
    %v2061 = vpop.f32.mrf.mxu0
    %v2062 = vadd.f32 0.0, %v2061
    %v2063 = vpop.f32.mrf.mxu0
    %v2064 = vadd.f32 0.0, %v2063
    %v2065 = vpop.f32.mrf.mxu0
    %v2066 = vadd.f32 0.0, %v2065
    %v2067 = vpop.f32.mrf.mxu0
    %v2068 = vadd.f32 0.0, %v2067
    %2069 = vmatprep.mubr.bf16.mxu0 0
    %2070 = vmatmul.mubr.bf16.gmra.mxu0 %v1646
    %v2071 = vpop.f32.mrf.mxu0
    %v2072 = vadd.f32 0.0, %v2071
    %v2073 = vpop.f32.mrf.mxu0
    %v2074 = vadd.f32 0.0, %v2073
    %v2075 = vpop.f32.mrf.mxu0
    %v2076 = vadd.f32 0.0, %v2075
    %v2077 = vpop.f32.mrf.mxu0
    %v2078 = vadd.f32 0.0, %v2077
    %2079 = vmatprep.mubr.bf16.mxu0 0
    %2080 = vmatmul.mubr.bf16.gmra.mxu0 %v1649
    %v2081 = vpop.f32.mrf.mxu0
    %v2082 = vadd.f32 0.0, %v2081
    %v2083 = vpop.f32.mrf.mxu0
    %v2084 = vadd.f32 0.0, %v2083
    %v2085 = vpop.f32.mrf.mxu0
    %v2086 = vadd.f32 0.0, %v2085
    %v2087 = vpop.f32.mrf.mxu0
    %v2088 = vadd.f32 0.0, %v2087
    %2089 = vmatprep.mubr.bf16.mxu0 0
    %2090 = vmatmul.mubr.bf16.gmra.mxu0 %v1652
    %v2091 = vpop.f32.mrf.mxu0
    %v2092 = vadd.f32 0.0, %v2091
    %v2093 = vpop.f32.mrf.mxu0
    %v2094 = vadd.f32 0.0, %v2093
    %v2095 = vpop.f32.mrf.mxu0
    %v2096 = vadd.f32 0.0, %v2095
    %v2097 = vpop.f32.mrf.mxu0
    %v2098 = vadd.f32 0.0, %v2097
    %2099 = vdwg.mxu0
    %2100 = vmatprep.subr.bf16.mxu0 0
    %2101 = vmatpush1.bf16.msra.mxu0 0
    %2102 = vmatprep.subr.bf16.mxu0 0
    %2103 = vmatpush1.bf16.msra.mxu0 0
    %2104 = vmatprep.subr.bf16.mxu0 0
    %2105 = vmatpush1.bf16.msra.mxu0 0
    %2106 = vmatprep.subr.bf16.mxu0 0
    %2107 = vmatpush1.bf16.msra.mxu0 0
    %2108 = vmatprep.subr.bf16.mxu0 0
    %2109 = vmatpush1.bf16.msra.mxu0 0
    %2110 = vmatprep.subr.bf16.mxu0 0
    %2111 = vmatpush1.bf16.msra.mxu0 0
    %2112 = vmatprep.subr.bf16.mxu0 0
    %2113 = vmatpush1.bf16.msra.mxu0 0
    %2114 = vmatprep.subr.bf16.mxu0 0
    %2115 = vmatpush1.bf16.msra.mxu0 %v1590
    %2116 = vmatprep.subr.bf16.mxu0 0
    %2117 = vmatpush2.bf16.msra.mxu0 0
    %2118 = vmatprep.subr.bf16.mxu0 0
    %2119 = vmatpush2.bf16.msra.mxu0 0
    %2120 = vmatprep.subr.bf16.mxu0 0
    %2121 = vmatpush2.bf16.msra.mxu0 0
    %2122 = vmatprep.subr.bf16.mxu0 0
    %2123 = vmatpush2.bf16.msra.mxu0 0
    %2124 = vmatprep.subr.bf16.mxu0 0
    %2125 = vmatpush2.bf16.msra.mxu0 0
    %2126 = vmatprep.subr.bf16.mxu0 0
    %2127 = vmatpush2.bf16.msra.mxu0 0
    %2128 = vmatprep.subr.bf16.mxu0 0
    %2129 = vmatpush2.bf16.msra.mxu0 0
    %2130 = vmatprep.subr.bf16.mxu0 0
    %2131 = vmatpush2.bf16.msra.mxu0 0
    %2132 = vmatprep.mubr.bf16.mxu0 0
    %2133 = vmatmul.mubr.bf16.gmra.mxu0 %v1598
    %v2134 = vpop.f32.mrf.mxu0
    %v2135 = vadd.f32 0.0, %v2134
    %v2136 = vpop.f32.mrf.mxu0
    %v2137 = vpop.f32.mrf.mxu0
    %v2138 = vadd.f32 0.0, %v2137
    %v2139 = vpop.f32.mrf.mxu0
    %2140 = vmatprep.mubr.bf16.mxu0 0
    %2141 = vmatmul.mubr.bf16.gmra.mxu0 %v1601
    %v2142 = vpop.f32.mrf.mxu0
    %v2143 = vadd.f32 0.0, %v2142
    %v2144 = vpop.f32.mrf.mxu0
    %v2145 = vpop.f32.mrf.mxu0
    %v2146 = vadd.f32 0.0, %v2145
    %v2147 = vpop.f32.mrf.mxu0
    %2148 = vmatprep.mubr.bf16.mxu0 0
    %2149 = vmatmul.mubr.bf16.gmra.mxu0 %v1604
    %v2150 = vpop.f32.mrf.mxu0
    %v2151 = vadd.f32 0.0, %v2150
    %v2152 = vpop.f32.mrf.mxu0
    %v2153 = vpop.f32.mrf.mxu0
    %v2154 = vadd.f32 0.0, %v2153
    %v2155 = vpop.f32.mrf.mxu0
    %2156 = vmatprep.mubr.bf16.mxu0 0
    %2157 = vmatmul.mubr.bf16.gmra.mxu0 %v1607
    %v2158 = vpop.f32.mrf.mxu0
    %v2159 = vadd.f32 0.0, %v2158
    %v2160 = vpop.f32.mrf.mxu0
    %v2161 = vpop.f32.mrf.mxu0
    %v2162 = vadd.f32 0.0, %v2161
    %v2163 = vpop.f32.mrf.mxu0
    %2164 = vmatprep.mubr.bf16.mxu0 0
    %2165 = vmatmul.mubr.bf16.gmra.mxu0 %v1610
    %v2166 = vpop.f32.mrf.mxu0
    %v2167 = vadd.f32 0.0, %v2166
    %v2168 = vpop.f32.mrf.mxu0
    %v2169 = vpop.f32.mrf.mxu0
    %v2170 = vadd.f32 0.0, %v2169
    %v2171 = vpop.f32.mrf.mxu0
    %2172 = vmatprep.mubr.bf16.mxu0 0
    %2173 = vmatmul.mubr.bf16.gmra.mxu0 %v1613
    %v2174 = vpop.f32.mrf.mxu0
    %v2175 = vadd.f32 0.0, %v2174
    %v2176 = vpop.f32.mrf.mxu0
    %v2177 = vpop.f32.mrf.mxu0
    %v2178 = vadd.f32 0.0, %v2177
    %v2179 = vpop.f32.mrf.mxu0
    %2180 = vmatprep.mubr.bf16.mxu0 0
    %2181 = vmatmul.mubr.bf16.gmra.mxu0 %v1616
    %v2182 = vpop.f32.mrf.mxu0
    %v2183 = vadd.f32 0.0, %v2182
    %v2184 = vpop.f32.mrf.mxu0
    %v2185 = vpop.f32.mrf.mxu0
    %v2186 = vadd.f32 0.0, %v2185
    %v2187 = vpop.f32.mrf.mxu0
    %2188 = vmatprep.mubr.bf16.mxu0 0
    %2189 = vmatmul.mubr.bf16.gmra.mxu0 %v1619
    %v2190 = vpop.f32.mrf.mxu0
    %v2191 = vadd.f32 0.0, %v2190
    %v2192 = vpop.f32.mrf.mxu0
    %v2193 = vpop.f32.mrf.mxu0
    %v2194 = vadd.f32 0.0, %v2193
    %v2195 = vpop.f32.mrf.mxu0
    %2196 = vmatprep.mubr.bf16.mxu0 0
    %2197 = vmatmul.mubr.bf16.gmra.mxu0 %v1622
    %v2198 = vpop.f32.mrf.mxu0
    %v2199 = vadd.f32 0.0, %v2198
    %v2200 = vpop.f32.mrf.mxu0
    %v2201 = vpop.f32.mrf.mxu0
    %v2202 = vadd.f32 0.0, %v2201
    %v2203 = vpop.f32.mrf.mxu0
    %2204 = vmatprep.mubr.bf16.mxu0 0
    %2205 = vmatmul.mubr.bf16.gmra.mxu0 %v1625
    %v2206 = vpop.f32.mrf.mxu0
    %v2207 = vadd.f32 0.0, %v2206
    %v2208 = vpop.f32.mrf.mxu0
    %v2209 = vpop.f32.mrf.mxu0
    %v2210 = vadd.f32 0.0, %v2209
    %v2211 = vpop.f32.mrf.mxu0
    %2212 = vmatprep.mubr.bf16.mxu0 0
    %2213 = vmatmul.mubr.bf16.gmra.mxu0 %v1628
    %v2214 = vpop.f32.mrf.mxu0
    %v2215 = vadd.f32 0.0, %v2214
    %v2216 = vpop.f32.mrf.mxu0
    %v2217 = vpop.f32.mrf.mxu0
    %v2218 = vadd.f32 0.0, %v2217
    %v2219 = vpop.f32.mrf.mxu0
    %2220 = vmatprep.mubr.bf16.mxu0 0
    %2221 = vmatmul.mubr.bf16.gmra.mxu0 %v1631
    %v2222 = vpop.f32.mrf.mxu0
    %v2223 = vadd.f32 0.0, %v2222
    %v2224 = vpop.f32.mrf.mxu0
    %v2225 = vpop.f32.mrf.mxu0
    %v2226 = vadd.f32 0.0, %v2225
    %v2227 = vpop.f32.mrf.mxu0
    %2228 = vmatprep.mubr.bf16.mxu0 0
    %2229 = vmatmul.mubr.bf16.gmra.mxu0 %v1634
    %v2230 = vpop.f32.mrf.mxu0
    %v2231 = vadd.f32 0.0, %v2230
    %v2232 = vpop.f32.mrf.mxu0
    %v2233 = vpop.f32.mrf.mxu0
    %v2234 = vadd.f32 0.0, %v2233
    %v2235 = vpop.f32.mrf.mxu0
    %2236 = vmatprep.mubr.bf16.mxu0 0
    %2237 = vmatmul.mubr.bf16.gmra.mxu0 %v1637
    %v2238 = vpop.f32.mrf.mxu0
    %v2239 = vadd.f32 0.0, %v2238
    %v2240 = vpop.f32.mrf.mxu0
    %v2241 = vpop.f32.mrf.mxu0
    %v2242 = vadd.f32 0.0, %v2241
    %v2243 = vpop.f32.mrf.mxu0
    %2244 = vmatprep.mubr.bf16.mxu0 0
    %2245 = vmatmul.mubr.bf16.gmra.mxu0 %v1640
    %v2246 = vpop.f32.mrf.mxu0
    %v2247 = vadd.f32 0.0, %v2246
    %v2248 = vpop.f32.mrf.mxu0
    %v2249 = vpop.f32.mrf.mxu0
    %v2250 = vadd.f32 0.0, %v2249
    %v2251 = vpop.f32.mrf.mxu0
    %2252 = vmatprep.mubr.bf16.mxu0 0
    %2253 = vmatmul.mubr.bf16.gmra.mxu0 %v1643
    %v2254 = vpop.f32.mrf.mxu0
    %v2255 = vadd.f32 0.0, %v2254
    %v2256 = vpop.f32.mrf.mxu0
    %v2257 = vpop.f32.mrf.mxu0
    %v2258 = vadd.f32 0.0, %v2257
    %v2259 = vpop.f32.mrf.mxu0
    %2260 = vmatprep.mubr.bf16.mxu0 0
    %2261 = vmatmul.mubr.bf16.gmra.mxu0 %v1646
    %v2262 = vpop.f32.mrf.mxu0
    %v2263 = vadd.f32 0.0, %v2262
    %v2264 = vpop.f32.mrf.mxu0
    %v2265 = vpop.f32.mrf.mxu0
    %v2266 = vadd.f32 0.0, %v2265
    %v2267 = vpop.f32.mrf.mxu0
    %2268 = vmatprep.mubr.bf16.mxu0 0
    %2269 = vmatmul.mubr.bf16.gmra.mxu0 %v1649
    %v2270 = vpop.f32.mrf.mxu0
    %v2271 = vadd.f32 0.0, %v2270
    %v2272 = vpop.f32.mrf.mxu0
    %v2273 = vpop.f32.mrf.mxu0
    %v2274 = vadd.f32 0.0, %v2273
    %v2275 = vpop.f32.mrf.mxu0
    %2276 = vmatprep.mubr.bf16.mxu0 0
    %2277 = vmatmul.mubr.bf16.gmra.mxu0 %v1652
    %v2278 = vpop.f32.mrf.mxu0
    %v2279 = vadd.f32 0.0, %v2278
    %v2280 = vpop.f32.mrf.mxu0
    %v2281 = vpop.f32.mrf.mxu0
    %v2282 = vadd.f32 0.0, %v2281
    %v2283 = vpop.f32.mrf.mxu0
    %2284 = vdwg.mxu0
    %2304 = vrot.lane.b32.xlu0 %v1463, 96
    %v2305 = vpop.permute.xlu0 %2304
    %2306 = vrot.lane.b32.xlu0 %v1464, 96
    %v2307 = vpop.permute.xlu0 %2306
    %2308 = vrot.lane.b32.xlu0 %v1465, 96
    %v2309 = vpop.permute.xlu0 %2308
    %2310 = vrot.lane.b32.xlu0 %v1466, 96
    %v2311 = vpop.permute.xlu0 %2310
    %2312 = vrot.lane.b32.xlu0 %v1467, 96
    %v2313 = vpop.permute.xlu0 %2312
    %2314 = vrot.lane.b32.xlu0 %v1468, 96
    %v2315 = vpop.permute.xlu0 %2314
    %2316 = vrot.lane.b32.xlu0 %v1469, 96
    %v2317 = vpop.permute.xlu0 %2316
    %2318 = vrot.lane.b32.xlu0 %v1470, 96
    %v2319 = vpop.permute.xlu0 %2318
    %2320 = vrot.lane.b32.xlu0 %v1471, 96
    %v2321 = vpop.permute.xlu0 %2320
    %2322 = vrot.lane.b32.xlu0 %v1472, 96
    %v2323 = vpop.permute.xlu0 %2322
    %2324 = vrot.lane.b32.xlu0 %v1473, 96
    %v2325 = vpop.permute.xlu0 %2324
    %2326 = vrot.lane.b32.xlu0 %v1474, 96
    %v2327 = vpop.permute.xlu0 %2326
    %2328 = vrot.lane.b32.xlu0 %v1475, 96
    %v2329 = vpop.permute.xlu0 %2328
    %2330 = vrot.lane.b32.xlu0 %v1476, 96
    %v2331 = vpop.permute.xlu0 %2330
    %2332 = vrot.lane.b32.xlu0 %v1477, 96
    %v2333 = vpop.permute.xlu0 %2332
    %2334 = vrot.lane.b32.xlu0 %v1478, 96
    %v2335 = vpop.permute.xlu0 %2334
    %2336 = vrot.lane.b32.xlu0 %v1479, 96
    %v2337 = vpop.permute.xlu0 %2336
    %2338 = vrot.lane.b32.xlu0 %v1480, 96
    %v2339 = vpop.permute.xlu0 %2338
    %2340 = vrot.lane.b32.xlu0 %v1481, 96
    %v2341 = vpop.permute.xlu0 %2340
    %v2348 = vunpack.c.l.b16 %v1482
    %v2349 = vunpack.c.h.b16 %v1482
    %v2350 = vunpack.c.l.b16 %v1483
    %v2351 = vunpack.c.h.b16 %v1483
    %v2352 = vunpack.c.l.b16 %v1484
    %v2353 = vunpack.c.l.b16 %v1485
    %v2354 = vunpack.c.h.b16 %v1485
    %v2355 = vunpack.c.l.b16 %v1486
    %v2356 = vunpack.c.h.b16 %v1486
    %v2357 = vunpack.c.l.b16 %v1487
    %v2358 = vpack.c.b16 %v2353, %v2348
    %v2359 = vpack.c.b16 %v2354, %v2349
    %v2360 = vpack.c.b16 %v2355, %v2350
    %v2361 = vpack.c.b16 %v2356, %v2351
    %v2362 = vpack.c.b16 %v2357, %v2352
    %v2369 = vsel %vm1596, %v2305, 0
    %v2372 = vsel %vm1596, %v2307, 0
    %v2375 = vsel %vm1596, %v2309, 0
    %v2378 = vsel %vm1596, %v2311, 0
    %v2381 = vsel %vm1596, %v2313, 0
    %v2384 = vsel %vm1596, %v2315, 0
    %v2387 = vsel %vm1596, %v2317, 0
    %v2390 = vsel %vm1596, %v2319, 0
    %v2393 = vsel %vm1596, %v2321, 0
    %v2396 = vsel %vm1596, %v2323, 0
    %v2399 = vsel %vm1596, %v2325, 0
    %v2402 = vsel %vm1596, %v2327, 0
    %v2405 = vsel %vm1596, %v2329, 0
    %v2408 = vsel %vm1596, %v2331, 0
    %v2411 = vsel %vm1596, %v2333, 0
    %v2414 = vsel %vm1596, %v2335, 0
    %v2417 = vsel %vm1596, %v2337, 0
    %v2420 = vsel %vm1596, %v2339, 0
    %v2423 = vsel %vm1596, %v2341, 0
    %2425 = vmatprep.subr.bf16.mxu0 0
    %2426 = vmatpush1.bf16.msra.mxu0 0
    %2427 = vmatprep.subr.bf16.mxu0 0
    %2428 = vmatpush1.bf16.msra.mxu0 0
    %2429 = vmatprep.subr.bf16.mxu0 0
    %2430 = vmatpush1.bf16.msra.mxu0 0
    %2431 = vmatprep.subr.bf16.mxu0 0
    %2432 = vmatpush1.bf16.msra.mxu0 0
    %2433 = vmatprep.subr.bf16.mxu0 0
    %2434 = vmatpush1.bf16.msra.mxu0 0
    %2435 = vmatprep.subr.bf16.mxu0 0
    %2436 = vmatpush1.bf16.msra.mxu0 0
    %2437 = vmatprep.subr.bf16.mxu0 0
    %2438 = vmatpush1.bf16.msra.mxu0 0
    %2439 = vmatprep.subr.bf16.mxu0 %v2359
    %2440 = vmatpush1.bf16.msra.mxu0 %v2358
    %2441 = vmatprep.subr.bf16.mxu0 0
    %2442 = vmatpush2.bf16.msra.mxu0 0
    %2443 = vmatprep.subr.bf16.mxu0 0
    %2444 = vmatpush2.bf16.msra.mxu0 0
    %2445 = vmatprep.subr.bf16.mxu0 0
    %2446 = vmatpush2.bf16.msra.mxu0 0
    %2447 = vmatprep.subr.bf16.mxu0 0
    %2448 = vmatpush2.bf16.msra.mxu0 0
    %2449 = vmatprep.subr.bf16.mxu0 0
    %2450 = vmatpush2.bf16.msra.mxu0 0
    %2451 = vmatprep.subr.bf16.mxu0 0
    %2452 = vmatpush2.bf16.msra.mxu0 0
    %2453 = vmatprep.subr.bf16.mxu0 0
    %2454 = vmatpush2.bf16.msra.mxu0 0
    %2455 = vmatprep.subr.bf16.mxu0 0
    %2456 = vmatpush2.bf16.msra.mxu0 0
    %2457 = vmatprep.mubr.bf16.mxu0 0
    %2458 = vmatmul.mubr.bf16.gmra.mxu0 %v2369
    %v2459 = vpop.f32.mrf.mxu0
    %v2460 = vadd.f32 %v1689, %v2459
    %v2461 = vpop.f32.mrf.mxu0
    %v2462 = vadd.f32 %v1691, %v2461
    %v2463 = vpop.f32.mrf.mxu0
    %v2464 = vadd.f32 %v1693, %v2463
    %v2465 = vpop.f32.mrf.mxu0
    %v2466 = vadd.f32 %v1695, %v2465
    %2467 = vmatprep.mubr.bf16.mxu0 0
    %2468 = vmatmul.mubr.bf16.gmra.mxu0 %v2372
    %v2469 = vpop.f32.mrf.mxu0
    %v2470 = vadd.f32 %v1699, %v2469
    %v2471 = vpop.f32.mrf.mxu0
    %v2472 = vadd.f32 %v1701, %v2471
    %v2473 = vpop.f32.mrf.mxu0
    %v2474 = vadd.f32 %v1703, %v2473
    %v2475 = vpop.f32.mrf.mxu0
    %v2476 = vadd.f32 %v1705, %v2475
    %2477 = vmatprep.mubr.bf16.mxu0 0
    %2478 = vmatmul.mubr.bf16.gmra.mxu0 %v2375
    %v2479 = vpop.f32.mrf.mxu0
    %v2480 = vadd.f32 %v1709, %v2479
    %v2481 = vpop.f32.mrf.mxu0
    %v2482 = vadd.f32 %v1711, %v2481
    %v2483 = vpop.f32.mrf.mxu0
    %v2484 = vadd.f32 %v1713, %v2483
    %v2485 = vpop.f32.mrf.mxu0
    %v2486 = vadd.f32 %v1715, %v2485
    %2487 = vmatprep.mubr.bf16.mxu0 0
    %2488 = vmatmul.mubr.bf16.gmra.mxu0 %v2378
    %v2489 = vpop.f32.mrf.mxu0
    %v2490 = vadd.f32 %v1719, %v2489
    %v2491 = vpop.f32.mrf.mxu0
    %v2492 = vadd.f32 %v1721, %v2491
    %v2493 = vpop.f32.mrf.mxu0
    %v2494 = vadd.f32 %v1723, %v2493
    %v2495 = vpop.f32.mrf.mxu0
    %v2496 = vadd.f32 %v1725, %v2495
    %2497 = vmatprep.mubr.bf16.mxu0 0
    %2498 = vmatmul.mubr.bf16.gmra.mxu0 %v2381
    %v2499 = vpop.f32.mrf.mxu0
    %v2500 = vadd.f32 %v1729, %v2499
    %v2501 = vpop.f32.mrf.mxu0
    %v2502 = vadd.f32 %v1731, %v2501
    %v2503 = vpop.f32.mrf.mxu0
    %v2504 = vadd.f32 %v1733, %v2503
    %v2505 = vpop.f32.mrf.mxu0
    %v2506 = vadd.f32 %v1735, %v2505
    %2507 = vmatprep.mubr.bf16.mxu0 0
    %2508 = vmatmul.mubr.bf16.gmra.mxu0 %v2384
    %v2509 = vpop.f32.mrf.mxu0
    %v2510 = vadd.f32 %v1739, %v2509
    %v2511 = vpop.f32.mrf.mxu0
    %v2512 = vadd.f32 %v1741, %v2511
    %v2513 = vpop.f32.mrf.mxu0
    %v2514 = vadd.f32 %v1743, %v2513
    %v2515 = vpop.f32.mrf.mxu0
    %v2516 = vadd.f32 %v1745, %v2515
    %2517 = vmatprep.mubr.bf16.mxu0 0
    %2518 = vmatmul.mubr.bf16.gmra.mxu0 %v2387
    %v2519 = vpop.f32.mrf.mxu0
    %v2520 = vadd.f32 %v1749, %v2519
    %v2521 = vpop.f32.mrf.mxu0
    %v2522 = vadd.f32 %v1751, %v2521
    %v2523 = vpop.f32.mrf.mxu0
    %v2524 = vadd.f32 %v1753, %v2523
    %v2525 = vpop.f32.mrf.mxu0
    %v2526 = vadd.f32 %v1755, %v2525
    %2527 = vmatprep.mubr.bf16.mxu0 0
    %2528 = vmatmul.mubr.bf16.gmra.mxu0 %v2390
    %v2529 = vpop.f32.mrf.mxu0
    %v2530 = vadd.f32 %v1759, %v2529
    %v2531 = vpop.f32.mrf.mxu0
    %v2532 = vadd.f32 %v1761, %v2531
    %v2533 = vpop.f32.mrf.mxu0
    %v2534 = vadd.f32 %v1763, %v2533
    %v2535 = vpop.f32.mrf.mxu0
    %v2536 = vadd.f32 %v1765, %v2535
    %2537 = vmatprep.mubr.bf16.mxu0 0
    %2538 = vmatmul.mubr.bf16.gmra.mxu0 %v2393
    %v2539 = vpop.f32.mrf.mxu0
    %v2540 = vadd.f32 %v1769, %v2539
    %v2541 = vpop.f32.mrf.mxu0
    %v2542 = vadd.f32 %v1771, %v2541
    %v2543 = vpop.f32.mrf.mxu0
    %v2544 = vadd.f32 %v1773, %v2543
    %v2545 = vpop.f32.mrf.mxu0
    %v2546 = vadd.f32 %v1775, %v2545
    %2547 = vmatprep.mubr.bf16.mxu0 0
    %2548 = vmatmul.mubr.bf16.gmra.mxu0 %v2396
    %v2549 = vpop.f32.mrf.mxu0
    %v2550 = vadd.f32 %v1779, %v2549
    %v2551 = vpop.f32.mrf.mxu0
    %v2552 = vadd.f32 %v1781, %v2551
    %v2553 = vpop.f32.mrf.mxu0
    %v2554 = vadd.f32 %v1783, %v2553
    %v2555 = vpop.f32.mrf.mxu0
    %v2556 = vadd.f32 %v1785, %v2555
    %2557 = vmatprep.mubr.bf16.mxu0 0
    %2558 = vmatmul.mubr.bf16.gmra.mxu0 %v2399
    %v2559 = vpop.f32.mrf.mxu0
    %v2560 = vadd.f32 %v1789, %v2559
    %v2561 = vpop.f32.mrf.mxu0
    %v2562 = vadd.f32 %v1791, %v2561
    %v2563 = vpop.f32.mrf.mxu0
    %v2564 = vadd.f32 %v1793, %v2563
    %v2565 = vpop.f32.mrf.mxu0
    %v2566 = vadd.f32 %v1795, %v2565
    %2567 = vmatprep.mubr.bf16.mxu0 0
    %2568 = vmatmul.mubr.bf16.gmra.mxu0 %v2402
    %v2569 = vpop.f32.mrf.mxu0
    %v2570 = vadd.f32 %v1799, %v2569
    %v2571 = vpop.f32.mrf.mxu0
    %v2572 = vadd.f32 %v1801, %v2571
    %v2573 = vpop.f32.mrf.mxu0
    %v2574 = vadd.f32 %v1803, %v2573
    %v2575 = vpop.f32.mrf.mxu0
    %v2576 = vadd.f32 %v1805, %v2575
    %2577 = vmatprep.mubr.bf16.mxu0 0
    %2578 = vmatmul.mubr.bf16.gmra.mxu0 %v2405
    %v2579 = vpop.f32.mrf.mxu0
    %v2580 = vadd.f32 %v1809, %v2579
    %v2581 = vpop.f32.mrf.mxu0
    %v2582 = vadd.f32 %v1811, %v2581
    %v2583 = vpop.f32.mrf.mxu0
    %v2584 = vadd.f32 %v1813, %v2583
    %v2585 = vpop.f32.mrf.mxu0
    %v2586 = vadd.f32 %v1815, %v2585
    %2587 = vmatprep.mubr.bf16.mxu0 0
    %2588 = vmatmul.mubr.bf16.gmra.mxu0 %v2408
    %v2589 = vpop.f32.mrf.mxu0
    %v2590 = vadd.f32 %v1819, %v2589
    %v2591 = vpop.f32.mrf.mxu0
    %v2592 = vadd.f32 %v1821, %v2591
    %v2593 = vpop.f32.mrf.mxu0
    %v2594 = vadd.f32 %v1823, %v2593
    %v2595 = vpop.f32.mrf.mxu0
    %v2596 = vadd.f32 %v1825, %v2595
    %2597 = vmatprep.mubr.bf16.mxu0 0
    %2598 = vmatmul.mubr.bf16.gmra.mxu0 %v2411
    %v2599 = vpop.f32.mrf.mxu0
    %v2600 = vadd.f32 %v1829, %v2599
    %v2601 = vpop.f32.mrf.mxu0
    %v2602 = vadd.f32 %v1831, %v2601
    %v2603 = vpop.f32.mrf.mxu0
    %v2604 = vadd.f32 %v1833, %v2603
    %v2605 = vpop.f32.mrf.mxu0
    %v2606 = vadd.f32 %v1835, %v2605
    %2607 = vmatprep.mubr.bf16.mxu0 0
    %2608 = vmatmul.mubr.bf16.gmra.mxu0 %v2414
    %v2609 = vpop.f32.mrf.mxu0
    %v2610 = vadd.f32 %v1839, %v2609
    %v2611 = vpop.f32.mrf.mxu0
    %v2612 = vadd.f32 %v1841, %v2611
    %v2613 = vpop.f32.mrf.mxu0
    %v2614 = vadd.f32 %v1843, %v2613
    %v2615 = vpop.f32.mrf.mxu0
    %v2616 = vadd.f32 %v1845, %v2615
    %2617 = vmatprep.mubr.bf16.mxu0 0
    %2618 = vmatmul.mubr.bf16.gmra.mxu0 %v2417
    %v2619 = vpop.f32.mrf.mxu0
    %v2620 = vadd.f32 %v1849, %v2619
    %v2621 = vpop.f32.mrf.mxu0
    %v2622 = vadd.f32 %v1851, %v2621
    %v2623 = vpop.f32.mrf.mxu0
    %v2624 = vadd.f32 %v1853, %v2623
    %v2625 = vpop.f32.mrf.mxu0
    %v2626 = vadd.f32 %v1855, %v2625
    %2627 = vmatprep.mubr.bf16.mxu0 0
    %2628 = vmatmul.mubr.bf16.gmra.mxu0 %v2420
    %v2629 = vpop.f32.mrf.mxu0
    %v2630 = vadd.f32 %v1859, %v2629
    %v2631 = vpop.f32.mrf.mxu0
    %v2632 = vadd.f32 %v1861, %v2631
    %v2633 = vpop.f32.mrf.mxu0
    %v2634 = vadd.f32 %v1863, %v2633
    %v2635 = vpop.f32.mrf.mxu0
    %v2636 = vadd.f32 %v1865, %v2635
    %2637 = vmatprep.mubr.bf16.mxu0 0
    %2638 = vmatmul.mubr.bf16.gmra.mxu0 %v2423
    %v2639 = vpop.f32.mrf.mxu0
    %v2640 = vadd.f32 %v1869, %v2639
    %v2641 = vpop.f32.mrf.mxu0
    %v2642 = vadd.f32 %v1871, %v2641
    %v2643 = vpop.f32.mrf.mxu0
    %v2644 = vadd.f32 %v1873, %v2643
    %v2645 = vpop.f32.mrf.mxu0
    %v2646 = vadd.f32 %v1875, %v2645
    %2647 = vdwg.mxu0
    %2648 = vmatprep.subr.bf16.mxu0 0
    %2649 = vmatpush1.bf16.msra.mxu0 0
    %2650 = vmatprep.subr.bf16.mxu0 0
    %2651 = vmatpush1.bf16.msra.mxu0 0
    %2652 = vmatprep.subr.bf16.mxu0 0
    %2653 = vmatpush1.bf16.msra.mxu0 0
    %2654 = vmatprep.subr.bf16.mxu0 0
    %2655 = vmatpush1.bf16.msra.mxu0 0
    %2656 = vmatprep.subr.bf16.mxu0 0
    %2657 = vmatpush1.bf16.msra.mxu0 0
    %2658 = vmatprep.subr.bf16.mxu0 0
    %2659 = vmatpush1.bf16.msra.mxu0 0
    %2660 = vmatprep.subr.bf16.mxu0 0
    %2661 = vmatpush1.bf16.msra.mxu0 0
    %2662 = vmatprep.subr.bf16.mxu0 %v2361
    %2663 = vmatpush1.bf16.msra.mxu0 %v2360
    %2664 = vmatprep.subr.bf16.mxu0 0
    %2665 = vmatpush2.bf16.msra.mxu0 0
    %2666 = vmatprep.subr.bf16.mxu0 0
    %2667 = vmatpush2.bf16.msra.mxu0 0
    %2668 = vmatprep.subr.bf16.mxu0 0
    %2669 = vmatpush2.bf16.msra.mxu0 0
    %2670 = vmatprep.subr.bf16.mxu0 0
    %2671 = vmatpush2.bf16.msra.mxu0 0
    %2672 = vmatprep.subr.bf16.mxu0 0
    %2673 = vmatpush2.bf16.msra.mxu0 0
    %2674 = vmatprep.subr.bf16.mxu0 0
    %2675 = vmatpush2.bf16.msra.mxu0 0
    %2676 = vmatprep.subr.bf16.mxu0 0
    %2677 = vmatpush2.bf16.msra.mxu0 0
    %2678 = vmatprep.subr.bf16.mxu0 0
    %2679 = vmatpush2.bf16.msra.mxu0 0
    %2680 = vmatprep.mubr.bf16.mxu0 0
    %2681 = vmatmul.mubr.bf16.gmra.mxu0 %v2369
    %v2682 = vpop.f32.mrf.mxu0
    %v2683 = vadd.f32 %v1912, %v2682
    %v2684 = vpop.f32.mrf.mxu0
    %v2685 = vadd.f32 %v1914, %v2684
    %v2686 = vpop.f32.mrf.mxu0
    %v2687 = vadd.f32 %v1916, %v2686
    %v2688 = vpop.f32.mrf.mxu0
    %v2689 = vadd.f32 %v1918, %v2688
    %2690 = vmatprep.mubr.bf16.mxu0 0
    %2691 = vmatmul.mubr.bf16.gmra.mxu0 %v2372
    %v2692 = vpop.f32.mrf.mxu0
    %v2693 = vadd.f32 %v1922, %v2692
    %v2694 = vpop.f32.mrf.mxu0
    %v2695 = vadd.f32 %v1924, %v2694
    %v2696 = vpop.f32.mrf.mxu0
    %v2697 = vadd.f32 %v1926, %v2696
    %v2698 = vpop.f32.mrf.mxu0
    %v2699 = vadd.f32 %v1928, %v2698
    %2700 = vmatprep.mubr.bf16.mxu0 0
    %2701 = vmatmul.mubr.bf16.gmra.mxu0 %v2375
    %v2702 = vpop.f32.mrf.mxu0
    %v2703 = vadd.f32 %v1932, %v2702
    %v2704 = vpop.f32.mrf.mxu0
    %v2705 = vadd.f32 %v1934, %v2704
    %v2706 = vpop.f32.mrf.mxu0
    %v2707 = vadd.f32 %v1936, %v2706
    %v2708 = vpop.f32.mrf.mxu0
    %v2709 = vadd.f32 %v1938, %v2708
    %2710 = vmatprep.mubr.bf16.mxu0 0
    %2711 = vmatmul.mubr.bf16.gmra.mxu0 %v2378
    %v2712 = vpop.f32.mrf.mxu0
    %v2713 = vadd.f32 %v1942, %v2712
    %v2714 = vpop.f32.mrf.mxu0
    %v2715 = vadd.f32 %v1944, %v2714
    %v2716 = vpop.f32.mrf.mxu0
    %v2717 = vadd.f32 %v1946, %v2716
    %v2718 = vpop.f32.mrf.mxu0
    %v2719 = vadd.f32 %v1948, %v2718
    %2720 = vmatprep.mubr.bf16.mxu0 0
    %2721 = vmatmul.mubr.bf16.gmra.mxu0 %v2381
    %v2722 = vpop.f32.mrf.mxu0
    %v2723 = vadd.f32 %v1952, %v2722
    %v2724 = vpop.f32.mrf.mxu0
    %v2725 = vadd.f32 %v1954, %v2724
    %v2726 = vpop.f32.mrf.mxu0
    %v2727 = vadd.f32 %v1956, %v2726
    %v2728 = vpop.f32.mrf.mxu0
    %v2729 = vadd.f32 %v1958, %v2728
    %2730 = vmatprep.mubr.bf16.mxu0 0
    %2731 = vmatmul.mubr.bf16.gmra.mxu0 %v2384
    %v2732 = vpop.f32.mrf.mxu0
    %v2733 = vadd.f32 %v1962, %v2732
    %v2734 = vpop.f32.mrf.mxu0
    %v2735 = vadd.f32 %v1964, %v2734
    %v2736 = vpop.f32.mrf.mxu0
    %v2737 = vadd.f32 %v1966, %v2736
    %v2738 = vpop.f32.mrf.mxu0
    %v2739 = vadd.f32 %v1968, %v2738
    %2740 = vmatprep.mubr.bf16.mxu0 0
    %2741 = vmatmul.mubr.bf16.gmra.mxu0 %v2387
    %v2742 = vpop.f32.mrf.mxu0
    %v2743 = vadd.f32 %v1972, %v2742
    %v2744 = vpop.f32.mrf.mxu0
    %v2745 = vadd.f32 %v1974, %v2744
    %v2746 = vpop.f32.mrf.mxu0
    %v2747 = vadd.f32 %v1976, %v2746
    %v2748 = vpop.f32.mrf.mxu0
    %v2749 = vadd.f32 %v1978, %v2748
    %2750 = vmatprep.mubr.bf16.mxu0 0
    %2751 = vmatmul.mubr.bf16.gmra.mxu0 %v2390
    %v2752 = vpop.f32.mrf.mxu0
    %v2753 = vadd.f32 %v1982, %v2752
    %v2754 = vpop.f32.mrf.mxu0
    %v2755 = vadd.f32 %v1984, %v2754
    %v2756 = vpop.f32.mrf.mxu0
    %v2757 = vadd.f32 %v1986, %v2756
    %v2758 = vpop.f32.mrf.mxu0
    %v2759 = vadd.f32 %v1988, %v2758
    %2760 = vmatprep.mubr.bf16.mxu0 0
    %2761 = vmatmul.mubr.bf16.gmra.mxu0 %v2393
    %v2762 = vpop.f32.mrf.mxu0
    %v2763 = vadd.f32 %v1992, %v2762
    %v2764 = vpop.f32.mrf.mxu0
    %v2765 = vadd.f32 %v1994, %v2764
    %v2766 = vpop.f32.mrf.mxu0
    %v2767 = vadd.f32 %v1996, %v2766
    %v2768 = vpop.f32.mrf.mxu0
    %v2769 = vadd.f32 %v1998, %v2768
    %2770 = vmatprep.mubr.bf16.mxu0 0
    %2771 = vmatmul.mubr.bf16.gmra.mxu0 %v2396
    %v2772 = vpop.f32.mrf.mxu0
    %v2773 = vadd.f32 %v2002, %v2772
    %v2774 = vpop.f32.mrf.mxu0
    %v2775 = vadd.f32 %v2004, %v2774
    %v2776 = vpop.f32.mrf.mxu0
    %v2777 = vadd.f32 %v2006, %v2776
    %v2778 = vpop.f32.mrf.mxu0
    %v2779 = vadd.f32 %v2008, %v2778
    %2780 = vmatprep.mubr.bf16.mxu0 0
    %2781 = vmatmul.mubr.bf16.gmra.mxu0 %v2399
    %v2782 = vpop.f32.mrf.mxu0
    %v2783 = vadd.f32 %v2012, %v2782
    %v2784 = vpop.f32.mrf.mxu0
    %v2785 = vadd.f32 %v2014, %v2784
    %v2786 = vpop.f32.mrf.mxu0
    %v2787 = vadd.f32 %v2016, %v2786
    %v2788 = vpop.f32.mrf.mxu0
    %v2789 = vadd.f32 %v2018, %v2788
    %2790 = vmatprep.mubr.bf16.mxu0 0
    %2791 = vmatmul.mubr.bf16.gmra.mxu0 %v2402
    %v2792 = vpop.f32.mrf.mxu0
    %v2793 = vadd.f32 %v2022, %v2792
    %v2794 = vpop.f32.mrf.mxu0
    %v2795 = vadd.f32 %v2024, %v2794
    %v2796 = vpop.f32.mrf.mxu0
    %v2797 = vadd.f32 %v2026, %v2796
    %v2798 = vpop.f32.mrf.mxu0
    %v2799 = vadd.f32 %v2028, %v2798
    %2800 = vmatprep.mubr.bf16.mxu0 0
    %2801 = vmatmul.mubr.bf16.gmra.mxu0 %v2405
    %v2802 = vpop.f32.mrf.mxu0
    %v2803 = vadd.f32 %v2032, %v2802
    %v2804 = vpop.f32.mrf.mxu0
    %v2805 = vadd.f32 %v2034, %v2804
    %v2806 = vpop.f32.mrf.mxu0
    %v2807 = vadd.f32 %v2036, %v2806
    %v2808 = vpop.f32.mrf.mxu0
    %v2809 = vadd.f32 %v2038, %v2808
    %2810 = vmatprep.mubr.bf16.mxu0 0
    %2811 = vmatmul.mubr.bf16.gmra.mxu0 %v2408
    %v2812 = vpop.f32.mrf.mxu0
    %v2813 = vadd.f32 %v2042, %v2812
    %v2814 = vpop.f32.mrf.mxu0
    %v2815 = vadd.f32 %v2044, %v2814
    %v2816 = vpop.f32.mrf.mxu0
    %v2817 = vadd.f32 %v2046, %v2816
    %v2818 = vpop.f32.mrf.mxu0
    %v2819 = vadd.f32 %v2048, %v2818
    %2820 = vmatprep.mubr.bf16.mxu0 0
    %2821 = vmatmul.mubr.bf16.gmra.mxu0 %v2411
    %v2822 = vpop.f32.mrf.mxu0
    %v2823 = vadd.f32 %v2052, %v2822
    %v2824 = vpop.f32.mrf.mxu0
    %v2825 = vadd.f32 %v2054, %v2824
    %v2826 = vpop.f32.mrf.mxu0
    %v2827 = vadd.f32 %v2056, %v2826
    %v2828 = vpop.f32.mrf.mxu0
    %v2829 = vadd.f32 %v2058, %v2828
    %2830 = vmatprep.mubr.bf16.mxu0 0
    %2831 = vmatmul.mubr.bf16.gmra.mxu0 %v2414
    %v2832 = vpop.f32.mrf.mxu0
    %v2833 = vadd.f32 %v2062, %v2832
    %v2834 = vpop.f32.mrf.mxu0
    %v2835 = vadd.f32 %v2064, %v2834
    %v2836 = vpop.f32.mrf.mxu0
    %v2837 = vadd.f32 %v2066, %v2836
    %v2838 = vpop.f32.mrf.mxu0
    %v2839 = vadd.f32 %v2068, %v2838
    %2840 = vmatprep.mubr.bf16.mxu0 0
    %2841 = vmatmul.mubr.bf16.gmra.mxu0 %v2417
    %v2842 = vpop.f32.mrf.mxu0
    %v2843 = vadd.f32 %v2072, %v2842
    %v2844 = vpop.f32.mrf.mxu0
    %v2845 = vadd.f32 %v2074, %v2844
    %v2846 = vpop.f32.mrf.mxu0
    %v2847 = vadd.f32 %v2076, %v2846
    %v2848 = vpop.f32.mrf.mxu0
    %v2849 = vadd.f32 %v2078, %v2848
    %2850 = vmatprep.mubr.bf16.mxu0 0
    %2851 = vmatmul.mubr.bf16.gmra.mxu0 %v2420
    %v2852 = vpop.f32.mrf.mxu0
    %v2853 = vadd.f32 %v2082, %v2852
    %v2854 = vpop.f32.mrf.mxu0
    %v2855 = vadd.f32 %v2084, %v2854
    %v2856 = vpop.f32.mrf.mxu0
    %v2857 = vadd.f32 %v2086, %v2856
    %v2858 = vpop.f32.mrf.mxu0
    %v2859 = vadd.f32 %v2088, %v2858
    %2860 = vmatprep.mubr.bf16.mxu0 0
    %2861 = vmatmul.mubr.bf16.gmra.mxu0 %v2423
    %v2862 = vpop.f32.mrf.mxu0
    %v2863 = vadd.f32 %v2092, %v2862
    %v2864 = vpop.f32.mrf.mxu0
    %v2865 = vadd.f32 %v2094, %v2864
    %v2866 = vpop.f32.mrf.mxu0
    %v2867 = vadd.f32 %v2096, %v2866
    %v2868 = vpop.f32.mrf.mxu0
    %v2869 = vadd.f32 %v2098, %v2868
    %2870 = vdwg.mxu0
    %2871 = vmatprep.subr.bf16.mxu0 0
    %2872 = vmatpush1.bf16.msra.mxu0 0
    %2873 = vmatprep.subr.bf16.mxu0 0
    %2874 = vmatpush1.bf16.msra.mxu0 0
    %2875 = vmatprep.subr.bf16.mxu0 0
    %2876 = vmatpush1.bf16.msra.mxu0 0
    %2877 = vmatprep.subr.bf16.mxu0 0
    %2878 = vmatpush1.bf16.msra.mxu0 0
    %2879 = vmatprep.subr.bf16.mxu0 0
    %2880 = vmatpush1.bf16.msra.mxu0 0
    %2881 = vmatprep.subr.bf16.mxu0 0
    %2882 = vmatpush1.bf16.msra.mxu0 0
    %2883 = vmatprep.subr.bf16.mxu0 0
    %2884 = vmatpush1.bf16.msra.mxu0 0
    %2885 = vmatprep.subr.bf16.mxu0 0
    %2886 = vmatpush1.bf16.msra.mxu0 %v2362
    %2887 = vmatprep.subr.bf16.mxu0 0
    %2888 = vmatpush2.bf16.msra.mxu0 0
    %2889 = vmatprep.subr.bf16.mxu0 0
    %2890 = vmatpush2.bf16.msra.mxu0 0
    %2891 = vmatprep.subr.bf16.mxu0 0
    %2892 = vmatpush2.bf16.msra.mxu0 0
    %2893 = vmatprep.subr.bf16.mxu0 0
    %2894 = vmatpush2.bf16.msra.mxu0 0
    %2895 = vmatprep.subr.bf16.mxu0 0
    %2896 = vmatpush2.bf16.msra.mxu0 0
    %2897 = vmatprep.subr.bf16.mxu0 0
    %2898 = vmatpush2.bf16.msra.mxu0 0
    %2899 = vmatprep.subr.bf16.mxu0 0
    %2900 = vmatpush2.bf16.msra.mxu0 0
    %2901 = vmatprep.subr.bf16.mxu0 0
    %2902 = vmatpush2.bf16.msra.mxu0 0
    %2903 = vmatprep.mubr.bf16.mxu0 0
    %2904 = vmatmul.mubr.bf16.gmra.mxu0 %v2369
    %v2905 = vpop.f32.mrf.mxu0
    %v2906 = vadd.f32 %v2135, %v2905
    %v2907 = vpop.f32.mrf.mxu0
    %v2908 = vpop.f32.mrf.mxu0
    %v2909 = vadd.f32 %v2138, %v2908
    %v2910 = vpop.f32.mrf.mxu0
    %2911 = vmatprep.mubr.bf16.mxu0 0
    %2912 = vmatmul.mubr.bf16.gmra.mxu0 %v2372
    %v2913 = vpop.f32.mrf.mxu0
    %v2914 = vadd.f32 %v2143, %v2913
    %v2915 = vpop.f32.mrf.mxu0
    %v2916 = vpop.f32.mrf.mxu0
    %v2917 = vadd.f32 %v2146, %v2916
    %v2918 = vpop.f32.mrf.mxu0
    %2919 = vmatprep.mubr.bf16.mxu0 0
    %2920 = vmatmul.mubr.bf16.gmra.mxu0 %v2375
    %v2921 = vpop.f32.mrf.mxu0
    %v2922 = vadd.f32 %v2151, %v2921
    %v2923 = vpop.f32.mrf.mxu0
    %v2924 = vpop.f32.mrf.mxu0
    %v2925 = vadd.f32 %v2154, %v2924
    %v2926 = vpop.f32.mrf.mxu0
    %2927 = vmatprep.mubr.bf16.mxu0 0
    %2928 = vmatmul.mubr.bf16.gmra.mxu0 %v2378
    %v2929 = vpop.f32.mrf.mxu0
    %v2930 = vadd.f32 %v2159, %v2929
    %v2931 = vpop.f32.mrf.mxu0
    %v2932 = vpop.f32.mrf.mxu0
    %v2933 = vadd.f32 %v2162, %v2932
    %v2934 = vpop.f32.mrf.mxu0
    %2935 = vmatprep.mubr.bf16.mxu0 0
    %2936 = vmatmul.mubr.bf16.gmra.mxu0 %v2381
    %v2937 = vpop.f32.mrf.mxu0
    %v2938 = vadd.f32 %v2167, %v2937
    %v2939 = vpop.f32.mrf.mxu0
    %v2940 = vpop.f32.mrf.mxu0
    %v2941 = vadd.f32 %v2170, %v2940
    %v2942 = vpop.f32.mrf.mxu0
    %2943 = vmatprep.mubr.bf16.mxu0 0
    %2944 = vmatmul.mubr.bf16.gmra.mxu0 %v2384
    %v2945 = vpop.f32.mrf.mxu0
    %v2946 = vadd.f32 %v2175, %v2945
    %v2947 = vpop.f32.mrf.mxu0
    %v2948 = vpop.f32.mrf.mxu0
    %v2949 = vadd.f32 %v2178, %v2948
    %v2950 = vpop.f32.mrf.mxu0
    %2951 = vmatprep.mubr.bf16.mxu0 0
    %2952 = vmatmul.mubr.bf16.gmra.mxu0 %v2387
    %v2953 = vpop.f32.mrf.mxu0
    %v2954 = vadd.f32 %v2183, %v2953
    %v2955 = vpop.f32.mrf.mxu0
    %v2956 = vpop.f32.mrf.mxu0
    %v2957 = vadd.f32 %v2186, %v2956
    %v2958 = vpop.f32.mrf.mxu0
    %2959 = vmatprep.mubr.bf16.mxu0 0
    %2960 = vmatmul.mubr.bf16.gmra.mxu0 %v2390
    %v2961 = vpop.f32.mrf.mxu0
    %v2962 = vadd.f32 %v2191, %v2961
    %v2963 = vpop.f32.mrf.mxu0
    %v2964 = vpop.f32.mrf.mxu0
    %v2965 = vadd.f32 %v2194, %v2964
    %v2966 = vpop.f32.mrf.mxu0
    %2967 = vmatprep.mubr.bf16.mxu0 0
    %2968 = vmatmul.mubr.bf16.gmra.mxu0 %v2393
    %v2969 = vpop.f32.mrf.mxu0
    %v2970 = vadd.f32 %v2199, %v2969
    %v2971 = vpop.f32.mrf.mxu0
    %v2972 = vpop.f32.mrf.mxu0
    %v2973 = vadd.f32 %v2202, %v2972
    %v2974 = vpop.f32.mrf.mxu0
    %2975 = vmatprep.mubr.bf16.mxu0 0
    %2976 = vmatmul.mubr.bf16.gmra.mxu0 %v2396
    %v2977 = vpop.f32.mrf.mxu0
    %v2978 = vadd.f32 %v2207, %v2977
    %v2979 = vpop.f32.mrf.mxu0
    %v2980 = vpop.f32.mrf.mxu0
    %v2981 = vadd.f32 %v2210, %v2980
    %v2982 = vpop.f32.mrf.mxu0
    %2983 = vmatprep.mubr.bf16.mxu0 0
    %2984 = vmatmul.mubr.bf16.gmra.mxu0 %v2399
    %v2985 = vpop.f32.mrf.mxu0
    %v2986 = vadd.f32 %v2215, %v2985
    %v2987 = vpop.f32.mrf.mxu0
    %v2988 = vpop.f32.mrf.mxu0
    %v2989 = vadd.f32 %v2218, %v2988
    %v2990 = vpop.f32.mrf.mxu0
    %2991 = vmatprep.mubr.bf16.mxu0 0
    %2992 = vmatmul.mubr.bf16.gmra.mxu0 %v2402
    %v2993 = vpop.f32.mrf.mxu0
    %v2994 = vadd.f32 %v2223, %v2993
    %v2995 = vpop.f32.mrf.mxu0
    %v2996 = vpop.f32.mrf.mxu0
    %v2997 = vadd.f32 %v2226, %v2996
    %v2998 = vpop.f32.mrf.mxu0
    %2999 = vmatprep.mubr.bf16.mxu0 0
    %3000 = vmatmul.mubr.bf16.gmra.mxu0 %v2405
    %v3001 = vpop.f32.mrf.mxu0
    %v3002 = vadd.f32 %v2231, %v3001
    %v3003 = vpop.f32.mrf.mxu0
    %v3004 = vpop.f32.mrf.mxu0
    %v3005 = vadd.f32 %v2234, %v3004
    %v3006 = vpop.f32.mrf.mxu0
    %3007 = vmatprep.mubr.bf16.mxu0 0
    %3008 = vmatmul.mubr.bf16.gmra.mxu0 %v2408
    %v3009 = vpop.f32.mrf.mxu0
    %v3010 = vadd.f32 %v2239, %v3009
    %v3011 = vpop.f32.mrf.mxu0
    %v3012 = vpop.f32.mrf.mxu0
    %v3013 = vadd.f32 %v2242, %v3012
    %v3014 = vpop.f32.mrf.mxu0
    %3015 = vmatprep.mubr.bf16.mxu0 0
    %3016 = vmatmul.mubr.bf16.gmra.mxu0 %v2411
    %v3017 = vpop.f32.mrf.mxu0
    %v3018 = vadd.f32 %v2247, %v3017
    %v3019 = vpop.f32.mrf.mxu0
    %v3020 = vpop.f32.mrf.mxu0
    %v3021 = vadd.f32 %v2250, %v3020
    %v3022 = vpop.f32.mrf.mxu0
    %3023 = vmatprep.mubr.bf16.mxu0 0
    %3024 = vmatmul.mubr.bf16.gmra.mxu0 %v2414
    %v3025 = vpop.f32.mrf.mxu0
    %v3026 = vadd.f32 %v2255, %v3025
    %v3027 = vpop.f32.mrf.mxu0
    %v3028 = vpop.f32.mrf.mxu0
    %v3029 = vadd.f32 %v2258, %v3028
    %v3030 = vpop.f32.mrf.mxu0
    %3031 = vmatprep.mubr.bf16.mxu0 0
    %3032 = vmatmul.mubr.bf16.gmra.mxu0 %v2417
    %v3033 = vpop.f32.mrf.mxu0
    %v3034 = vadd.f32 %v2263, %v3033
    %v3035 = vpop.f32.mrf.mxu0
    %v3036 = vpop.f32.mrf.mxu0
    %v3037 = vadd.f32 %v2266, %v3036
    %v3038 = vpop.f32.mrf.mxu0
    %3039 = vmatprep.mubr.bf16.mxu0 0
    %3040 = vmatmul.mubr.bf16.gmra.mxu0 %v2420
    %v3041 = vpop.f32.mrf.mxu0
    %v3042 = vadd.f32 %v2271, %v3041
    %v3043 = vpop.f32.mrf.mxu0
    %v3044 = vpop.f32.mrf.mxu0
    %v3045 = vadd.f32 %v2274, %v3044
    %v3046 = vpop.f32.mrf.mxu0
    %3047 = vmatprep.mubr.bf16.mxu0 0
    %3048 = vmatmul.mubr.bf16.gmra.mxu0 %v2423
    %v3049 = vpop.f32.mrf.mxu0
    %v3050 = vadd.f32 %v2279, %v3049
    %v3051 = vpop.f32.mrf.mxu0
    %v3052 = vpop.f32.mrf.mxu0
    %v3053 = vadd.f32 %v2282, %v3052
    %v3054 = vpop.f32.mrf.mxu0
    %3055 = vdwg.mxu0
    %v3056 = vld [vmem:[%s1] sm:$0xff]
    %v3057 = vld [vmem:[%s1 + $0x8] sm:$0xff]
    %v3058 = vld [vmem:[%s1 + $0x10] sm:$0xff]
    %v3059 = vld [vmem:[%s1 + $0x18] sm:$0xff]
    %v3060 = vld [vmem:[%s1 + $0x20] sm:$0xff]
    %v3061 = vld [vmem:[%s1 + $0x28] sm:$0xff]
    %v3062 = vld [vmem:[%s1 + $0x30] sm:$0xff]
    %v3063 = vld [vmem:[%s1 + $0x38] sm:$0xff]
    %v3064 = vld [vmem:[%s1 + $0x40] sm:$0xff]
    %v3065 = vld [vmem:[%s1 + $0x48] sm:$0xff]
    %v3066 = vld [vmem:[%s1 + $0x50] sm:$0xff]
    %v3067 = vld [vmem:[%s1 + $0x58] sm:$0xff]
    %v3068 = vld [vmem:[%s1 + $0x60] sm:$0xff]
    %v3069 = vld [vmem:[%s1 + $0x68] sm:$0xff]
    %v3070 = vld [vmem:[%s1 + $0x70] sm:$0xff]
    %v3071 = vld [vmem:[%s1 + $0x78] sm:$0xff]
    %v3072 = vld [vmem:[%s1 + $0x80] sm:$0xff]
    %v3073 = vld [vmem:[%s1 + $0x88] sm:$0xff]
    %v3074 = vld [vmem:[%s1 + $0x90] sm:$0xff]
    %v3075 = vld [vmem:[%s1 + $0x98] sm:$0xff]
    %v3076 = vld [vmem:[%s1 + $0xa0] sm:$0xff]
    %v3077 = vld [vmem:[%s1 + $0xa8] sm:$0xff]
    %v3078 = vld [vmem:[%s1 + $0xb0] sm:$0xff]
    %v3079 = vld [vmem:[%s1 + $0xb8] sm:$0xff]
    %v3080 = vld [vmem:[%s1 + $0xc0] sm:$0xff]
    %v3081 = vld [vmem:[%s1 + $0xc8] sm:$0xff]
    %v3082 = vld [vmem:[%s1 + $0xd0] sm:$0xff]
    %v3083 = vld [vmem:[%s1 + $0xd8] sm:$0xff]
    %v3084 = vld [vmem:[%s1 + $0xe0] sm:$0xff]
    %v3085 = vld [vmem:[%s1 + $0xe8] sm:$0xff]
    %v3086 = vld [vmem:[%s1 + $0xf0] sm:$0xff]
    %v3087 = vld [vmem:[%s1 + $0xf8] sm:$0xff]
    %v3088 = vld [vmem:[%s1 + $0x100] sm:$0xff]
    %v3089 = vld [vmem:[%s1 + $0x108] sm:$0xff]
    %v3090 = vld [vmem:[%s1 + $0x110] sm:$0xff]
    %v3091 = vld [vmem:[%s1 + $0x118] sm:$0xff]
    %v3092 = vld [vmem:[%s1 + $0x120] sm:$0xff]
    %v3093 = vld [vmem:[%s1 + $0x128] sm:$0xff]
    %3095 = vset.pattern.permute.xlu0 0
    %3096 = vperm.xlu0 %3095, %v3056
    %v3097 = vpop.permute.xlu0 %3096
    %3100 = vset.pattern.permute.xlu0 0
    %3101 = vperm.xlu0 %3100, %v3057
    %v3102 = vpop.permute.xlu0 %3101
    %3105 = vset.pattern.permute.xlu0 0
    %3106 = vperm.xlu0 %3105, %v3058
    %v3107 = vpop.permute.xlu0 %3106
    %3110 = vset.pattern.permute.xlu0 0
    %3111 = vperm.xlu0 %3110, %v3059
    %v3112 = vpop.permute.xlu0 %3111
    %3115 = vset.pattern.permute.xlu0 0
    %3116 = vperm.xlu0 %3115, %v3060
    %v3117 = vpop.permute.xlu0 %3116
    %3120 = vset.pattern.permute.xlu0 0
    %3121 = vperm.xlu0 %3120, %v3061
    %v3122 = vpop.permute.xlu0 %3121
    %3125 = vset.pattern.permute.xlu0 0
    %3126 = vperm.xlu0 %3125, %v3062
    %v3127 = vpop.permute.xlu0 %3126
    %3130 = vset.pattern.permute.xlu0 0
    %3131 = vperm.xlu0 %3130, %v3063
    %v3132 = vpop.permute.xlu0 %3131
    %3135 = vset.pattern.permute.xlu0 0
    %3136 = vperm.xlu0 %3135, %v3064
    %v3137 = vpop.permute.xlu0 %3136
    %3140 = vset.pattern.permute.xlu0 0
    %3141 = vperm.xlu0 %3140, %v3065
    %v3142 = vpop.permute.xlu0 %3141
    %3145 = vset.pattern.permute.xlu0 0
    %3146 = vperm.xlu0 %3145, %v3066
    %v3147 = vpop.permute.xlu0 %3146
    %3150 = vset.pattern.permute.xlu0 0
    %3151 = vperm.xlu0 %3150, %v3067
    %v3152 = vpop.permute.xlu0 %3151
    %3155 = vset.pattern.permute.xlu0 0
    %3156 = vperm.xlu0 %3155, %v3068
    %v3157 = vpop.permute.xlu0 %3156
    %3160 = vset.pattern.permute.xlu0 0
    %3161 = vperm.xlu0 %3160, %v3069
    %v3162 = vpop.permute.xlu0 %3161
    %3165 = vset.pattern.permute.xlu0 0
    %3166 = vperm.xlu0 %3165, %v3070
    %v3167 = vpop.permute.xlu0 %3166
    %3170 = vset.pattern.permute.xlu0 0
    %3171 = vperm.xlu0 %3170, %v3071
    %v3172 = vpop.permute.xlu0 %3171
    %3175 = vset.pattern.permute.xlu0 0
    %3176 = vperm.xlu0 %3175, %v3072
    %v3177 = vpop.permute.xlu0 %3176
    %3180 = vset.pattern.permute.xlu0 0
    %3181 = vperm.xlu0 %3180, %v3073
    %v3182 = vpop.permute.xlu0 %3181
    %3185 = vset.pattern.permute.xlu0 0
    %3186 = vperm.xlu0 %3185, %v3074
    %v3187 = vpop.permute.xlu0 %3186
    %3190 = vset.pattern.permute.xlu0 0
    %3191 = vperm.xlu0 %3190, %v3075
    %v3192 = vpop.permute.xlu0 %3191
    %3195 = vset.pattern.permute.xlu0 0
    %3196 = vperm.xlu0 %3195, %v3076
    %v3197 = vpop.permute.xlu0 %3196
    %3200 = vset.pattern.permute.xlu0 0
    %3201 = vperm.xlu0 %3200, %v3077
    %v3202 = vpop.permute.xlu0 %3201
    %3205 = vset.pattern.permute.xlu0 0
    %3206 = vperm.xlu0 %3205, %v3078
    %v3207 = vpop.permute.xlu0 %3206
    %3210 = vset.pattern.permute.xlu0 0
    %3211 = vperm.xlu0 %3210, %v3079
    %v3212 = vpop.permute.xlu0 %3211
    %3215 = vset.pattern.permute.xlu0 0
    %3216 = vperm.xlu0 %3215, %v3080
    %v3217 = vpop.permute.xlu0 %3216
    %3220 = vset.pattern.permute.xlu0 0
    %3221 = vperm.xlu0 %3220, %v3081
    %v3222 = vpop.permute.xlu0 %3221
    %3225 = vset.pattern.permute.xlu0 0
    %3226 = vperm.xlu0 %3225, %v3082
    %v3227 = vpop.permute.xlu0 %3226
    %3230 = vset.pattern.permute.xlu0 0
    %3231 = vperm.xlu0 %3230, %v3083
    %v3232 = vpop.permute.xlu0 %3231
    %3235 = vset.pattern.permute.xlu0 0
    %3236 = vperm.xlu0 %3235, %v3084
    %v3237 = vpop.permute.xlu0 %3236
    %3240 = vset.pattern.permute.xlu0 0
    %3241 = vperm.xlu0 %3240, %v3085
    %v3242 = vpop.permute.xlu0 %3241
    %3245 = vset.pattern.permute.xlu0 0
    %3246 = vperm.xlu0 %3245, %v3086
    %v3247 = vpop.permute.xlu0 %3246
    %3250 = vset.pattern.permute.xlu0 0
    %3251 = vperm.xlu0 %3250, %v3087
    %v3252 = vpop.permute.xlu0 %3251
    %3255 = vset.pattern.permute.xlu0 0
    %3256 = vperm.xlu0 %3255, %v3088
    %v3257 = vpop.permute.xlu0 %3256
    %3260 = vset.pattern.permute.xlu0 0
    %3261 = vperm.xlu0 %3260, %v3089
    %v3262 = vpop.permute.xlu0 %3261
    %3265 = vset.pattern.permute.xlu0 0
    %3266 = vperm.xlu0 %3265, %v3090
    %v3267 = vpop.permute.xlu0 %3266
    %3270 = vset.pattern.permute.xlu0 0
    %3271 = vperm.xlu0 %3270, %v3091
    %v3272 = vpop.permute.xlu0 %3271
    %3275 = vset.pattern.permute.xlu0 0
    %3276 = vperm.xlu0 %3275, %v3092
    %v3277 = vpop.permute.xlu0 %3276
    %3280 = vset.pattern.permute.xlu0 0
    %3281 = vperm.xlu0 %3280, %v3093
    %v3282 = vpop.permute.xlu0 %3281
    %v3284 = vadd.f32 %v2460, %v3097
    %v3285 = vadd.f32 %v2462, %v3097
    %v3286 = vadd.f32 %v2683, %v3097
    %v3287 = vadd.f32 %v2685, %v3097
    %v3288 = vadd.f32 %v2906, %v3097
    %v3289 = vadd.f32 %v2464, %v3102
    %v3290 = vadd.f32 %v2466, %v3102
    %v3291 = vadd.f32 %v2687, %v3102
    %v3292 = vadd.f32 %v2689, %v3102
    %v3293 = vadd.f32 %v2909, %v3102
    %v3294 = vadd.f32 %v2470, %v3107
    %v3295 = vadd.f32 %v2472, %v3107
    %v3296 = vadd.f32 %v2693, %v3107
    %v3297 = vadd.f32 %v2695, %v3107
    %v3298 = vadd.f32 %v2914, %v3107
    %v3299 = vadd.f32 %v2474, %v3112
    %v3300 = vadd.f32 %v2476, %v3112
    %v3301 = vadd.f32 %v2697, %v3112
    %v3302 = vadd.f32 %v2699, %v3112
    %v3303 = vadd.f32 %v2917, %v3112
    %v3304 = vadd.f32 %v2480, %v3117
    %v3305 = vadd.f32 %v2482, %v3117
    %v3306 = vadd.f32 %v2703, %v3117
    %v3307 = vadd.f32 %v2705, %v3117
    %v3308 = vadd.f32 %v2922, %v3117
    %v3309 = vadd.f32 %v2484, %v3122
    %v3310 = vadd.f32 %v2486, %v3122
    %v3311 = vadd.f32 %v2707, %v3122
    %v3312 = vadd.f32 %v2709, %v3122
    %v3313 = vadd.f32 %v2925, %v3122
    %v3314 = vadd.f32 %v2490, %v3127
    %v3315 = vadd.f32 %v2492, %v3127
    %v3316 = vadd.f32 %v2713, %v3127
    %v3317 = vadd.f32 %v2715, %v3127
    %v3318 = vadd.f32 %v2930, %v3127
    %v3319 = vadd.f32 %v2494, %v3132
    %v3320 = vadd.f32 %v2496, %v3132
    %v3321 = vadd.f32 %v2717, %v3132
    %v3322 = vadd.f32 %v2719, %v3132
    %v3323 = vadd.f32 %v2933, %v3132
    %v3324 = vadd.f32 %v2500, %v3137
    %v3325 = vadd.f32 %v2502, %v3137
    %v3326 = vadd.f32 %v2723, %v3137
    %v3327 = vadd.f32 %v2725, %v3137
    %v3328 = vadd.f32 %v2938, %v3137
    %v3329 = vadd.f32 %v2504, %v3142
    %v3330 = vadd.f32 %v2506, %v3142
    %v3331 = vadd.f32 %v2727, %v3142
    %v3332 = vadd.f32 %v2729, %v3142
    %v3333 = vadd.f32 %v2941, %v3142
    %v3334 = vadd.f32 %v2510, %v3147
    %v3335 = vadd.f32 %v2512, %v3147
    %v3336 = vadd.f32 %v2733, %v3147
    %v3337 = vadd.f32 %v2735, %v3147
    %v3338 = vadd.f32 %v2946, %v3147
    %v3339 = vadd.f32 %v2514, %v3152
    %v3340 = vadd.f32 %v2516, %v3152
    %v3341 = vadd.f32 %v2737, %v3152
    %v3342 = vadd.f32 %v2739, %v3152
    %v3343 = vadd.f32 %v2949, %v3152
    %v3344 = vadd.f32 %v2520, %v3157
    %v3345 = vadd.f32 %v2522, %v3157
    %v3346 = vadd.f32 %v2743, %v3157
    %v3347 = vadd.f32 %v2745, %v3157
    %v3348 = vadd.f32 %v2954, %v3157
    %v3349 = vadd.f32 %v2524, %v3162
    %v3350 = vadd.f32 %v2526, %v3162
    %v3351 = vadd.f32 %v2747, %v3162
    %v3352 = vadd.f32 %v2749, %v3162
    %v3353 = vadd.f32 %v2957, %v3162
    %v3354 = vadd.f32 %v2530, %v3167
    %v3355 = vadd.f32 %v2532, %v3167
    %v3356 = vadd.f32 %v2753, %v3167
    %v3357 = vadd.f32 %v2755, %v3167
    %v3358 = vadd.f32 %v2962, %v3167
    %v3359 = vadd.f32 %v2534, %v3172
    %v3360 = vadd.f32 %v2536, %v3172
    %v3361 = vadd.f32 %v2757, %v3172
    %v3362 = vadd.f32 %v2759, %v3172
    %v3363 = vadd.f32 %v2965, %v3172
    %v3364 = vadd.f32 %v2540, %v3177
    %v3365 = vadd.f32 %v2542, %v3177
    %v3366 = vadd.f32 %v2763, %v3177
    %v3367 = vadd.f32 %v2765, %v3177
    %v3368 = vadd.f32 %v2970, %v3177
    %v3369 = vadd.f32 %v2544, %v3182
    %v3370 = vadd.f32 %v2546, %v3182
    %v3371 = vadd.f32 %v2767, %v3182
    %v3372 = vadd.f32 %v2769, %v3182
    %v3373 = vadd.f32 %v2973, %v3182
    %v3374 = vadd.f32 %v2550, %v3187
    %v3375 = vadd.f32 %v2552, %v3187
    %v3376 = vadd.f32 %v2773, %v3187
    %v3377 = vadd.f32 %v2775, %v3187
    %v3378 = vadd.f32 %v2978, %v3187
    %v3379 = vadd.f32 %v2554, %v3192
    %v3380 = vadd.f32 %v2556, %v3192
    %v3381 = vadd.f32 %v2777, %v3192
    %v3382 = vadd.f32 %v2779, %v3192
    %v3383 = vadd.f32 %v2981, %v3192
    %v3384 = vadd.f32 %v2560, %v3197
    %v3385 = vadd.f32 %v2562, %v3197
    %v3386 = vadd.f32 %v2783, %v3197
    %v3387 = vadd.f32 %v2785, %v3197
    %v3388 = vadd.f32 %v2986, %v3197
    %v3389 = vadd.f32 %v2564, %v3202
    %v3390 = vadd.f32 %v2566, %v3202
    %v3391 = vadd.f32 %v2787, %v3202
    %v3392 = vadd.f32 %v2789, %v3202
    %v3393 = vadd.f32 %v2989, %v3202
    %v3394 = vadd.f32 %v2570, %v3207
    %v3395 = vadd.f32 %v2572, %v3207
    %v3396 = vadd.f32 %v2793, %v3207
    %v3397 = vadd.f32 %v2795, %v3207
    %v3398 = vadd.f32 %v2994, %v3207
    %v3399 = vadd.f32 %v2574, %v3212
    %v3400 = vadd.f32 %v2576, %v3212
    %v3401 = vadd.f32 %v2797, %v3212
    %v3402 = vadd.f32 %v2799, %v3212
    %v3403 = vadd.f32 %v2997, %v3212
    %v3404 = vadd.f32 %v2580, %v3217
    %v3405 = vadd.f32 %v2582, %v3217
    %v3406 = vadd.f32 %v2803, %v3217
    %v3407 = vadd.f32 %v2805, %v3217
    %v3408 = vadd.f32 %v3002, %v3217
    %v3409 = vadd.f32 %v2584, %v3222
    %v3410 = vadd.f32 %v2586, %v3222
    %v3411 = vadd.f32 %v2807, %v3222
    %v3412 = vadd.f32 %v2809, %v3222
    %v3413 = vadd.f32 %v3005, %v3222
    %v3414 = vadd.f32 %v2590, %v3227
    %v3415 = vadd.f32 %v2592, %v3227
    %v3416 = vadd.f32 %v2813, %v3227
    %v3417 = vadd.f32 %v2815, %v3227
    %v3418 = vadd.f32 %v3010, %v3227
    %v3419 = vadd.f32 %v2594, %v3232
    %v3420 = vadd.f32 %v2596, %v3232
    %v3421 = vadd.f32 %v2817, %v3232
    %v3422 = vadd.f32 %v2819, %v3232
    %v3423 = vadd.f32 %v3013, %v3232
    %v3424 = vadd.f32 %v2600, %v3237
    %v3425 = vadd.f32 %v2602, %v3237
    %v3426 = vadd.f32 %v2823, %v3237
    %v3427 = vadd.f32 %v2825, %v3237
    %v3428 = vadd.f32 %v3018, %v3237
    %v3429 = vadd.f32 %v2604, %v3242
    %v3430 = vadd.f32 %v2606, %v3242
    %v3431 = vadd.f32 %v2827, %v3242
    %v3432 = vadd.f32 %v2829, %v3242
    %v3433 = vadd.f32 %v3021, %v3242
    %v3434 = vadd.f32 %v2610, %v3247
    %v3435 = vadd.f32 %v2612, %v3247
    %v3436 = vadd.f32 %v2833, %v3247
    %v3437 = vadd.f32 %v2835, %v3247
    %v3438 = vadd.f32 %v3026, %v3247
    %v3439 = vadd.f32 %v2614, %v3252
    %v3440 = vadd.f32 %v2616, %v3252
    %v3441 = vadd.f32 %v2837, %v3252
    %v3442 = vadd.f32 %v2839, %v3252
    %v3443 = vadd.f32 %v3029, %v3252
    %v3444 = vadd.f32 %v2620, %v3257
    %v3445 = vadd.f32 %v2622, %v3257
    %v3446 = vadd.f32 %v2843, %v3257
    %v3447 = vadd.f32 %v2845, %v3257
    %v3448 = vadd.f32 %v3034, %v3257
    %v3449 = vadd.f32 %v2624, %v3262
    %v3450 = vadd.f32 %v2626, %v3262
    %v3451 = vadd.f32 %v2847, %v3262
    %v3452 = vadd.f32 %v2849, %v3262
    %v3453 = vadd.f32 %v3037, %v3262
    %v3454 = vadd.f32 %v2630, %v3267
    %v3455 = vadd.f32 %v2632, %v3267
    %v3456 = vadd.f32 %v2853, %v3267
    %v3457 = vadd.f32 %v2855, %v3267
    %v3458 = vadd.f32 %v3042, %v3267
    %v3459 = vadd.f32 %v2634, %v3272
    %v3460 = vadd.f32 %v2636, %v3272
    %v3461 = vadd.f32 %v2857, %v3272
    %v3462 = vadd.f32 %v2859, %v3272
    %v3463 = vadd.f32 %v3045, %v3272
    %v3464 = vadd.f32 %v2640, %v3277
    %v3465 = vadd.f32 %v2642, %v3277
    %v3466 = vadd.f32 %v2863, %v3277
    %v3467 = vadd.f32 %v2865, %v3277
    %v3468 = vadd.f32 %v3050, %v3277
    %v3469 = vadd.f32 %v2644, %v3282
    %v3470 = vadd.f32 %v2646, %v3282
    %v3471 = vadd.f32 %v2867, %v3282
    %v3472 = vadd.f32 %v2869, %v3282
    %v3473 = vadd.f32 %v3053, %v3282
    %v3474 = vld [vmem:[%s3] sm:$0x1f]
    %v3476 = vlaneseq
    %v3477 = vshrl.u32 %v3476, 7
    %v3478 = vsub.s32 0, %v3477
    %v3479 = vrot.slane %v3474, %v3478
    %v3480 = vlaneseq
    %v3481 = vshrl.u32 %v3480, 7
    %v3482 = vsub.s32 1, %v3481
    %v3483 = vrot.slane %v3474, %v3482
    %v3484 = vlaneseq
    %v3485 = vshrl.u32 %v3484, 7
    %v3486 = vsub.s32 2, %v3485
    %v3487 = vrot.slane %v3474, %v3486
    %v3488 = vlaneseq
    %v3489 = vshrl.u32 %v3488, 7
    %v3490 = vsub.s32 3, %v3489
    %v3491 = vrot.slane %v3474, %v3490
    %v3492 = vlaneseq
    %v3493 = vshrl.u32 %v3492, 7
    %v3494 = vsub.s32 4, %v3493
    %v3495 = vrot.slane %v3474, %v3494
    %v3501 = vadd.f32 %v3284, %v3479
    %v3502 = vadd.f32 %v3285, %v3483
    %v3503 = vadd.f32 %v3286, %v3487
    %v3504 = vadd.f32 %v3287, %v3491
    %v3505 = vadd.f32 %v3288, %v3495
    %v3506 = vadd.f32 %v3289, %v3479
    %v3507 = vadd.f32 %v3290, %v3483
    %v3508 = vadd.f32 %v3291, %v3487
    %v3509 = vadd.f32 %v3292, %v3491
    %v3510 = vadd.f32 %v3293, %v3495
    %v3511 = vadd.f32 %v3294, %v3479
    %v3512 = vadd.f32 %v3295, %v3483
    %v3513 = vadd.f32 %v3296, %v3487
    %v3514 = vadd.f32 %v3297, %v3491
    %v3515 = vadd.f32 %v3298, %v3495
    %v3516 = vadd.f32 %v3299, %v3479
    %v3517 = vadd.f32 %v3300, %v3483
    %v3518 = vadd.f32 %v3301, %v3487
    %v3519 = vadd.f32 %v3302, %v3491
    %v3520 = vadd.f32 %v3303, %v3495
    %v3521 = vadd.f32 %v3304, %v3479
    %v3522 = vadd.f32 %v3305, %v3483
    %v3523 = vadd.f32 %v3306, %v3487
    %v3524 = vadd.f32 %v3307, %v3491
    %v3525 = vadd.f32 %v3308, %v3495
    %v3526 = vadd.f32 %v3309, %v3479
    %v3527 = vadd.f32 %v3310, %v3483
    %v3528 = vadd.f32 %v3311, %v3487
    %v3529 = vadd.f32 %v3312, %v3491
    %v3530 = vadd.f32 %v3313, %v3495
    %v3531 = vadd.f32 %v3314, %v3479
    %v3532 = vadd.f32 %v3315, %v3483
    %v3533 = vadd.f32 %v3316, %v3487
    %v3534 = vadd.f32 %v3317, %v3491
    %v3535 = vadd.f32 %v3318, %v3495
    %v3536 = vadd.f32 %v3319, %v3479
    %v3537 = vadd.f32 %v3320, %v3483
    %v3538 = vadd.f32 %v3321, %v3487
    %v3539 = vadd.f32 %v3322, %v3491
    %v3540 = vadd.f32 %v3323, %v3495
    %v3541 = vadd.f32 %v3324, %v3479
    %v3542 = vadd.f32 %v3325, %v3483
    %v3543 = vadd.f32 %v3326, %v3487
    %v3544 = vadd.f32 %v3327, %v3491
    %v3545 = vadd.f32 %v3328, %v3495
    %v3546 = vadd.f32 %v3329, %v3479
    %v3547 = vadd.f32 %v3330, %v3483
    %v3548 = vadd.f32 %v3331, %v3487
    %v3549 = vadd.f32 %v3332, %v3491
    %v3550 = vadd.f32 %v3333, %v3495
    %v3551 = vadd.f32 %v3334, %v3479
    %v3552 = vadd.f32 %v3335, %v3483
    %v3553 = vadd.f32 %v3336, %v3487
    %v3554 = vadd.f32 %v3337, %v3491
    %v3555 = vadd.f32 %v3338, %v3495
    %v3556 = vadd.f32 %v3339, %v3479
    %v3557 = vadd.f32 %v3340, %v3483
    %v3558 = vadd.f32 %v3341, %v3487
    %v3559 = vadd.f32 %v3342, %v3491
    %v3560 = vadd.f32 %v3343, %v3495
    %v3561 = vadd.f32 %v3344, %v3479
    %v3562 = vadd.f32 %v3345, %v3483
    %v3563 = vadd.f32 %v3346, %v3487
    %v3564 = vadd.f32 %v3347, %v3491
    %v3565 = vadd.f32 %v3348, %v3495
    %v3566 = vadd.f32 %v3349, %v3479
    %v3567 = vadd.f32 %v3350, %v3483
    %v3568 = vadd.f32 %v3351, %v3487
    %v3569 = vadd.f32 %v3352, %v3491
    %v3570 = vadd.f32 %v3353, %v3495
    %v3571 = vadd.f32 %v3354, %v3479
    %v3572 = vadd.f32 %v3355, %v3483
    %v3573 = vadd.f32 %v3356, %v3487
    %v3574 = vadd.f32 %v3357, %v3491
    %v3575 = vadd.f32 %v3358, %v3495
    %v3576 = vadd.f32 %v3359, %v3479
    %v3577 = vadd.f32 %v3360, %v3483
    %v3578 = vadd.f32 %v3361, %v3487
    %v3579 = vadd.f32 %v3362, %v3491
    %v3580 = vadd.f32 %v3363, %v3495
    %v3581 = vadd.f32 %v3364, %v3479
    %v3582 = vadd.f32 %v3365, %v3483
    %v3583 = vadd.f32 %v3366, %v3487
    %v3584 = vadd.f32 %v3367, %v3491
    %v3585 = vadd.f32 %v3368, %v3495
    %v3586 = vadd.f32 %v3369, %v3479
    %v3587 = vadd.f32 %v3370, %v3483
    %v3588 = vadd.f32 %v3371, %v3487
    %v3589 = vadd.f32 %v3372, %v3491
    %v3590 = vadd.f32 %v3373, %v3495
    %v3591 = vadd.f32 %v3374, %v3479
    %v3592 = vadd.f32 %v3375, %v3483
    %v3593 = vadd.f32 %v3376, %v3487
    %v3594 = vadd.f32 %v3377, %v3491
    %v3595 = vadd.f32 %v3378, %v3495
    %v3596 = vadd.f32 %v3379, %v3479
    %v3597 = vadd.f32 %v3380, %v3483
    %v3598 = vadd.f32 %v3381, %v3487
    %v3599 = vadd.f32 %v3382, %v3491
    %v3600 = vadd.f32 %v3383, %v3495
    %v3601 = vadd.f32 %v3384, %v3479
    %v3602 = vadd.f32 %v3385, %v3483
    %v3603 = vadd.f32 %v3386, %v3487
    %v3604 = vadd.f32 %v3387, %v3491
    %v3605 = vadd.f32 %v3388, %v3495
    %v3606 = vadd.f32 %v3389, %v3479
    %v3607 = vadd.f32 %v3390, %v3483
    %v3608 = vadd.f32 %v3391, %v3487
    %v3609 = vadd.f32 %v3392, %v3491
    %v3610 = vadd.f32 %v3393, %v3495
    %v3611 = vadd.f32 %v3394, %v3479
    %v3612 = vadd.f32 %v3395, %v3483
    %v3613 = vadd.f32 %v3396, %v3487
    %v3614 = vadd.f32 %v3397, %v3491
    %v3615 = vadd.f32 %v3398, %v3495
    %v3616 = vadd.f32 %v3399, %v3479
    %v3617 = vadd.f32 %v3400, %v3483
    %v3618 = vadd.f32 %v3401, %v3487
    %v3619 = vadd.f32 %v3402, %v3491
    %v3620 = vadd.f32 %v3403, %v3495
    %v3621 = vadd.f32 %v3404, %v3479
    %v3622 = vadd.f32 %v3405, %v3483
    %v3623 = vadd.f32 %v3406, %v3487
    %v3624 = vadd.f32 %v3407, %v3491
    %v3625 = vadd.f32 %v3408, %v3495
    %v3626 = vadd.f32 %v3409, %v3479
    %v3627 = vadd.f32 %v3410, %v3483
    %v3628 = vadd.f32 %v3411, %v3487
    %v3629 = vadd.f32 %v3412, %v3491
    %v3630 = vadd.f32 %v3413, %v3495
    %v3631 = vadd.f32 %v3414, %v3479
    %v3632 = vadd.f32 %v3415, %v3483
    %v3633 = vadd.f32 %v3416, %v3487
    %v3634 = vadd.f32 %v3417, %v3491
    %v3635 = vadd.f32 %v3418, %v3495
    %v3636 = vadd.f32 %v3419, %v3479
    %v3637 = vadd.f32 %v3420, %v3483
    %v3638 = vadd.f32 %v3421, %v3487
    %v3639 = vadd.f32 %v3422, %v3491
    %v3640 = vadd.f32 %v3423, %v3495
    %v3641 = vadd.f32 %v3424, %v3479
    %v3642 = vadd.f32 %v3425, %v3483
    %v3643 = vadd.f32 %v3426, %v3487
    %v3644 = vadd.f32 %v3427, %v3491
    %v3645 = vadd.f32 %v3428, %v3495
    %v3646 = vadd.f32 %v3429, %v3479
    %v3647 = vadd.f32 %v3430, %v3483
    %v3648 = vadd.f32 %v3431, %v3487
    %v3649 = vadd.f32 %v3432, %v3491
    %v3650 = vadd.f32 %v3433, %v3495
    %v3651 = vadd.f32 %v3434, %v3479
    %v3652 = vadd.f32 %v3435, %v3483
    %v3653 = vadd.f32 %v3436, %v3487
    %v3654 = vadd.f32 %v3437, %v3491
    %v3655 = vadd.f32 %v3438, %v3495
    %v3656 = vadd.f32 %v3439, %v3479
    %v3657 = vadd.f32 %v3440, %v3483
    %v3658 = vadd.f32 %v3441, %v3487
    %v3659 = vadd.f32 %v3442, %v3491
    %v3660 = vadd.f32 %v3443, %v3495
    %v3661 = vadd.f32 %v3444, %v3479
    %v3662 = vadd.f32 %v3445, %v3483
    %v3663 = vadd.f32 %v3446, %v3487
    %v3664 = vadd.f32 %v3447, %v3491
    %v3665 = vadd.f32 %v3448, %v3495
    %v3666 = vadd.f32 %v3449, %v3479
    %v3667 = vadd.f32 %v3450, %v3483
    %v3668 = vadd.f32 %v3451, %v3487
    %v3669 = vadd.f32 %v3452, %v3491
    %v3670 = vadd.f32 %v3453, %v3495
    %v3671 = vadd.f32 %v3454, %v3479
    %v3672 = vadd.f32 %v3455, %v3483
    %v3673 = vadd.f32 %v3456, %v3487
    %v3674 = vadd.f32 %v3457, %v3491
    %v3675 = vadd.f32 %v3458, %v3495
    %v3676 = vadd.f32 %v3459, %v3479
    %v3677 = vadd.f32 %v3460, %v3483
    %v3678 = vadd.f32 %v3461, %v3487
    %v3679 = vadd.f32 %v3462, %v3491
    %v3680 = vadd.f32 %v3463, %v3495
    %v3681 = vadd.f32 %v3464, %v3479
    %v3682 = vadd.f32 %v3465, %v3483
    %v3683 = vadd.f32 %v3466, %v3487
    %v3684 = vadd.f32 %v3467, %v3491
    %v3685 = vadd.f32 %v3468, %v3495
    %v3686 = vadd.f32 %v3469, %v3479
    %v3687 = vadd.f32 %v3470, %v3483
    %v3688 = vadd.f32 %v3471, %v3487
    %v3689 = vadd.f32 %v3472, %v3491
    %v3690 = vadd.f32 %v3473, %v3495
    %v3691 = vpack.c.bf16 %v3506, %v3501
    %v3692 = vpack.c.bf16 %v3507, %v3502
    %v3693 = vpack.c.bf16 %v3508, %v3503
    %v3694 = vpack.c.bf16 %v3509, %v3504
    %v3695 = vpack.c.bf16 %v3510, %v3505
    %v3696 = vpack.c.bf16 %v3516, %v3511
    %v3697 = vpack.c.bf16 %v3517, %v3512
    %v3698 = vpack.c.bf16 %v3518, %v3513
    %v3699 = vpack.c.bf16 %v3519, %v3514
    %v3700 = vpack.c.bf16 %v3520, %v3515
    %v3701 = vpack.c.bf16 %v3526, %v3521
    %v3702 = vpack.c.bf16 %v3527, %v3522
    %v3703 = vpack.c.bf16 %v3528, %v3523
    %v3704 = vpack.c.bf16 %v3529, %v3524
    %v3705 = vpack.c.bf16 %v3530, %v3525
    %v3706 = vpack.c.bf16 %v3536, %v3531
    %v3707 = vpack.c.bf16 %v3537, %v3532
    %v3708 = vpack.c.bf16 %v3538, %v3533
    %v3709 = vpack.c.bf16 %v3539, %v3534
    %v3710 = vpack.c.bf16 %v3540, %v3535
    %v3711 = vpack.c.bf16 %v3546, %v3541
    %v3712 = vpack.c.bf16 %v3547, %v3542
    %v3713 = vpack.c.bf16 %v3548, %v3543
    %v3714 = vpack.c.bf16 %v3549, %v3544
    %v3715 = vpack.c.bf16 %v3550, %v3545
    %v3716 = vpack.c.bf16 %v3556, %v3551
    %v3717 = vpack.c.bf16 %v3557, %v3552
    %v3718 = vpack.c.bf16 %v3558, %v3553
    %v3719 = vpack.c.bf16 %v3559, %v3554
    %v3720 = vpack.c.bf16 %v3560, %v3555
    %v3721 = vpack.c.bf16 %v3566, %v3561
    %v3722 = vpack.c.bf16 %v3567, %v3562
    %v3723 = vpack.c.bf16 %v3568, %v3563
    %v3724 = vpack.c.bf16 %v3569, %v3564
    %v3725 = vpack.c.bf16 %v3570, %v3565
    %v3726 = vpack.c.bf16 %v3576, %v3571
    %v3727 = vpack.c.bf16 %v3577, %v3572
    %v3728 = vpack.c.bf16 %v3578, %v3573
    %v3729 = vpack.c.bf16 %v3579, %v3574
    %v3730 = vpack.c.bf16 %v3580, %v3575
    %v3731 = vpack.c.bf16 %v3586, %v3581
    %v3732 = vpack.c.bf16 %v3587, %v3582
    %v3733 = vpack.c.bf16 %v3588, %v3583
    %v3734 = vpack.c.bf16 %v3589, %v3584
    %v3735 = vpack.c.bf16 %v3590, %v3585
    %v3736 = vpack.c.bf16 %v3596, %v3591
    %v3737 = vpack.c.bf16 %v3597, %v3592
    %v3738 = vpack.c.bf16 %v3598, %v3593
    %v3739 = vpack.c.bf16 %v3599, %v3594
    %v3740 = vpack.c.bf16 %v3600, %v3595
    %v3741 = vpack.c.bf16 %v3606, %v3601
    %v3742 = vpack.c.bf16 %v3607, %v3602
    %v3743 = vpack.c.bf16 %v3608, %v3603
    %v3744 = vpack.c.bf16 %v3609, %v3604
    %v3745 = vpack.c.bf16 %v3610, %v3605
    %v3746 = vpack.c.bf16 %v3616, %v3611
    %v3747 = vpack.c.bf16 %v3617, %v3612
    %v3748 = vpack.c.bf16 %v3618, %v3613
    %v3749 = vpack.c.bf16 %v3619, %v3614
    %v3750 = vpack.c.bf16 %v3620, %v3615
    %v3751 = vpack.c.bf16 %v3626, %v3621
    %v3752 = vpack.c.bf16 %v3627, %v3622
    %v3753 = vpack.c.bf16 %v3628, %v3623
    %v3754 = vpack.c.bf16 %v3629, %v3624
    %v3755 = vpack.c.bf16 %v3630, %v3625
    %v3756 = vpack.c.bf16 %v3636, %v3631
    %v3757 = vpack.c.bf16 %v3637, %v3632
    %v3758 = vpack.c.bf16 %v3638, %v3633
    %v3759 = vpack.c.bf16 %v3639, %v3634
    %v3760 = vpack.c.bf16 %v3640, %v3635
    %v3761 = vpack.c.bf16 %v3646, %v3641
    %v3762 = vpack.c.bf16 %v3647, %v3642
    %v3763 = vpack.c.bf16 %v3648, %v3643
    %v3764 = vpack.c.bf16 %v3649, %v3644
    %v3765 = vpack.c.bf16 %v3650, %v3645
    %v3766 = vpack.c.bf16 %v3656, %v3651
    %v3767 = vpack.c.bf16 %v3657, %v3652
    %v3768 = vpack.c.bf16 %v3658, %v3653
    %v3769 = vpack.c.bf16 %v3659, %v3654
    %v3770 = vpack.c.bf16 %v3660, %v3655
    %v3771 = vpack.c.bf16 %v3666, %v3661
    %v3772 = vpack.c.bf16 %v3667, %v3662
    %v3773 = vpack.c.bf16 %v3668, %v3663
    %v3774 = vpack.c.bf16 %v3669, %v3664
    %v3775 = vpack.c.bf16 %v3670, %v3665
    %v3776 = vpack.c.bf16 %v3676, %v3671
    %v3777 = vpack.c.bf16 %v3677, %v3672
    %v3778 = vpack.c.bf16 %v3678, %v3673
    %v3779 = vpack.c.bf16 %v3679, %v3674
    %v3780 = vpack.c.bf16 %v3680, %v3675
    %v3781 = vpack.c.bf16 %v3686, %v3681
    %v3782 = vpack.c.bf16 %v3687, %v3682
    %v3783 = vpack.c.bf16 %v3688, %v3683
    %v3784 = vpack.c.bf16 %v3689, %v3684
    %v3785 = vpack.c.bf16 %v3690, %v3685
    %v3881 = vunpack.c.l.b16 %v3691
    %v3882 = vunpack.c.l.b16 %v3692
    %v3883 = vunpack.c.l.b16 %v3693
    %v3884 = vunpack.c.l.b16 %v3694
    %v3885 = vunpack.c.l.b16 %v3695
    %v3886 = vunpack.c.h.b16 %v3691
    %v3887 = vunpack.c.h.b16 %v3692
    %v3888 = vunpack.c.h.b16 %v3693
    %v3889 = vunpack.c.h.b16 %v3694
    %v3890 = vunpack.c.h.b16 %v3695
    %v3891 = vunpack.c.l.b16 %v3696
    %v3892 = vunpack.c.l.b16 %v3697
    %v3893 = vunpack.c.l.b16 %v3698
    %v3894 = vunpack.c.l.b16 %v3699
    %v3895 = vunpack.c.l.b16 %v3700
    %v3896 = vunpack.c.h.b16 %v3696
    %v3897 = vunpack.c.h.b16 %v3697
    %v3898 = vunpack.c.h.b16 %v3698
    %v3899 = vunpack.c.h.b16 %v3699
    %v3900 = vunpack.c.h.b16 %v3700
    %v3901 = vunpack.c.l.b16 %v3701
    %v3902 = vunpack.c.l.b16 %v3702
    %v3903 = vunpack.c.l.b16 %v3703
    %v3904 = vunpack.c.l.b16 %v3704
    %v3905 = vunpack.c.l.b16 %v3705
    %v3906 = vunpack.c.h.b16 %v3701
    %v3907 = vunpack.c.h.b16 %v3702
    %v3908 = vunpack.c.h.b16 %v3703
    %v3909 = vunpack.c.h.b16 %v3704
    %v3910 = vunpack.c.h.b16 %v3705
    %v3911 = vunpack.c.l.b16 %v3706
    %v3912 = vunpack.c.l.b16 %v3707
    %v3913 = vunpack.c.l.b16 %v3708
    %v3914 = vunpack.c.l.b16 %v3709
    %v3915 = vunpack.c.l.b16 %v3710
    %v3916 = vunpack.c.h.b16 %v3706
    %v3917 = vunpack.c.h.b16 %v3707
    %v3918 = vunpack.c.h.b16 %v3708
    %v3919 = vunpack.c.h.b16 %v3709
    %v3920 = vunpack.c.h.b16 %v3710
    %v3921 = vunpack.c.l.b16 %v3711
    %v3922 = vunpack.c.l.b16 %v3712
    %v3923 = vunpack.c.l.b16 %v3713
    %v3924 = vunpack.c.l.b16 %v3714
    %v3925 = vunpack.c.l.b16 %v3715
    %v3926 = vunpack.c.h.b16 %v3711
    %v3927 = vunpack.c.h.b16 %v3712
    %v3928 = vunpack.c.h.b16 %v3713
    %v3929 = vunpack.c.h.b16 %v3714
    %v3930 = vunpack.c.h.b16 %v3715
    %v3931 = vunpack.c.l.b16 %v3716
    %v3932 = vunpack.c.l.b16 %v3717
    %v3933 = vunpack.c.l.b16 %v3718
    %v3934 = vunpack.c.l.b16 %v3719
    %v3935 = vunpack.c.l.b16 %v3720
    %v3936 = vunpack.c.h.b16 %v3716
    %v3937 = vunpack.c.h.b16 %v3717
    %v3938 = vunpack.c.h.b16 %v3718
    %v3939 = vunpack.c.h.b16 %v3719
    %v3940 = vunpack.c.h.b16 %v3720
    %v3941 = vunpack.c.l.b16 %v3721
    %v3942 = vunpack.c.l.b16 %v3722
    %v3943 = vunpack.c.l.b16 %v3723
    %v3944 = vunpack.c.l.b16 %v3724
    %v3945 = vunpack.c.l.b16 %v3725
    %v3946 = vunpack.c.h.b16 %v3721
    %v3947 = vunpack.c.h.b16 %v3722
    %v3948 = vunpack.c.h.b16 %v3723
    %v3949 = vunpack.c.h.b16 %v3724
    %v3950 = vunpack.c.h.b16 %v3725
    %v3951 = vunpack.c.l.b16 %v3726
    %v3952 = vunpack.c.l.b16 %v3727
    %v3953 = vunpack.c.l.b16 %v3728
    %v3954 = vunpack.c.l.b16 %v3729
    %v3955 = vunpack.c.l.b16 %v3730
    %v3956 = vunpack.c.h.b16 %v3726
    %v3957 = vunpack.c.h.b16 %v3727
    %v3958 = vunpack.c.h.b16 %v3728
    %v3959 = vunpack.c.h.b16 %v3729
    %v3960 = vunpack.c.h.b16 %v3730
    %v3961 = vunpack.c.l.b16 %v3731
    %v3962 = vunpack.c.l.b16 %v3732
    %v3963 = vunpack.c.l.b16 %v3733
    %v3964 = vunpack.c.l.b16 %v3734
    %v3965 = vunpack.c.l.b16 %v3735
    %v3966 = vunpack.c.h.b16 %v3731
    %v3967 = vunpack.c.h.b16 %v3732
    %v3968 = vunpack.c.h.b16 %v3733
    %v3969 = vunpack.c.h.b16 %v3734
    %v3970 = vunpack.c.h.b16 %v3735
    %v3971 = vunpack.c.l.b16 %v3736
    %v3972 = vunpack.c.l.b16 %v3737
    %v3973 = vunpack.c.l.b16 %v3738
    %v3974 = vunpack.c.l.b16 %v3739
    %v3975 = vunpack.c.l.b16 %v3740
    %v3976 = vunpack.c.h.b16 %v3736
    %v3977 = vunpack.c.h.b16 %v3737
    %v3978 = vunpack.c.h.b16 %v3738
    %v3979 = vunpack.c.h.b16 %v3739
    %v3980 = vunpack.c.h.b16 %v3740
    %v3981 = vunpack.c.l.b16 %v3741
    %v3982 = vunpack.c.l.b16 %v3742
    %v3983 = vunpack.c.l.b16 %v3743
    %v3984 = vunpack.c.l.b16 %v3744
    %v3985 = vunpack.c.l.b16 %v3745
    %v3986 = vunpack.c.h.b16 %v3741
    %v3987 = vunpack.c.h.b16 %v3742
    %v3988 = vunpack.c.h.b16 %v3743
    %v3989 = vunpack.c.h.b16 %v3744
    %v3990 = vunpack.c.h.b16 %v3745
    %v3991 = vunpack.c.l.b16 %v3746
    %v3992 = vunpack.c.l.b16 %v3747
    %v3993 = vunpack.c.l.b16 %v3748
    %v3994 = vunpack.c.l.b16 %v3749
    %v3995 = vunpack.c.l.b16 %v3750
    %v3996 = vunpack.c.h.b16 %v3746
    %v3997 = vunpack.c.h.b16 %v3747
    %v3998 = vunpack.c.h.b16 %v3748
    %v3999 = vunpack.c.h.b16 %v3749
    %v4000 = vunpack.c.h.b16 %v3750
    %v4001 = vunpack.c.l.b16 %v3751
    %v4002 = vunpack.c.l.b16 %v3752
    %v4003 = vunpack.c.l.b16 %v3753
    %v4004 = vunpack.c.l.b16 %v3754
    %v4005 = vunpack.c.l.b16 %v3755
    %v4006 = vunpack.c.h.b16 %v3751
    %v4007 = vunpack.c.h.b16 %v3752
    %v4008 = vunpack.c.h.b16 %v3753
    %v4009 = vunpack.c.h.b16 %v3754
    %v4010 = vunpack.c.h.b16 %v3755
    %v4011 = vunpack.c.l.b16 %v3756
    %v4012 = vunpack.c.l.b16 %v3757
    %v4013 = vunpack.c.l.b16 %v3758
    %v4014 = vunpack.c.l.b16 %v3759
    %v4015 = vunpack.c.l.b16 %v3760
    %v4016 = vunpack.c.h.b16 %v3756
    %v4017 = vunpack.c.h.b16 %v3757
    %v4018 = vunpack.c.h.b16 %v3758
    %v4019 = vunpack.c.h.b16 %v3759
    %v4020 = vunpack.c.h.b16 %v3760
    %v4021 = vunpack.c.l.b16 %v3761
    %v4022 = vunpack.c.l.b16 %v3762
    %v4023 = vunpack.c.l.b16 %v3763
    %v4024 = vunpack.c.l.b16 %v3764
    %v4025 = vunpack.c.l.b16 %v3765
    %v4026 = vunpack.c.h.b16 %v3761
    %v4027 = vunpack.c.h.b16 %v3762
    %v4028 = vunpack.c.h.b16 %v3763
    %v4029 = vunpack.c.h.b16 %v3764
    %v4030 = vunpack.c.h.b16 %v3765
    %v4031 = vunpack.c.l.b16 %v3766
    %v4032 = vunpack.c.l.b16 %v3767
    %v4033 = vunpack.c.l.b16 %v3768
    %v4034 = vunpack.c.l.b16 %v3769
    %v4035 = vunpack.c.l.b16 %v3770
    %v4036 = vunpack.c.h.b16 %v3766
    %v4037 = vunpack.c.h.b16 %v3767
    %v4038 = vunpack.c.h.b16 %v3768
    %v4039 = vunpack.c.h.b16 %v3769
    %v4040 = vunpack.c.h.b16 %v3770
    %v4041 = vunpack.c.l.b16 %v3771
    %v4042 = vunpack.c.l.b16 %v3772
    %v4043 = vunpack.c.l.b16 %v3773
    %v4044 = vunpack.c.l.b16 %v3774
    %v4045 = vunpack.c.l.b16 %v3775
    %v4046 = vunpack.c.h.b16 %v3771
    %v4047 = vunpack.c.h.b16 %v3772
    %v4048 = vunpack.c.h.b16 %v3773
    %v4049 = vunpack.c.h.b16 %v3774
    %v4050 = vunpack.c.h.b16 %v3775
    %v4051 = vunpack.c.l.b16 %v3776
    %v4052 = vunpack.c.l.b16 %v3777
    %v4053 = vunpack.c.l.b16 %v3778
    %v4054 = vunpack.c.l.b16 %v3779
    %v4055 = vunpack.c.l.b16 %v3780
    %v4056 = vunpack.c.h.b16 %v3776
    %v4057 = vunpack.c.h.b16 %v3777
    %v4058 = vunpack.c.h.b16 %v3778
    %v4059 = vunpack.c.h.b16 %v3779
    %v4060 = vunpack.c.h.b16 %v3780
    %v4061 = vunpack.c.l.b16 %v3781
    %v4062 = vunpack.c.l.b16 %v3782
    %v4063 = vunpack.c.l.b16 %v3783
    %v4064 = vunpack.c.l.b16 %v3784
    %v4065 = vunpack.c.l.b16 %v3785
    %v4066 = vunpack.c.h.b16 %v3781
    %v4067 = vunpack.c.h.b16 %v3782
    %v4068 = vunpack.c.h.b16 %v3783
    %v4069 = vunpack.c.h.b16 %v3784
    %v4070 = vunpack.c.h.b16 %v3785
    %v4071 = vpack.c.b16 %v3882, %v3881
    %v4072 = vpack.c.b16 %v3884, %v3883
    %v4073 = vpack.c.b16 %v3885, %v3885
    %v4074 = vpack.c.b16 %v3887, %v3886
    %v4075 = vpack.c.b16 %v3889, %v3888
    %v4076 = vpack.c.b16 %v3890, %v3890
    %v4077 = vpack.c.b16 %v3892, %v3891
    %v4078 = vpack.c.b16 %v3894, %v3893
    %v4079 = vpack.c.b16 %v3895, %v3895
    %v4080 = vpack.c.b16 %v3897, %v3896
    %v4081 = vpack.c.b16 %v3899, %v3898
    %v4082 = vpack.c.b16 %v3900, %v3900
    %v4083 = vpack.c.b16 %v3902, %v3901
    %v4084 = vpack.c.b16 %v3904, %v3903
    %v4085 = vpack.c.b16 %v3905, %v3905
    %v4086 = vpack.c.b16 %v3907, %v3906
    %v4087 = vpack.c.b16 %v3909, %v3908
    %v4088 = vpack.c.b16 %v3910, %v3910
    %v4089 = vpack.c.b16 %v3912, %v3911
    %v4090 = vpack.c.b16 %v3914, %v3913
    %v4091 = vpack.c.b16 %v3915, %v3915
    %v4092 = vpack.c.b16 %v3917, %v3916
    %v4093 = vpack.c.b16 %v3919, %v3918
    %v4094 = vpack.c.b16 %v3920, %v3920
    %v4095 = vpack.c.b16 %v3922, %v3921
    %v4096 = vpack.c.b16 %v3924, %v3923
    %v4097 = vpack.c.b16 %v3925, %v3925
    %v4098 = vpack.c.b16 %v3927, %v3926
    %v4099 = vpack.c.b16 %v3929, %v3928
    %v4100 = vpack.c.b16 %v3930, %v3930
    %v4101 = vpack.c.b16 %v3932, %v3931
    %v4102 = vpack.c.b16 %v3934, %v3933
    %v4103 = vpack.c.b16 %v3935, %v3935
    %v4104 = vpack.c.b16 %v3937, %v3936
    %v4105 = vpack.c.b16 %v3939, %v3938
    %v4106 = vpack.c.b16 %v3940, %v3940
    %v4107 = vpack.c.b16 %v3942, %v3941
    %v4108 = vpack.c.b16 %v3944, %v3943
    %v4109 = vpack.c.b16 %v3945, %v3945
    %v4110 = vpack.c.b16 %v3947, %v3946
    %v4111 = vpack.c.b16 %v3949, %v3948
    %v4112 = vpack.c.b16 %v3950, %v3950
    %v4113 = vpack.c.b16 %v3952, %v3951
    %v4114 = vpack.c.b16 %v3954, %v3953
    %v4115 = vpack.c.b16 %v3955, %v3955
    %v4116 = vpack.c.b16 %v3957, %v3956
    %v4117 = vpack.c.b16 %v3959, %v3958
    %v4118 = vpack.c.b16 %v3960, %v3960
    %v4119 = vpack.c.b16 %v3962, %v3961
    %v4120 = vpack.c.b16 %v3964, %v3963
    %v4121 = vpack.c.b16 %v3965, %v3965
    %v4122 = vpack.c.b16 %v3967, %v3966
    %v4123 = vpack.c.b16 %v3969, %v3968
    %v4124 = vpack.c.b16 %v3970, %v3970
    %v4125 = vpack.c.b16 %v3972, %v3971
    %v4126 = vpack.c.b16 %v3974, %v3973
    %v4127 = vpack.c.b16 %v3975, %v3975
    %v4128 = vpack.c.b16 %v3977, %v3976
    %v4129 = vpack.c.b16 %v3979, %v3978
    %v4130 = vpack.c.b16 %v3980, %v3980
    %v4131 = vpack.c.b16 %v3982, %v3981
    %v4132 = vpack.c.b16 %v3984, %v3983
    %v4133 = vpack.c.b16 %v3985, %v3985
    %v4134 = vpack.c.b16 %v3987, %v3986
    %v4135 = vpack.c.b16 %v3989, %v3988
    %v4136 = vpack.c.b16 %v3990, %v3990
    %v4137 = vpack.c.b16 %v3992, %v3991
    %v4138 = vpack.c.b16 %v3994, %v3993
    %v4139 = vpack.c.b16 %v3995, %v3995
    %v4140 = vpack.c.b16 %v3997, %v3996
    %v4141 = vpack.c.b16 %v3999, %v3998
    %v4142 = vpack.c.b16 %v4000, %v4000
    %v4143 = vpack.c.b16 %v4002, %v4001
    %v4144 = vpack.c.b16 %v4004, %v4003
    %v4145 = vpack.c.b16 %v4005, %v4005
    %v4146 = vpack.c.b16 %v4007, %v4006
    %v4147 = vpack.c.b16 %v4009, %v4008
    %v4148 = vpack.c.b16 %v4010, %v4010
    %v4149 = vpack.c.b16 %v4012, %v4011
    %v4150 = vpack.c.b16 %v4014, %v4013
    %v4151 = vpack.c.b16 %v4015, %v4015
    %v4152 = vpack.c.b16 %v4017, %v4016
    %v4153 = vpack.c.b16 %v4019, %v4018
    %v4154 = vpack.c.b16 %v4020, %v4020
    %v4155 = vpack.c.b16 %v4022, %v4021
    %v4156 = vpack.c.b16 %v4024, %v4023
    %v4157 = vpack.c.b16 %v4025, %v4025
    %v4158 = vpack.c.b16 %v4027, %v4026
    %v4159 = vpack.c.b16 %v4029, %v4028
    %v4160 = vpack.c.b16 %v4030, %v4030
    %v4161 = vpack.c.b16 %v4032, %v4031
    %v4162 = vpack.c.b16 %v4034, %v4033
    %v4163 = vpack.c.b16 %v4035, %v4035
    %v4164 = vpack.c.b16 %v4037, %v4036
    %v4165 = vpack.c.b16 %v4039, %v4038
    %v4166 = vpack.c.b16 %v4040, %v4040
    %v4167 = vpack.c.b16 %v4042, %v4041
    %v4168 = vpack.c.b16 %v4044, %v4043
    %v4169 = vpack.c.b16 %v4045, %v4045
    %v4170 = vpack.c.b16 %v4047, %v4046
    %v4171 = vpack.c.b16 %v4049, %v4048
    %v4172 = vpack.c.b16 %v4050, %v4050
    %v4173 = vpack.c.b16 %v4052, %v4051
    %v4174 = vpack.c.b16 %v4054, %v4053
    %v4175 = vpack.c.b16 %v4055, %v4055
    %v4176 = vpack.c.b16 %v4057, %v4056
    %v4177 = vpack.c.b16 %v4059, %v4058
    %v4178 = vpack.c.b16 %v4060, %v4060
    %v4179 = vpack.c.b16 %v4062, %v4061
    %v4180 = vpack.c.b16 %v4064, %v4063
    %v4181 = vpack.c.b16 %v4065, %v4065
    %v4182 = vpack.c.b16 %v4067, %v4066
    %v4183 = vpack.c.b16 %v4069, %v4068
    %v4184 = vpack.c.b16 %v4070, %v4070
    %4299 = vst [vmem:[#allocation2] sm:$0xff] %v4071
    %4300 = vst [vmem:[#allocation2 + $0x8] sm:$0xff] %v4072
    %4301 = vst [vmem:[#allocation2 + $0x10] sm:$0xf] %v4073
    %4302 = vst [vmem:[#allocation2 + $0x14] sm:$0xff] %v4074
    %4303 = vst [vmem:[#allocation2 + $0x1c] sm:$0xff] %v4075
    %4304 = vst [vmem:[#allocation2 + $0x24] sm:$0xf] %v4076
    %4305 = vst [vmem:[#allocation2 + $0x28] sm:$0xff] %v4077
    %4306 = vst [vmem:[#allocation2 + $0x30] sm:$0xff] %v4078
    %4307 = vst [vmem:[#allocation2 + $0x38] sm:$0xf] %v4079
    %4308 = vst [vmem:[#allocation2 + $0x3c] sm:$0xff] %v4080
    %4309 = vst [vmem:[#allocation2 + $0x44] sm:$0xff] %v4081
    %4310 = vst [vmem:[#allocation2 + $0x4c] sm:$0xf] %v4082
    %4311 = vst [vmem:[#allocation2 + $0x50] sm:$0xff] %v4083
    %4312 = vst [vmem:[#allocation2 + $0x58] sm:$0xff] %v4084
    %4313 = vst [vmem:[#allocation2 + $0x60] sm:$0xf] %v4085
    %4314 = vst [vmem:[#allocation2 + $0x64] sm:$0xff] %v4086
    %4315 = vst [vmem:[#allocation2 + $0x6c] sm:$0xff] %v4087
    %4316 = vst [vmem:[#allocation2 + $0x74] sm:$0xf] %v4088
    %4317 = vst [vmem:[#allocation2 + $0x78] sm:$0xff] %v4089
    %4318 = vst [vmem:[#allocation2 + $0x80] sm:$0xff] %v4090
    %4319 = vst [vmem:[#allocation2 + $0x88] sm:$0xf] %v4091
    %4320 = vst [vmem:[#allocation2 + $0x8c] sm:$0xff] %v4092
    %4321 = vst [vmem:[#allocation2 + $0x94] sm:$0xff] %v4093
    %4322 = vst [vmem:[#allocation2 + $0x9c] sm:$0xf] %v4094
    %4323 = vst [vmem:[#allocation2 + $0xa0] sm:$0xff] %v4095
    %4324 = vst [vmem:[#allocation2 + $0xa8] sm:$0xff] %v4096
    %4325 = vst [vmem:[#allocation2 + $0xb0] sm:$0xf] %v4097
    %4326 = vst [vmem:[#allocation2 + $0xb4] sm:$0xff] %v4098
    %4327 = vst [vmem:[#allocation2 + $0xbc] sm:$0xff] %v4099
    %4328 = vst [vmem:[#allocation2 + $0xc4] sm:$0xf] %v4100
    %4329 = vst [vmem:[#allocation2 + $0xc8] sm:$0xff] %v4101
    %4330 = vst [vmem:[#allocation2 + $0xd0] sm:$0xff] %v4102
    %4331 = vst [vmem:[#allocation2 + $0xd8] sm:$0xf] %v4103
    %4332 = vst [vmem:[#allocation2 + $0xdc] sm:$0xff] %v4104
    %4333 = vst [vmem:[#allocation2 + $0xe4] sm:$0xff] %v4105
    %4334 = vst [vmem:[#allocation2 + $0xec] sm:$0xf] %v4106
    %4335 = vst [vmem:[#allocation2 + $0xf0] sm:$0xff] %v4107
    %4336 = vst [vmem:[#allocation2 + $0xf8] sm:$0xff] %v4108
    %4337 = vst [vmem:[#allocation2 + $0x100] sm:$0xf] %v4109
    %4338 = vst [vmem:[#allocation2 + $0x104] sm:$0xff] %v4110
    %4339 = vst [vmem:[#allocation2 + $0x10c] sm:$0xff] %v4111
    %4340 = vst [vmem:[#allocation2 + $0x114] sm:$0xf] %v4112
    %4341 = vst [vmem:[#allocation2 + $0x118] sm:$0xff] %v4113
    %4342 = vst [vmem:[#allocation2 + $0x120] sm:$0xff] %v4114
    %4343 = vst [vmem:[#allocation2 + $0x128] sm:$0xf] %v4115
    %4344 = vst [vmem:[#allocation2 + $0x12c] sm:$0xff] %v4116
    %4345 = vst [vmem:[#allocation2 + $0x134] sm:$0xff] %v4117
    %4346 = vst [vmem:[#allocation2 + $0x13c] sm:$0xf] %v4118
    %4347 = vst [vmem:[#allocation2 + $0x140] sm:$0xff] %v4119
    %4348 = vst [vmem:[#allocation2 + $0x148] sm:$0xff] %v4120
    %4349 = vst [vmem:[#allocation2 + $0x150] sm:$0xf] %v4121
    %4350 = vst [vmem:[#allocation2 + $0x154] sm:$0xff] %v4122
    %4351 = vst [vmem:[#allocation2 + $0x15c] sm:$0xff] %v4123
    %4352 = vst [vmem:[#allocation2 + $0x164] sm:$0xf] %v4124
    %4353 = vst [vmem:[#allocation2 + $0x168] sm:$0xff] %v4125
    %4354 = vst [vmem:[#allocation2 + $0x170] sm:$0xff] %v4126
    %4355 = vst [vmem:[#allocation2 + $0x178] sm:$0xf] %v4127
    %4356 = vst [vmem:[#allocation2 + $0x17c] sm:$0xff] %v4128
    %4357 = vst [vmem:[#allocation2 + $0x184] sm:$0xff] %v4129
    %4358 = vst [vmem:[#allocation2 + $0x18c] sm:$0xf] %v4130
    %4359 = vst [vmem:[#allocation2 + $0x190] sm:$0xff] %v4131
    %4360 = vst [vmem:[#allocation2 + $0x198] sm:$0xff] %v4132
    %4361 = vst [vmem:[#allocation2 + $0x1a0] sm:$0xf] %v4133
    %4362 = vst [vmem:[#allocation2 + $0x1a4] sm:$0xff] %v4134
    %4363 = vst [vmem:[#allocation2 + $0x1ac] sm:$0xff] %v4135
    %4364 = vst [vmem:[#allocation2 + $0x1b4] sm:$0xf] %v4136
    %4365 = vst [vmem:[#allocation2 + $0x1b8] sm:$0xff] %v4137
    %4366 = vst [vmem:[#allocation2 + $0x1c0] sm:$0xff] %v4138
    %4367 = vst [vmem:[#allocation2 + $0x1c8] sm:$0xf] %v4139
    %4368 = vst [vmem:[#allocation2 + $0x1cc] sm:$0xff] %v4140
    %4369 = vst [vmem:[#allocation2 + $0x1d4] sm:$0xff] %v4141
    %4370 = vst [vmem:[#allocation2 + $0x1dc] sm:$0xf] %v4142
    %4371 = vst [vmem:[#allocation2 + $0x1e0] sm:$0xff] %v4143
    %4372 = vst [vmem:[#allocation2 + $0x1e8] sm:$0xff] %v4144
    %4373 = vst [vmem:[#allocation2 + $0x1f0] sm:$0xf] %v4145
    %4374 = vst [vmem:[#allocation2 + $0x1f4] sm:$0xff] %v4146
    %4375 = vst [vmem:[#allocation2 + $0x1fc] sm:$0xff] %v4147
    %4376 = vst [vmem:[#allocation2 + $0x204] sm:$0xf] %v4148
    %4377 = vst [vmem:[#allocation2 + $0x208] sm:$0xff] %v4149
    %4378 = vst [vmem:[#allocation2 + $0x210] sm:$0xff] %v4150
    %4379 = vst [vmem:[#allocation2 + $0x218] sm:$0xf] %v4151
    %4380 = vst [vmem:[#allocation2 + $0x21c] sm:$0xff] %v4152
    %4381 = vst [vmem:[#allocation2 + $0x224] sm:$0xff] %v4153
    %4382 = vst [vmem:[#allocation2 + $0x22c] sm:$0xf] %v4154
    %4383 = vst [vmem:[#allocation2 + $0x230] sm:$0xff] %v4155
    %4384 = vst [vmem:[#allocation2 + $0x238] sm:$0xff] %v4156
    %4385 = vst [vmem:[#allocation2 + $0x240] sm:$0xf] %v4157
    %4386 = vst [vmem:[#allocation2 + $0x244] sm:$0xff] %v4158
    %4387 = vst [vmem:[#allocation2 + $0x24c] sm:$0xff] %v4159
    %4388 = vst [vmem:[#allocation2 + $0x254] sm:$0xf] %v4160
    %4389 = vst [vmem:[#allocation2 + $0x258] sm:$0xff] %v4161
    %4390 = vst [vmem:[#allocation2 + $0x260] sm:$0xff] %v4162
    %4391 = vst [vmem:[#allocation2 + $0x268] sm:$0xf] %v4163
    %4392 = vst [vmem:[#allocation2 + $0x26c] sm:$0xff] %v4164
    %4393 = vst [vmem:[#allocation2 + $0x274] sm:$0xff] %v4165
    %4394 = vst [vmem:[#allocation2 + $0x27c] sm:$0xf] %v4166
    %4395 = vst [vmem:[#allocation2 + $0x280] sm:$0xff] %v4167
    %4396 = vst [vmem:[#allocation2 + $0x288] sm:$0xff] %v4168
    %4397 = vst [vmem:[#allocation2 + $0x290] sm:$0xf] %v4169
    %4398 = vst [vmem:[#allocation2 + $0x294] sm:$0xff] %v4170
    %4399 = vst [vmem:[#allocation2 + $0x29c] sm:$0xff] %v4171
    %4400 = vst [vmem:[#allocation2 + $0x2a4] sm:$0xf] %v4172
    %4401 = vst [vmem:[#allocation2 + $0x2a8] sm:$0xff] %v4173
    %4402 = vst [vmem:[#allocation2 + $0x2b0] sm:$0xff] %v4174
    %4403 = vst [vmem:[#allocation2 + $0x2b8] sm:$0xf] %v4175
    %4404 = vst [vmem:[#allocation2 + $0x2bc] sm:$0xff] %v4176
    %4405 = vst [vmem:[#allocation2 + $0x2c4] sm:$0xff] %v4177
    %4406 = vst [vmem:[#allocation2 + $0x2cc] sm:$0xf] %v4178
    %4407 = vst [vmem:[#allocation2 + $0x2d0] sm:$0xff] %v4179
    %4408 = vst [vmem:[#allocation2 + $0x2d8] sm:$0xff] %v4180
    %4409 = vst [vmem:[#allocation2 + $0x2e0] sm:$0xf] %v4181
    %4410 = vst [vmem:[#allocation2 + $0x2e4] sm:$0xff] %v4182
    %4411 = vst [vmem:[#allocation2 + $0x2ec] sm:$0xff] %v4183
    %4412 = vst [vmem:[#allocation2 + $0x2f4] sm:$0xf] %v4184
    // Predicated region
    $region18: #{gnn_kge_forward.1} parent=1 // pred_check
      _
    $region19: #{gnn_kge_forward.1} parent=1 // pred_check_branch
      %4414 = sbr.rel (0) target = $region21
    $region20: #{gnn_kge_forward.1} parent=1 // pred_region
      %s4416 = ssub.s32 12160, 12160
      %4417 = vsyncadd [#allocation3], %s4416
      %s4418 = sshll.u32 [#allocation2], 4
      %s4419 = int_to_ptr.vmem [resolvable:$true] %s4418
      %4424 = dma.vmem_to_hbm [thread:$0]  %s4419, 12160, %s4, [#allocation3], 320, 320, 20
    $region21: #{gnn_kge_forward.1} parent=1 // pred_fallthru
      _
    // Predicated region
    $region22: #{gnn_kge_forward.1} parent=1 // pred_check
      _
    $region23: #{gnn_kge_forward.1} parent=1 // pred_check_branch
      %4426 = sbr.rel (0) target = $region25
    $region24: #{gnn_kge_forward.1} parent=1 // pred_region
      %4427 = dma.done [#allocation3], 12160
    $region25: #{gnn_kge_forward.1} parent=1 // pred_fallthru
      _
    %4428 = vsyncpa [#allocation3], 1

</llo_original>
